<compile_context>
chip_gen: v7x
topology: tpu7x:2x2x1
jax: 0.10.0
libtpu: 0.0.40
codegen_flags: <defaults>
</compile_context>

<pallas_src>
import functools

import jax
import jax.numpy as jnp
from jax.experimental import pallas as pl
from jax.experimental.pallas import tpu as pltpu


# ----------------------------------------------------------------------------
# Fused CLIP text-encoder kernel (one ResidualAttentionBlock per grid step)
# ----------------------------------------------------------------------------
def _layernorm(x, g, b, eps=1e-5):
    mu = jnp.mean(x, axis=-1, keepdims=True)
    var = jnp.mean(jnp.square(x - mu), axis=-1, keepdims=True)
    return (x - mu) * jax.lax.rsqrt(var + eps) * g + b


def _encoder_kernel(x0_ref, ln1g_ref, ln1b_ref,
                    wq_ref, bq_ref, wk_ref, bk_ref, wv_ref, bv_ref,
                    wo_ref, bo_ref, ln2g_ref, ln2b_ref,
                    wfc_ref, bfc_ref, wpj_ref, bpj_ref,
                    mask_ref, lnfg_ref, lnfb_ref, eot_ref, wtp_ref,
                    o_ref, x_sc, *, B, T, H, Dh):
    """One transformer layer per grid step; final LN + EOT gather + text proj on the last."""
    l = pl.program_id(0)

    @pl.when(l == 0)
    def _init():
        x_sc[...] = x0_ref[...]

    x = x_sc[...]                                            # [B*T, W] f32, VMEM-resident

    # ---------------- multi-head self-attention (pre-LN) ----------------
    h = _layernorm(x, ln1g_ref[0], ln1b_ref[0])
    mask = mask_ref[...][None, :, :]                         # [1, T, T], -inf above diag
    attn = None
    for hh in range(H):                                      # static unroll over heads
        # 1/sqrt(Dh) is pre-folded into wq/bq on the host.
        qh = (jnp.dot(h, wq_ref[0, hh], preferred_element_type=jnp.float32)
              + bq_ref[0, hh]).reshape(B, T, Dh)
        kh = (jnp.dot(h, wk_ref[0, hh], preferred_element_type=jnp.float32)
              + bk_ref[0, hh]).reshape(B, T, Dh)
        vh = (jnp.dot(h, wv_ref[0, hh], preferred_element_type=jnp.float32)
              + bv_ref[0, hh]).reshape(B, T, Dh)
        s = jnp.einsum("bqd,bkd->bqk", qh, kh,
                       preferred_element_type=jnp.float32) + mask
        m = jnp.max(s, axis=-1, keepdims=True)
        p = jnp.exp(s - m)
        p = p * pl.reciprocal(jnp.sum(p, axis=-1, keepdims=True), approx=True)
        oh = jnp.einsum("bqk,bkd->bqd", p, vh,
                        preferred_element_type=jnp.float32).reshape(B * T, Dh)
        # concat-heads @ W_out  ==  sum_h (o_h @ W_out[rows of head h]); per-head weight
        # is pre-sliced on the host, so no in-kernel concatenation is needed.
        c = jnp.dot(oh, wo_ref[0, hh], preferred_element_type=jnp.float32)
        attn = c if attn is None else attn + c
    x = x + attn + bo_ref[0]

    # ---------------- MLP with QuickGELU ----------------
    h = _layernorm(x, ln2g_ref[0], ln2b_ref[0])
    h = jnp.dot(h, wfc_ref[0], preferred_element_type=jnp.float32) + bfc_ref[0]
    h = h * jax.nn.sigmoid(1.702 * h)                        # QuickGELU
    h = jnp.dot(h, wpj_ref[0], preferred_element_type=jnp.float32) + bpj_ref[0]
    x = x + h

    x_sc[...] = x

    # ---------------- final LN + EOT gather (one-hot matmul) + text projection ----------------
    @pl.when(l == pl.num_programs(0) - 1)
    def _final():
        xf = _layernorm(x, lnfg_ref[...], lnfb_ref[...])                      # [B*T, W]
        feats = jnp.dot(eot_ref[...], xf, preferred_element_type=jnp.float32)  # [B, W]
        o_ref[...] = jnp.dot(feats, wtp_ref[...],                              # no bias
                             preferred_element_type=jnp.float32).astype(o_ref.dtype)


def pallas_clip_text_encoder(x0, stk, mask, lnf_g, lnf_b, eot_onehot, w_tp, *, B, T, H):
    BT, W = x0.shape
    Dh = W // H
    L = stk["ln1_g"].shape[0]

    def full_spec(arr):
        nd = arr.ndim
        return pl.BlockSpec(tuple(arr.shape), lambda l, _nd=nd: (0,) * _nd)

    def per_layer_spec(arr):
        nz = arr.ndim - 1
        return pl.BlockSpec((1,) + tuple(arr.shape[1:]), lambda l, _nz=nz: (l,) + (0,) * _nz)

    layer_keys = ("ln1_g", "ln1_b", "w_q", "b_q", "w_k", "b_k", "w_v", "b_v",
                  "w_out", "b_out", "ln2_g", "ln2_b", "w_fc", "b_fc", "w_proj", "b_proj")
    operands = (x0,) + tuple(stk[k] for k in layer_keys) + (mask, lnf_g, lnf_b, eot_onehot, w_tp)
    in_specs = ([full_spec(x0)]
                + [per_layer_spec(stk[k]) for k in layer_keys]
                + [full_spec(mask), full_spec(lnf_g), full_spec(lnf_b),
                   full_spec(eot_onehot), full_spec(w_tp)])

    grid_spec = pltpu.PrefetchScalarGridSpec(
        num_scalar_prefetch=0,
        grid=(L,),
        in_specs=in_specs,
        out_specs=pl.BlockSpec((B, W), lambda l: (0, 0)),
        scratch_shapes=[pltpu.VMEM((BT, W), jnp.float32)],
    )
    kernel = functools.partial(_encoder_kernel, B=B, T=T, H=H, Dh=Dh)
    return pl.pallas_call(
        kernel,
        grid_spec=grid_spec,
        out_shape=jax.ShapeDtypeStruct((B, W), jnp.float32),
        compiler_params=pltpu.CompilerParams(dimension_semantics=("arbitrary",)),
    )(*operands)


# ----------------------------------------------------------------------------
# Fused projection-head kernels (weights pre-transposed to [in, out])
# ----------------------------------------------------------------------------
def _head1_kernel(x_ref, w_ref, b_ref, o_ref):
    y = jnp.dot(x_ref[...], w_ref[...], preferred_element_type=jnp.float32) + b_ref[...]
    o_ref[...] = y.astype(o_ref.dtype)


def _head2_kernel(x_ref, w1_ref, b1_ref, w2_ref, b2_ref, o_ref):
    h = jnp.dot(x_ref[...], w1_ref[...], preferred_element_type=jnp.float32) + b1_ref[...]
    h = jnp.maximum(h, 0.0)                                   # ReLU
    y = jnp.dot(h, w2_ref[...], preferred_element_type=jnp.float32) + b2_ref[...]
    o_ref[...] = y.astype(o_ref.dtype)


def pallas_projection_head1(x, w, b):
    M, K = x.shape
    N = w.shape[1]
    return pl.pallas_call(
        _head1_kernel,
        grid=(1,),
        in_specs=[pl.BlockSpec((M, K), lambda i: (0, 0)),
                  pl.BlockSpec((K, N), lambda i: (0, 0)),
                  pl.BlockSpec((1, N), lambda i: (0, 0))],
        out_specs=pl.BlockSpec((M, N), lambda i: (0, 0)),
        out_shape=jax.ShapeDtypeStruct((M, N), jnp.float32),
        compiler_params=pltpu.CompilerParams(dimension_semantics=("arbitrary",)),
    )(x, w, b.reshape(1, N))


def pallas_projection_head2(x, w1, b1, w2, b2):
    M, K = x.shape
    N1, N2 = w1.shape[1], w2.shape[1]
    return pl.pallas_call(
        _head2_kernel,
        grid=(1,),
        in_specs=[pl.BlockSpec((M, K), lambda i: (0, 0)),
                  pl.BlockSpec((K, N1), lambda i: (0, 0)),
                  pl.BlockSpec((1, N1), lambda i: (0, 0)),
                  pl.BlockSpec((N1, N2), lambda i: (0, 0)),
                  pl.BlockSpec((1, N2), lambda i: (0, 0))],
        out_specs=pl.BlockSpec((M, N2), lambda i: (0, 0)),
        out_shape=jax.ShapeDtypeStruct((M, N2), jnp.float32),
        compiler_params=pltpu.CompilerParams(dimension_semantics=("arbitrary",)),
    )(x, w1, b1.reshape(1, N1), w2, b2.reshape(1, N2))


# ----------------------------------------------------------------------------
# Deterministic stand-in parameters (no CLIP checkpoint available in-script)
# ----------------------------------------------------------------------------
def xavier_uniform(key, out_dim, in_dim):
    bound = (6.0 / (in_dim + out_dim)) ** 0.5
    return jax.random.uniform(key, (out_dim, in_dim), jnp.float32, -bound, bound)


def make_clip_text_params(key, vocab, context, width, heads, layers):
    keys = jax.random.split(key, 4 + layers)
    params = {
        "token_embedding": 0.02 * jax.random.normal(keys[0], (vocab, width), jnp.float32),
        "positional_embedding": 0.01 * jax.random.normal(keys[1], (context, width), jnp.float32),
        "ln_final_g": jnp.ones((width,), jnp.float32),
        "ln_final_b": jnp.zeros((width,), jnp.float32),
        # stored PyTorch-linear style [embed_dim, width]; embed_dim == width here
        "text_proj_w": (width ** -0.5)
        * jax.random.normal(keys[2], (width, width), jnp.float32),
        "layers": [],
    }
    mlp_hidden = 4 * width
    for l in range(layers):
        lk = jax.random.split(keys[4 + l], 4)
        params["layers"].append(
            {
                "ln1_g": jnp.ones((width,), jnp.float32),
                "ln1_b": jnp.zeros((width,), jnp.float32),
                "attn_in_w": (width ** -0.5)
                * jax.random.normal(lk[0], (3 * width, width), jnp.float32),
                "attn_in_b": jnp.zeros((3 * width,), jnp.float32),
                "attn_out_w": (width ** -0.5)
                * jax.random.normal(lk[1], (width, width), jnp.float32),
                "attn_out_b": jnp.zeros((width,), jnp.float32),
                "ln2_g": jnp.ones((width,), jnp.float32),
                "ln2_b": jnp.zeros((width,), jnp.float32),
                "mlp_fc_w": (width ** -0.5)
                * jax.random.normal(lk[2], (mlp_hidden, width), jnp.float32),
                "mlp_fc_b": jnp.zeros((mlp_hidden,), jnp.float32),
                "mlp_proj_w": (mlp_hidden ** -0.5)
                * jax.random.normal(lk[3], (width, mlp_hidden), jnp.float32),
                "mlp_proj_b": jnp.zeros((width,), jnp.float32),
            }
        )
    return params


def build_causal_mask(T):
    # CLIP's build_attention_mask: -inf above the diagonal, 0 elsewhere.
    return jnp.triu(jnp.full((T, T), -jnp.inf, jnp.float32), k=1)


# ----------------------------------------------------------------------------
# TextCLIPModified in JAX + Pallas
# ----------------------------------------------------------------------------
class TextCLIPModifiedPallas:
    def __init__(self, key, layer_type="linear", *, vocab=64, context=8, width=32,
                 heads=4, layers=2):
        assert width % heads == 0
        self.layer_type = layer_type
        self.width = width
        self.heads = heads
        self.context = context
        W, H = width, heads
        Dh = W // H
        kc, k1, k2 = jax.random.split(key, 3)
        p = make_clip_text_params(kc, vocab, context, width, heads, layers)
        self.token_embedding = p["token_embedding"]
        self.positional_embedding = p["positional_embedding"]
        self.lnf_g = p["ln_final_g"].reshape(1, W)
        self.lnf_b = p["ln_final_b"].reshape(1, W)
        self.w_tp = jnp.transpose(p["text_proj_w"])     # [W, W], x @ W layout (no bias)
        self.causal_mask = build_causal_mask(context)

        scale = Dh ** -0.5                              # folded into q weights / bias

        def split_in_proj(lp, which, s):
            w = lp["attn_in_w"][which * W:(which + 1) * W, :]          # [W(out), W(in)]
            b = lp["attn_in_b"][which * W:(which + 1) * W]
            ws = jnp.stack([w[hh * Dh:(hh + 1) * Dh, :].T for hh in range(H)])        # [H,W,Dh]
            bs = jnp.stack([b[hh * Dh:(hh + 1) * Dh].reshape(1, Dh) for hh in range(H)])
            return ws * s, bs * s

        def split_out_proj(lp):
            w = lp["attn_out_w"]                                       # [W(out), W(in)]
            return jnp.stack([w[:, hh * Dh:(hh + 1) * Dh].T for hh in range(H)])      # [H,Dh,W]

        def stack(fn):
            return jnp.stack([fn(lp) for lp in p["layers"]])

        # Stacked per-layer weights, pre-transposed once to the kernel ([in, out]) layout.
        self.stk = dict(
            ln1_g=stack(lambda lp: lp["ln1_g"].reshape(1, W)),
            ln1_b=stack(lambda lp: lp["ln1_b"].reshape(1, W)),
            w_q=stack(lambda lp: split_in_proj(lp, 0, scale)[0]),
            b_q=stack(lambda lp: split_in_proj(lp, 0, scale)[1]),
            w_k=stack(lambda lp: split_in_proj(lp, 1, 1.0)[0]),
            b_k=stack(lambda lp: split_in_proj(lp, 1, 1.0)[1]),
            w_v=stack(lambda lp: split_in_proj(lp, 2, 1.0)[0]),
            b_v=stack(lambda lp: split_in_proj(lp, 2, 1.0)[1]),
            w_out=stack(split_out_proj),
            b_out=stack(lambda lp: lp["attn_out_b"].reshape(1, W)),
            ln2_g=stack(lambda lp: lp["ln2_g"].reshape(1, W)),
            ln2_b=stack(lambda lp: lp["ln2_b"].reshape(1, W)),
            w_fc=stack(lambda lp: lp["mlp_fc_w"].T),
            b_fc=stack(lambda lp: lp["mlp_fc_b"].reshape(1, -1)),
            w_proj=stack(lambda lp: lp["mlp_proj_w"].T),
            b_proj=stack(lambda lp: lp["mlp_proj_b"].reshape(1, -1)),
        )

        enc_dim = W  # == clip_model.transformer.width
        if layer_type == "linear":
            self.proj = ("one", (xavier_uniform(k1, enc_dim, enc_dim).T,
                                 jnp.zeros((enc_dim,), jnp.float32)))
        elif layer_type == "mlp":
            self.proj = ("two", (xavier_uniform(k1, enc_dim, enc_dim).T,
                                 jnp.zeros((enc_dim,), jnp.float32),
                                 xavier_uniform(k2, enc_dim, enc_dim).T,
                                 jnp.zeros((enc_dim,), jnp.float32)))
        elif layer_type == "throwaway":
            self.proj = ("two", (xavier_uniform(k1, enc_dim, enc_dim).T,
                                 jnp.zeros((enc_dim,), jnp.float32),
                                 xavier_uniform(k2, 128, enc_dim).T,
                                 jnp.zeros((128,), jnp.float32)))
        else:  # 'none'
            self.proj = None

    def projection_head(self, feats):
        kind, params = self.proj
        if kind == "one":
            w, b = params
            return pallas_projection_head1(feats, w, b)
        w1, b1, w2, b2 = params
        return pallas_projection_head2(feats, w1, b1, w2, b2)

    def encode_text(self, tokens):
        B, T = tokens.shape
        W = self.width
        # Token-id embedding lookup + positional embedding stay as plain-JAX glue.
        x0 = (self.token_embedding[tokens]
              + self.positional_embedding[None, :T, :]).reshape(B * T, W).astype(jnp.float32)
        # CLIP: EOT token has the highest id; the row selection itself happens in-kernel
        # as a one-hot matmul on the last grid step.
        eot = jnp.argmax(tokens, axis=-1)
        eot_onehot = jax.nn.one_hot(jnp.arange(B) * T + eot, B * T, dtype=jnp.float32)
        return pallas_clip_text_encoder(
            x0, self.stk, self.causal_mask[:T, :T], self.lnf_g, self.lnf_b,
            eot_onehot, self.w_tp, B=B, T=T, H=self.heads)

    def __call__(self, x, throw_it):
        # Exact forward semantics of TextCLIPModified.forward
        if self.layer_type != "throwaway":
            clip_text_features = self.encode_text(x)
            if self.layer_type == "none":
                return clip_text_features
            return self.projection_head(clip_text_features)
        else:
            if throw_it:
                return self.encode_text(x)
            return self.projection_head(self.encode_text(x))


# ----------------------------------------------------------------------------
if __name__ == "__main__":
    key = jax.random.PRNGKey(0)
    kparam, ktok = jax.random.split(key)

    model = TextCLIPModifiedPallas(kparam, layer_type="linear",
                                   vocab=64, context=8, width=32, heads=4, layers=2)

    # tokenized text: batch=2, seq=8, int32 token ids
    x = jax.random.randint(ktok, (2, 8), 0, 64, dtype=jnp.int32)

    fwd = jax.jit(lambda toks: model(toks, False))
    out = jax.block_until_ready(fwd(x))
    assert out.shape == (2, 32) and out.dtype == jnp.float32
    print("KERNEL_OK")
</pallas_src>

<mosaic_0001>
module attributes {stable_mosaic.version = 11 : i64} {
  func.func @_head1_kernel(%arg0: i32, %arg1: memref<2x32xf32, #tpu.memory_space<vmem>>, %arg2: memref<32x32xf32, #tpu.memory_space<vmem>>, %arg3: memref<1x32xf32, #tpu.memory_space<vmem>>, %arg4: memref<2x32xf32, #tpu.memory_space<vmem>>) attributes {dimension_semantics = [#tpu.dimension_semantics<arbitrary>], iteration_bounds = array<i64: 1>, scalar_prefetch = 0 : i64, scratch_operands = 0 : i64, tpu.core_type = #tpu.core_type<tc>, window_params = [{pipeline_mode = #tpu.pipeline_mode<synchronous>, transform_indices = @transform_0, window_bounds = array<i64: 2, 32>}, {pipeline_mode = #tpu.pipeline_mode<synchronous>, transform_indices = @transform_1, window_bounds = array<i64: 32, 32>}, {pipeline_mode = #tpu.pipeline_mode<synchronous>, transform_indices = @transform_2, window_bounds = array<i64: 1, 32>}, {pipeline_mode = #tpu.pipeline_mode<synchronous>, transform_indices = @transform_3, window_bounds = array<i64: 2, 32>}]} {
    %c0 = arith.constant 0 : index
    %c0_0 = arith.constant 0 : index
    %0 = vector.load %arg1[%c0, %c0_0] : memref<2x32xf32, #tpu.memory_space<vmem>>, vector<2x32xf32>
    %c0_1 = arith.constant 0 : index
    %c0_2 = arith.constant 0 : index
    %1 = vector.load %arg2[%c0_1, %c0_2] : memref<32x32xf32, #tpu.memory_space<vmem>>, vector<32x32xf32>
    %cst = arith.constant dense<0.000000e+00> : vector<2x32xf32>
    %2 = tpu.matmul %0, %1, %cst {dimension_numbers = #tpu.dot_dimension_numbers<[1], [0], [0], [1], [0, 0, 1, 1], [], []>} : vector<2x32xf32>, vector<32x32xf32>, vector<2x32xf32> -> vector<2x32xf32>
    %c0_3 = arith.constant 0 : index
    %c0_4 = arith.constant 0 : index
    %3 = vector.load %arg3[%c0_3, %c0_4] : memref<1x32xf32, #tpu.memory_space<vmem>>, vector<1x32xf32>
    %4 = vector.broadcast %3 : vector<1x32xf32> to vector<2x32xf32>
    %5 = arith.addf %2, %4 : vector<2x32xf32>
    %c0_5 = arith.constant 0 : index
    %c0_6 = arith.constant 0 : index
    %6 = vector.load %arg4[%c0_5, %c0_6] : memref<2x32xf32, #tpu.memory_space<vmem>>, vector<2x32xf32>
    tpu.vector_store %arg4[%c0_5, %c0_6], %5 {strides = array<i32>} : memref<2x32xf32, #tpu.memory_space<vmem>>, vector<2x32xf32>,
    return
  }
  func.func @transform_0(%arg0: i32) -> (i32, i32) {
    %c0_i32 = arith.constant 0 : i32
    %c0_i32_0 = arith.constant 0 : i32
    %c0_i32_1 = arith.constant 0 : i32
    return %c0_i32, %c0_i32_0 : i32, i32
  }
  func.func @transform_1(%arg0: i32) -> (i32, i32) {
    %c0_i32 = arith.constant 0 : i32
    %c0_i32_0 = arith.constant 0 : i32
    %c0_i32_1 = arith.constant 0 : i32
    return %c0_i32, %c0_i32_0 : i32, i32
  }
  func.func @transform_2(%arg0: i32) -> (i32, i32) {
    %c0_i32 = arith.constant 0 : i32
    %c0_i32_0 = arith.constant 0 : i32
    %c0_i32_1 = arith.constant 0 : i32
    return %c0_i32, %c0_i32_0 : i32, i32
  }
  func.func @transform_3(%arg0: i32) -> (i32, i32) {
    %c0_i32 = arith.constant 0 : i32
    %c0_i32_0 = arith.constant 0 : i32
    %c0_i32_1 = arith.constant 0 : i32
    return %c0_i32, %c0_i32_0 : i32, i32
  }
}

module attributes {stable_mosaic.version = 11 : i64} {
  func.func @_encoder_kernel(%arg0: i32, %arg1: memref<16x32xf32, #tpu.memory_space<vmem>>, %arg2: memref<1x1x32xf32, #tpu.memory_space<vmem>>, %arg3: memref<1x1x32xf32, #tpu.memory_space<vmem>>, %arg4: memref<1x4x32x8xf32, #tpu.memory_space<vmem>>, %arg5: memref<1x4x1x8xf32, #tpu.memory_space<vmem>>, %arg6: memref<1x4x32x8xf32, #tpu.memory_space<vmem>>, %arg7: memref<1x4x1x8xf32, #tpu.memory_space<vmem>>, %arg8: memref<1x4x32x8xf32, #tpu.memory_space<vmem>>, %arg9: memref<1x4x1x8xf32, #tpu.memory_space<vmem>>, %arg10: memref<1x4x8x32xf32, #tpu.memory_space<vmem>>, %arg11: memref<1x1x32xf32, #tpu.memory_space<vmem>>, %arg12: memref<1x1x32xf32, #tpu.memory_space<vmem>>, %arg13: memref<1x1x32xf32, #tpu.memory_space<vmem>>, %arg14: memref<1x32x128xf32, #tpu.memory_space<vmem>>, %arg15: memref<1x1x128xf32, #tpu.memory_space<vmem>>, %arg16: memref<1x128x32xf32, #tpu.memory_space<vmem>>, %arg17: memref<1x1x32xf32, #tpu.memory_space<vmem>>, %arg18: memref<8x8xf32, #tpu.memory_space<vmem>>, %arg19: memref<1x32xf32, #tpu.memory_space<vmem>>, %arg20: memref<1x32xf32, #tpu.memory_space<vmem>>, %arg21: memref<2x16xf32, #tpu.memory_space<vmem>>, %arg22: memref<32x32xf32, #tpu.memory_space<vmem>>, %arg23: memref<2x32xf32, #tpu.memory_space<vmem>>, %arg24: memref<16x32xf32, #tpu.memory_space<vmem>>) attributes {dimension_semantics = [#tpu.dimension_semantics<arbitrary>], iteration_bounds = array<i64: 2>, scalar_prefetch = 0 : i64, scratch_operands = 1 : i64, tpu.core_type = #tpu.core_type<tc>, window_params = [{pipeline_mode = #tpu.pipeline_mode<synchronous>, transform_indices = @transform_0, window_bounds = array<i64: 16, 32>}, {transform_indices = @transform_1, window_bounds = array<i64: 1, 1, 32>}, {transform_indices = @transform_2, window_bounds = array<i64: 1, 1, 32>}, {transform_indices = @transform_3, window_bounds = array<i64: 1, 4, 32, 8>}, {transform_indices = @transform_4, window_bounds = array<i64: 1, 4, 1, 8>}, {transform_indices = @transform_5, window_bounds = array<i64: 1, 4, 32, 8>}, {transform_indices = @transform_6, window_bounds = array<i64: 1, 4, 1, 8>}, {transform_indices = @transform_7, window_bounds = array<i64: 1, 4, 32, 8>}, {transform_indices = @transform_8, window_bounds = array<i64: 1, 4, 1, 8>}, {transform_indices = @transform_9, window_bounds = array<i64: 1, 4, 8, 32>}, {transform_indices = @transform_10, window_bounds = array<i64: 1, 1, 32>}, {transform_indices = @transform_11, window_bounds = array<i64: 1, 1, 32>}, {transform_indices = @transform_12, window_bounds = array<i64: 1, 1, 32>}, {transform_indices = @transform_13, window_bounds = array<i64: 1, 32, 128>}, {transform_indices = @transform_14, window_bounds = array<i64: 1, 1, 128>}, {transform_indices = @transform_15, window_bounds = array<i64: 1, 128, 32>}, {transform_indices = @transform_16, window_bounds = array<i64: 1, 1, 32>}, {pipeline_mode = #tpu.pipeline_mode<synchronous>, transform_indices = @transform_17, window_bounds = array<i64: 8, 8>}, {pipeline_mode = #tpu.pipeline_mode<synchronous>, transform_indices = @transform_18, window_bounds = array<i64: 1, 32>}, {pipeline_mode = #tpu.pipeline_mode<synchronous>, transform_indices = @transform_19, window_bounds = array<i64: 1, 32>}, {pipeline_mode = #tpu.pipeline_mode<synchronous>, transform_indices = @transform_20, window_bounds = array<i64: 2, 16>}, {pipeline_mode = #tpu.pipeline_mode<synchronous>, transform_indices = @transform_21, window_bounds = array<i64: 32, 32>}, {pipeline_mode = #tpu.pipeline_mode<synchronous>, transform_indices = @transform_22, window_bounds = array<i64: 2, 32>}]} {
    %c0_i32 = arith.constant 0 : i32
    %0 = arith.cmpi eq, %arg0, %c0_i32 : i32
    %1 = arith.extui %0 : i1 to i32
    %c0_i32_0 = arith.constant 0 : i32
    %2 = arith.cmpi ne, %1, %c0_i32_0 : i32
    scf.if %2 {
      %c0_188 = arith.constant 0 : index
      %c0_189 = arith.constant 0 : index
      %261 = vector.load %arg1[%c0_188, %c0_189] : memref<16x32xf32, #tpu.memory_space<vmem>>, vector<16x32xf32>
      %c0_190 = arith.constant 0 : index
      %c0_191 = arith.constant 0 : index
      %262 = vector.load %arg24[%c0_190, %c0_191] : memref<16x32xf32, #tpu.memory_space<vmem>>, vector<16x32xf32>
      tpu.vector_store %arg24[%c0_190, %c0_191], %261 {strides = array<i32>} : memref<16x32xf32, #tpu.memory_space<vmem>>, vector<16x32xf32>,
    } else {
    }
    %c0 = arith.constant 0 : index
    %c0_1 = arith.constant 0 : index
    %3 = vector.load %arg24[%c0, %c0_1] : memref<16x32xf32, #tpu.memory_space<vmem>>, vector<16x32xf32>
    %c0_2 = arith.constant 0 : index
    %c0_3 = arith.constant 0 : index
    %c0_4 = arith.constant 0 : index
    %4 = vector.load %arg2[%c0_2, %c0_3, %c0_4] : memref<1x1x32xf32, #tpu.memory_space<vmem>>, vector<1x1x32xf32>
    %5 = vector.shape_cast %4 : vector<1x1x32xf32> to vector<1x32xf32>
    %c0_5 = arith.constant 0 : index
    %c0_6 = arith.constant 0 : index
    %c0_7 = arith.constant 0 : index
    %6 = vector.load %arg3[%c0_5, %c0_6, %c0_7] : memref<1x1x32xf32, #tpu.memory_space<vmem>>, vector<1x1x32xf32>
    %7 = vector.shape_cast %6 : vector<1x1x32xf32> to vector<1x32xf32>
    %cst = arith.constant dense<0.000000e+00> : vector<16xf32>
    %8 = vector.multi_reduction <add>, %3, %cst [1] : vector<16x32xf32> to vector<16xf32>
    %9 = vector.shape_cast %8 : vector<16xf32> to vector<16x1xf32>
    %cst_8 = arith.constant 3.200000e+01 : f32
    %10 = vector.broadcast %cst_8 : f32 to vector<16x1xf32>
    %11 = arith.divf %9, %10 : vector<16x1xf32>
    %12 = vector.broadcast %11 : vector<16x1xf32> to vector<16x32xf32>
    %13 = arith.subf %3, %12 : vector<16x32xf32>
    %14 = arith.mulf %13, %13 : vector<16x32xf32>
    %cst_9 = arith.constant dense<0.000000e+00> : vector<16xf32>
    %15 = vector.multi_reduction <add>, %14, %cst_9 [1] : vector<16x32xf32> to vector<16xf32>
    %16 = vector.shape_cast %15 : vector<16xf32> to vector<16x1xf32>
    %cst_10 = arith.constant 3.200000e+01 : f32
    %17 = vector.broadcast %cst_10 : f32 to vector<16x1xf32>
    %18 = arith.divf %16, %17 : vector<16x1xf32>
    %19 = vector.broadcast %11 : vector<16x1xf32> to vector<16x32xf32>
    %20 = arith.subf %3, %19 : vector<16x32xf32>
    %cst_11 = arith.constant 9.99999974E-6 : f32
    %21 = vector.broadcast %cst_11 : f32 to vector<16x1xf32>
    %22 = arith.addf %18, %21 : vector<16x1xf32>
    %23 = math.rsqrt %22 : vector<16x1xf32>
    %24 = vector.broadcast %23 : vector<16x1xf32> to vector<16x32xf32>
    %25 = arith.mulf %20, %24 : vector<16x32xf32>
    %26 = vector.broadcast %5 : vector<1x32xf32> to vector<16x32xf32>
    %27 = arith.mulf %25, %26 : vector<16x32xf32>
    %28 = vector.broadcast %7 : vector<1x32xf32> to vector<16x32xf32>
    %29 = arith.addf %27, %28 : vector<16x32xf32>
    %c0_12 = arith.constant 0 : index
    %c0_13 = arith.constant 0 : index
    %30 = vector.load %arg18[%c0_12, %c0_13] : memref<8x8xf32, #tpu.memory_space<vmem>>, vector<8x8xf32>
    %31 = vector.shape_cast %30 : vector<8x8xf32> to vector<1x8x8xf32>
    %c0_14 = arith.constant 0 : index
    %c0_15 = arith.constant 0 : index
    %c0_16 = arith.constant 0 : index
    %c0_17 = arith.constant 0 : index
    %32 = vector.load %arg4[%c0_14, %c0_15, %c0_16, %c0_17] : memref<1x4x32x8xf32, #tpu.memory_space<vmem>>, vector<1x1x32x8xf32>
    %33 = vector.shape_cast %32 : vector<1x1x32x8xf32> to vector<32x8xf32>
    %cst_18 = arith.constant dense<0.000000e+00> : vector<16x8xf32>
    %34 = tpu.matmul %29, %33, %cst_18 {dimension_numbers = #tpu.dot_dimension_numbers<[1], [0], [0], [1], [0, 0, 1, 1], [], []>} : vector<16x32xf32>, vector<32x8xf32>, vector<16x8xf32> -> vector<16x8xf32>
    %c0_19 = arith.constant 0 : index
    %c0_20 = arith.constant 0 : index
    %c0_21 = arith.constant 0 : index
    %c0_22 = arith.constant 0 : index
    %35 = vector.load %arg5[%c0_19, %c0_20, %c0_21, %c0_22] : memref<1x4x1x8xf32, #tpu.memory_space<vmem>>, vector<1x1x1x8xf32>
    %36 = vector.shape_cast %35 : vector<1x1x1x8xf32> to vector<1x8xf32>
    %37 = vector.broadcast %36 : vector<1x8xf32> to vector<16x8xf32>
    %38 = arith.addf %34, %37 : vector<16x8xf32>
    %39 = vector.shape_cast %38 : vector<16x8xf32> to vector<2x8x8xf32>
    %c0_23 = arith.constant 0 : index
    %c0_24 = arith.constant 0 : index
    %c0_25 = arith.constant 0 : index
    %c0_26 = arith.constant 0 : index
    %40 = vector.load %arg6[%c0_23, %c0_24, %c0_25, %c0_26] : memref<1x4x32x8xf32, #tpu.memory_space<vmem>>, vector<1x1x32x8xf32>
    %41 = vector.shape_cast %40 : vector<1x1x32x8xf32> to vector<32x8xf32>
    %cst_27 = arith.constant dense<0.000000e+00> : vector<16x8xf32>
    %42 = tpu.matmul %29, %41, %cst_27 {dimension_numbers = #tpu.dot_dimension_numbers<[1], [0], [0], [1], [0, 0, 1, 1], [], []>} : vector<16x32xf32>, vector<32x8xf32>, vector<16x8xf32> -> vector<16x8xf32>
    %c0_28 = arith.constant 0 : index
    %c0_29 = arith.constant 0 : index
    %c0_30 = arith.constant 0 : index
    %c0_31 = arith.constant 0 : index
    %43 = vector.load %arg7[%c0_28, %c0_29, %c0_30, %c0_31] : memref<1x4x1x8xf32, #tpu.memory_space<vmem>>, vector<1x1x1x8xf32>
    %44 = vector.shape_cast %43 : vector<1x1x1x8xf32> to vector<1x8xf32>
    %45 = vector.broadcast %44 : vector<1x8xf32> to vector<16x8xf32>
    %46 = arith.addf %42, %45 : vector<16x8xf32>
    %47 = vector.shape_cast %46 : vector<16x8xf32> to vector<2x8x8xf32>
    %c0_32 = arith.constant 0 : index
    %c0_33 = arith.constant 0 : index
    %c0_34 = arith.constant 0 : index
    %c0_35 = arith.constant 0 : index
    %48 = vector.load %arg8[%c0_32, %c0_33, %c0_34, %c0_35] : memref<1x4x32x8xf32, #tpu.memory_space<vmem>>, vector<1x1x32x8xf32>
    %49 = vector.shape_cast %48 : vector<1x1x32x8xf32> to vector<32x8xf32>
    %cst_36 = arith.constant dense<0.000000e+00> : vector<16x8xf32>
    %50 = tpu.matmul %29, %49, %cst_36 {dimension_numbers = #tpu.dot_dimension_numbers<[1], [0], [0], [1], [0, 0, 1, 1], [], []>} : vector<16x32xf32>, vector<32x8xf32>, vector<16x8xf32> -> vector<16x8xf32>
    %c0_37 = arith.constant 0 : index
    %c0_38 = arith.constant 0 : index
    %c0_39 = arith.constant 0 : index
    %c0_40 = arith.constant 0 : index
    %51 = vector.load %arg9[%c0_37, %c0_38, %c0_39, %c0_40] : memref<1x4x1x8xf32, #tpu.memory_space<vmem>>, vector<1x1x1x8xf32>
    %52 = vector.shape_cast %51 : vector<1x1x1x8xf32> to vector<1x8xf32>
    %53 = vector.broadcast %52 : vector<1x8xf32> to vector<16x8xf32>
    %54 = arith.addf %50, %53 : vector<16x8xf32>
    %55 = vector.shape_cast %54 : vector<16x8xf32> to vector<2x8x8xf32>
    "tpu.trace_start"() <{level = 10 : i32, message = "bqd,bkd->bqk"}> : () -> ()
    %cst_41 = arith.constant dense<0.000000e+00> : vector<2x8x8xf32>
    %56 = tpu.matmul %39, %47, %cst_41 {dimension_numbers = #tpu.dot_dimension_numbers<[2], [2], [1], [1], [0, 0, 0, 1, 1, 1], [0], [0]>} : vector<2x8x8xf32>, vector<2x8x8xf32>, vector<2x8x8xf32> -> vector<2x8x8xf32>
    "tpu.trace_stop"() : () -> ()
    %57 = vector.broadcast %31 : vector<1x8x8xf32> to vector<2x8x8xf32>
    %58 = arith.addf %56, %57 : vector<2x8x8xf32>
    %cst_42 = arith.constant dense<0xFF800000> : vector<2x8xf32>
    %59 = vector.multi_reduction <maximumf>, %58, %cst_42 [2] : vector<2x8x8xf32> to vector<2x8xf32>
    %60 = vector.shape_cast %59 : vector<2x8xf32> to vector<2x8x1xf32>
    %61 = vector.broadcast %60 : vector<2x8x1xf32> to vector<2x8x8xf32>
    %62 = arith.subf %58, %61 : vector<2x8x8xf32>
    %63 = math.exp %62 : vector<2x8x8xf32>
    %cst_43 = arith.constant dense<0.000000e+00> : vector<2x8xf32>
    %64 = vector.multi_reduction <add>, %63, %cst_43 [2] : vector<2x8x8xf32> to vector<2x8xf32>
    %65 = vector.shape_cast %64 : vector<2x8xf32> to vector<2x8x1xf32>
    %66 = tpu.reciprocal %65 {approx = true} : vector<2x8x1xf32> -> vector<2x8x1xf32>
    %67 = vector.broadcast %66 : vector<2x8x1xf32> to vector<2x8x8xf32>
    %68 = arith.mulf %63, %67 : vector<2x8x8xf32>
    "tpu.trace_start"() <{level = 10 : i32, message = "bqk,bkd->bqd"}> : () -> ()
    %cst_44 = arith.constant dense<0.000000e+00> : vector<2x8x8xf32>
    %69 = tpu.matmul %68, %55, %cst_44 {dimension_numbers = #tpu.dot_dimension_numbers<[2], [1], [1], [2], [0, 0, 0, 1, 1, 2], [0], [0]>} : vector<2x8x8xf32>, vector<2x8x8xf32>, vector<2x8x8xf32> -> vector<2x8x8xf32>
    "tpu.trace_stop"() : () -> ()
    %70 = vector.shape_cast %69 : vector<2x8x8xf32> to vector<16x8xf32>
    %c0_45 = arith.constant 0 : index
    %c0_46 = arith.constant 0 : index
    %c0_47 = arith.constant 0 : index
    %c0_48 = arith.constant 0 : index
    %71 = vector.load %arg10[%c0_45, %c0_46, %c0_47, %c0_48] : memref<1x4x8x32xf32, #tpu.memory_space<vmem>>, vector<1x1x8x32xf32>
    %72 = vector.shape_cast %71 : vector<1x1x8x32xf32> to vector<8x32xf32>
    %cst_49 = arith.constant dense<0.000000e+00> : vector<16x32xf32>
    %73 = tpu.matmul %70, %72, %cst_49 {dimension_numbers = #tpu.dot_dimension_numbers<[1], [0], [0], [1], [0, 0, 1, 1], [], []>} : vector<16x8xf32>, vector<8x32xf32>, vector<16x32xf32> -> vector<16x32xf32>
    %c0_50 = arith.constant 0 : index
    %c1 = arith.constant 1 : index
    %c0_51 = arith.constant 0 : index
    %c0_52 = arith.constant 0 : index
    %74 = vector.load %arg4[%c0_50, %c1, %c0_51, %c0_52] : memref<1x4x32x8xf32, #tpu.memory_space<vmem>>, vector<1x1x32x8xf32>
    %75 = vector.shape_cast %74 : vector<1x1x32x8xf32> to vector<32x8xf32>
    %cst_53 = arith.constant dense<0.000000e+00> : vector<16x8xf32>
    %76 = tpu.matmul %29, %75, %cst_53 {dimension_numbers = #tpu.dot_dimension_numbers<[1], [0], [0], [1], [0, 0, 1, 1], [], []>} : vector<16x32xf32>, vector<32x8xf32>, vector<16x8xf32> -> vector<16x8xf32>
    %c0_54 = arith.constant 0 : index
    %c1_55 = arith.constant 1 : index
    %c0_56 = arith.constant 0 : index
    %c0_57 = arith.constant 0 : index
    %77 = vector.load %arg5[%c0_54, %c1_55, %c0_56, %c0_57] : memref<1x4x1x8xf32, #tpu.memory_space<vmem>>, vector<1x1x1x8xf32>
    %78 = vector.shape_cast %77 : vector<1x1x1x8xf32> to vector<1x8xf32>
    %79 = vector.broadcast %78 : vector<1x8xf32> to vector<16x8xf32>
    %80 = arith.addf %76, %79 : vector<16x8xf32>
    %81 = vector.shape_cast %80 : vector<16x8xf32> to vector<2x8x8xf32>
    %c0_58 = arith.constant 0 : index
    %c1_59 = arith.constant 1 : index
    %c0_60 = arith.constant 0 : index
    %c0_61 = arith.constant 0 : index
    %82 = vector.load %arg6[%c0_58, %c1_59, %c0_60, %c0_61] : memref<1x4x32x8xf32, #tpu.memory_space<vmem>>, vector<1x1x32x8xf32>
    %83 = vector.shape_cast %82 : vector<1x1x32x8xf32> to vector<32x8xf32>
    %cst_62 = arith.constant dense<0.000000e+00> : vector<16x8xf32>
    %84 = tpu.matmul %29, %83, %cst_62 {dimension_numbers = #tpu.dot_dimension_numbers<[1], [0], [0], [1], [0, 0, 1, 1], [], []>} : vector<16x32xf32>, vector<32x8xf32>, vector<16x8xf32> -> vector<16x8xf32>
    %c0_63 = arith.constant 0 : index
    %c1_64 = arith.constant 1 : index
    %c0_65 = arith.constant 0 : index
    %c0_66 = arith.constant 0 : index
    %85 = vector.load %arg7[%c0_63, %c1_64, %c0_65, %c0_66] : memref<1x4x1x8xf32, #tpu.memory_space<vmem>>, vector<1x1x1x8xf32>
    %86 = vector.shape_cast %85 : vector<1x1x1x8xf32> to vector<1x8xf32>
    %87 = vector.broadcast %86 : vector<1x8xf32> to vector<16x8xf32>
    %88 = arith.addf %84, %87 : vector<16x8xf32>
    %89 = vector.shape_cast %88 : vector<16x8xf32> to vector<2x8x8xf32>
    %c0_67 = arith.constant 0 : index
    %c1_68 = arith.constant 1 : index
    %c0_69 = arith.constant 0 : index
    %c0_70 = arith.constant 0 : index
    %90 = vector.load %arg8[%c0_67, %c1_68, %c0_69, %c0_70] : memref<1x4x32x8xf32, #tpu.memory_space<vmem>>, vector<1x1x32x8xf32>
    %91 = vector.shape_cast %90 : vector<1x1x32x8xf32> to vector<32x8xf32>
    %cst_71 = arith.constant dense<0.000000e+00> : vector<16x8xf32>
    %92 = tpu.matmul %29, %91, %cst_71 {dimension_numbers = #tpu.dot_dimension_numbers<[1], [0], [0], [1], [0, 0, 1, 1], [], []>} : vector<16x32xf32>, vector<32x8xf32>, vector<16x8xf32> -> vector<16x8xf32>
    %c0_72 = arith.constant 0 : index
    %c1_73 = arith.constant 1 : index
    %c0_74 = arith.constant 0 : index
    %c0_75 = arith.constant 0 : index
    %93 = vector.load %arg9[%c0_72, %c1_73, %c0_74, %c0_75] : memref<1x4x1x8xf32, #tpu.memory_space<vmem>>, vector<1x1x1x8xf32>
    %94 = vector.shape_cast %93 : vector<1x1x1x8xf32> to vector<1x8xf32>
    %95 = vector.broadcast %94 : vector<1x8xf32> to vector<16x8xf32>
    %96 = arith.addf %92, %95 : vector<16x8xf32>
    %97 = vector.shape_cast %96 : vector<16x8xf32> to vector<2x8x8xf32>
    "tpu.trace_start"() <{level = 10 : i32, message = "bqd,bkd->bqk"}> : () -> ()
    %cst_76 = arith.constant dense<0.000000e+00> : vector<2x8x8xf32>
    %98 = tpu.matmul %81, %89, %cst_76 {dimension_numbers = #tpu.dot_dimension_numbers<[2], [2], [1], [1], [0, 0, 0, 1, 1, 1], [0], [0]>} : vector<2x8x8xf32>, vector<2x8x8xf32>, vector<2x8x8xf32> -> vector<2x8x8xf32>
    "tpu.trace_stop"() : () -> ()
    %99 = vector.broadcast %31 : vector<1x8x8xf32> to vector<2x8x8xf32>
    %100 = arith.addf %98, %99 : vector<2x8x8xf32>
    %cst_77 = arith.constant dense<0xFF800000> : vector<2x8xf32>
    %101 = vector.multi_reduction <maximumf>, %100, %cst_77 [2] : vector<2x8x8xf32> to vector<2x8xf32>
    %102 = vector.shape_cast %101 : vector<2x8xf32> to vector<2x8x1xf32>
    %103 = vector.broadcast %102 : vector<2x8x1xf32> to vector<2x8x8xf32>
    %104 = arith.subf %100, %103 : vector<2x8x8xf32>
    %105 = math.exp %104 : vector<2x8x8xf32>
    %cst_78 = arith.constant dense<0.000000e+00> : vector<2x8xf32>
    %106 = vector.multi_reduction <add>, %105, %cst_78 [2] : vector<2x8x8xf32> to vector<2x8xf32>
    %107 = vector.shape_cast %106 : vector<2x8xf32> to vector<2x8x1xf32>
    %108 = tpu.reciprocal %107 {approx = true} : vector<2x8x1xf32> -> vector<2x8x1xf32>
    %109 = vector.broadcast %108 : vector<2x8x1xf32> to vector<2x8x8xf32>
    %110 = arith.mulf %105, %109 : vector<2x8x8xf32>
    "tpu.trace_start"() <{level = 10 : i32, message = "bqk,bkd->bqd"}> : () -> ()
    %cst_79 = arith.constant dense<0.000000e+00> : vector<2x8x8xf32>
    %111 = tpu.matmul %110, %97, %cst_79 {dimension_numbers = #tpu.dot_dimension_numbers<[2], [1], [1], [2], [0, 0, 0, 1, 1, 2], [0], [0]>} : vector<2x8x8xf32>, vector<2x8x8xf32>, vector<2x8x8xf32> -> vector<2x8x8xf32>
    "tpu.trace_stop"() : () -> ()
    %112 = vector.shape_cast %111 : vector<2x8x8xf32> to vector<16x8xf32>
    %c0_80 = arith.constant 0 : index
    %c1_81 = arith.constant 1 : index
    %c0_82 = arith.constant 0 : index
    %c0_83 = arith.constant 0 : index
    %113 = vector.load %arg10[%c0_80, %c1_81, %c0_82, %c0_83] : memref<1x4x8x32xf32, #tpu.memory_space<vmem>>, vector<1x1x8x32xf32>
    %114 = vector.shape_cast %113 : vector<1x1x8x32xf32> to vector<8x32xf32>
    %cst_84 = arith.constant dense<0.000000e+00> : vector<16x32xf32>
    %115 = tpu.matmul %112, %114, %cst_84 {dimension_numbers = #tpu.dot_dimension_numbers<[1], [0], [0], [1], [0, 0, 1, 1], [], []>} : vector<16x8xf32>, vector<8x32xf32>, vector<16x32xf32> -> vector<16x32xf32>
    %116 = arith.addf %73, %115 : vector<16x32xf32>
    %c0_85 = arith.constant 0 : index
    %c2 = arith.constant 2 : index
    %c0_86 = arith.constant 0 : index
    %c0_87 = arith.constant 0 : index
    %117 = vector.load %arg4[%c0_85, %c2, %c0_86, %c0_87] : memref<1x4x32x8xf32, #tpu.memory_space<vmem>>, vector<1x1x32x8xf32>
    %118 = vector.shape_cast %117 : vector<1x1x32x8xf32> to vector<32x8xf32>
    %cst_88 = arith.constant dense<0.000000e+00> : vector<16x8xf32>
    %119 = tpu.matmul %29, %118, %cst_88 {dimension_numbers = #tpu.dot_dimension_numbers<[1], [0], [0], [1], [0, 0, 1, 1], [], []>} : vector<16x32xf32>, vector<32x8xf32>, vector<16x8xf32> -> vector<16x8xf32>
    %c0_89 = arith.constant 0 : index
    %c2_90 = arith.constant 2 : index
    %c0_91 = arith.constant 0 : index
    %c0_92 = arith.constant 0 : index
    %120 = vector.load %arg5[%c0_89, %c2_90, %c0_91, %c0_92] : memref<1x4x1x8xf32, #tpu.memory_space<vmem>>, vector<1x1x1x8xf32>
    %121 = vector.shape_cast %120 : vector<1x1x1x8xf32> to vector<1x8xf32>
    %122 = vector.broadcast %121 : vector<1x8xf32> to vector<16x8xf32>
    %123 = arith.addf %119, %122 : vector<16x8xf32>
    %124 = vector.shape_cast %123 : vector<16x8xf32> to vector<2x8x8xf32>
    %c0_93 = arith.constant 0 : index
    %c2_94 = arith.constant 2 : index
    %c0_95 = arith.constant 0 : index
    %c0_96 = arith.constant 0 : index
    %125 = vector.load %arg6[%c0_93, %c2_94, %c0_95, %c0_96] : memref<1x4x32x8xf32, #tpu.memory_space<vmem>>, vector<1x1x32x8xf32>
    %126 = vector.shape_cast %125 : vector<1x1x32x8xf32> to vector<32x8xf32>
    %cst_97 = arith.constant dense<0.000000e+00> : vector<16x8xf32>
    %127 = tpu.matmul %29, %126, %cst_97 {dimension_numbers = #tpu.dot_dimension_numbers<[1], [0], [0], [1], [0, 0, 1, 1], [], []>} : vector<16x32xf32>, vector<32x8xf32>, vector<16x8xf32> -> vector<16x8xf32>
    %c0_98 = arith.constant 0 : index
    %c2_99 = arith.constant 2 : index
    %c0_100 = arith.constant 0 : index
    %c0_101 = arith.constant 0 : index
    %128 = vector.load %arg7[%c0_98, %c2_99, %c0_100, %c0_101] : memref<1x4x1x8xf32, #tpu.memory_space<vmem>>, vector<1x1x1x8xf32>
    %129 = vector.shape_cast %128 : vector<1x1x1x8xf32> to vector<1x8xf32>
    %130 = vector.broadcast %129 : vector<1x8xf32> to vector<16x8xf32>
    %131 = arith.addf %127, %130 : vector<16x8xf32>
    %132 = vector.shape_cast %131 : vector<16x8xf32> to vector<2x8x8xf32>
    %c0_102 = arith.constant 0 : index
    %c2_103 = arith.constant 2 : index
    %c0_104 = arith.constant 0 : index
    %c0_105 = arith.constant 0 : index
    %133 = vector.load %arg8[%c0_102, %c2_103, %c0_104, %c0_105] : memref<1x4x32x8xf32, #tpu.memory_space<vmem>>, vector<1x1x32x8xf32>
    %134 = vector.shape_cast %133 : vector<1x1x32x8xf32> to vector<32x8xf32>
    %cst_106 = arith.constant dense<0.000000e+00> : vector<16x8xf32>
    %135 = tpu.matmul %29, %134, %cst_106 {dimension_numbers = #tpu.dot_dimension_numbers<[1], [0], [0], [1], [0, 0, 1, 1], [], []>} : vector<16x32xf32>, vector<32x8xf32>, vector<16x8xf32> -> vector<16x8xf32>
    %c0_107 = arith.constant 0 : index
    %c2_108 = arith.constant 2 : index
    %c0_109 = arith.constant 0 : index
    %c0_110 = arith.constant 0 : index
    %136 = vector.load %arg9[%c0_107, %c2_108, %c0_109, %c0_110] : memref<1x4x1x8xf32, #tpu.memory_space<vmem>>, vector<1x1x1x8xf32>
    %137 = vector.shape_cast %136 : vector<1x1x1x8xf32> to vector<1x8xf32>
    %138 = vector.broadcast %137 : vector<1x8xf32> to vector<16x8xf32>
    %139 = arith.addf %135, %138 : vector<16x8xf32>
    %140 = vector.shape_cast %139 : vector<16x8xf32> to vector<2x8x8xf32>
    "tpu.trace_start"() <{level = 10 : i32, message = "bqd,bkd->bqk"}> : () -> ()
    %cst_111 = arith.constant dense<0.000000e+00> : vector<2x8x8xf32>
    %141 = tpu.matmul %124, %132, %cst_111 {dimension_numbers = #tpu.dot_dimension_numbers<[2], [2], [1], [1], [0, 0, 0, 1, 1, 1], [0], [0]>} : vector<2x8x8xf32>, vector<2x8x8xf32>, vector<2x8x8xf32> -> vector<2x8x8xf32>
    "tpu.trace_stop"() : () -> ()
    %142 = vector.broadcast %31 : vector<1x8x8xf32> to vector<2x8x8xf32>
    %143 = arith.addf %141, %142 : vector<2x8x8xf32>
    %cst_112 = arith.constant dense<0xFF800000> : vector<2x8xf32>
    %144 = vector.multi_reduction <maximumf>, %143, %cst_112 [2] : vector<2x8x8xf32> to vector<2x8xf32>
    %145 = vector.shape_cast %144 : vector<2x8xf32> to vector<2x8x1xf32>
    %146 = vector.broadcast %145 : vector<2x8x1xf32> to vector<2x8x8xf32>
    %147 = arith.subf %143, %146 : vector<2x8x8xf32>
    %148 = math.exp %147 : vector<2x8x8xf32>
    %cst_113 = arith.constant dense<0.000000e+00> : vector<2x8xf32>
    %149 = vector.multi_reduction <add>, %148, %cst_113 [2] : vector<2x8x8xf32> to vector<2x8xf32>
    %150 = vector.shape_cast %149 : vector<2x8xf32> to vector<2x8x1xf32>
    %151 = tpu.reciprocal %150 {approx = true} : vector<2x8x1xf32> -> vector<2x8x1xf32>
    %152 = vector.broadcast %151 : vector<2x8x1xf32> to vector<2x8x8xf32>
    %153 = arith.mulf %148, %152 : vector<2x8x8xf32>
    "tpu.trace_start"() <{level = 10 : i32, message = "bqk,bkd->bqd"}> : () -> ()
    %cst_114 = arith.constant dense<0.000000e+00> : vector<2x8x8xf32>
    %154 = tpu.matmul %153, %140, %cst_114 {dimension_numbers = #tpu.dot_dimension_numbers<[2], [1], [1], [2], [0, 0, 0, 1, 1, 2], [0], [0]>} : vector<2x8x8xf32>, vector<2x8x8xf32>, vector<2x8x8xf32> -> vector<2x8x8xf32>
    "tpu.trace_stop"() : () -> ()
    %155 = vector.shape_cast %154 : vector<2x8x8xf32> to vector<16x8xf32>
    %c0_115 = arith.constant 0 : index
    %c2_116 = arith.constant 2 : index
    %c0_117 = arith.constant 0 : index
    %c0_118 = arith.constant 0 : index
    %156 = vector.load %arg10[%c0_115, %c2_116, %c0_117, %c0_118] : memref<1x4x8x32xf32, #tpu.memory_space<vmem>>, vector<1x1x8x32xf32>
    %157 = vector.shape_cast %156 : vector<1x1x8x32xf32> to vector<8x32xf32>
    %cst_119 = arith.constant dense<0.000000e+00> : vector<16x32xf32>
    %158 = tpu.matmul %155, %157, %cst_119 {dimension_numbers = #tpu.dot_dimension_numbers<[1], [0], [0], [1], [0, 0, 1, 1], [], []>} : vector<16x8xf32>, vector<8x32xf32>, vector<16x32xf32> -> vector<16x32xf32>
    %159 = arith.addf %116, %158 : vector<16x32xf32>
    %c0_120 = arith.constant 0 : index
    %c3 = arith.constant 3 : index
    %c0_121 = arith.constant 0 : index
    %c0_122 = arith.constant 0 : index
    %160 = vector.load %arg4[%c0_120, %c3, %c0_121, %c0_122] : memref<1x4x32x8xf32, #tpu.memory_space<vmem>>, vector<1x1x32x8xf32>
    %161 = vector.shape_cast %160 : vector<1x1x32x8xf32> to vector<32x8xf32>
    %cst_123 = arith.constant dense<0.000000e+00> : vector<16x8xf32>
    %162 = tpu.matmul %29, %161, %cst_123 {dimension_numbers = #tpu.dot_dimension_numbers<[1], [0], [0], [1], [0, 0, 1, 1], [], []>} : vector<16x32xf32>, vector<32x8xf32>, vector<16x8xf32> -> vector<16x8xf32>
    %c0_124 = arith.constant 0 : index
    %c3_125 = arith.constant 3 : index
    %c0_126 = arith.constant 0 : index
    %c0_127 = arith.constant 0 : index
    %163 = vector.load %arg5[%c0_124, %c3_125, %c0_126, %c0_127] : memref<1x4x1x8xf32, #tpu.memory_space<vmem>>, vector<1x1x1x8xf32>
    %164 = vector.shape_cast %163 : vector<1x1x1x8xf32> to vector<1x8xf32>
    %165 = vector.broadcast %164 : vector<1x8xf32> to vector<16x8xf32>
    %166 = arith.addf %162, %165 : vector<16x8xf32>
    %167 = vector.shape_cast %166 : vector<16x8xf32> to vector<2x8x8xf32>
    %c0_128 = arith.constant 0 : index
    %c3_129 = arith.constant 3 : index
    %c0_130 = arith.constant 0 : index
    %c0_131 = arith.constant 0 : index
    %168 = vector.load %arg6[%c0_128, %c3_129, %c0_130, %c0_131] : memref<1x4x32x8xf32, #tpu.memory_space<vmem>>, vector<1x1x32x8xf32>
    %169 = vector.shape_cast %168 : vector<1x1x32x8xf32> to vector<32x8xf32>
    %cst_132 = arith.constant dense<0.000000e+00> : vector<16x8xf32>
    %170 = tpu.matmul %29, %169, %cst_132 {dimension_numbers = #tpu.dot_dimension_numbers<[1], [0], [0], [1], [0, 0, 1, 1], [], []>} : vector<16x32xf32>, vector<32x8xf32>, vector<16x8xf32> -> vector<16x8xf32>
    %c0_133 = arith.constant 0 : index
    %c3_134 = arith.constant 3 : index
    %c0_135 = arith.constant 0 : index
    %c0_136 = arith.constant 0 : index
    %171 = vector.load %arg7[%c0_133, %c3_134, %c0_135, %c0_136] : memref<1x4x1x8xf32, #tpu.memory_space<vmem>>, vector<1x1x1x8xf32>
    %172 = vector.shape_cast %171 : vector<1x1x1x8xf32> to vector<1x8xf32>
    %173 = vector.broadcast %172 : vector<1x8xf32> to vector<16x8xf32>
    %174 = arith.addf %170, %173 : vector<16x8xf32>
    %175 = vector.shape_cast %174 : vector<16x8xf32> to vector<2x8x8xf32>
    %c0_137 = arith.constant 0 : index
    %c3_138 = arith.constant 3 : index
    %c0_139 = arith.constant 0 : index
    %c0_140 = arith.constant 0 : index
    %176 = vector.load %arg8[%c0_137, %c3_138, %c0_139, %c0_140] : memref<1x4x32x8xf32, #tpu.memory_space<vmem>>, vector<1x1x32x8xf32>
    %177 = vector.shape_cast %176 : vector<1x1x32x8xf32> to vector<32x8xf32>
    %cst_141 = arith.constant dense<0.000000e+00> : vector<16x8xf32>
    %178 = tpu.matmul %29, %177, %cst_141 {dimension_numbers = #tpu.dot_dimension_numbers<[1], [0], [0], [1], [0, 0, 1, 1], [], []>} : vector<16x32xf32>, vector<32x8xf32>, vector<16x8xf32> -> vector<16x8xf32>
    %c0_142 = arith.constant 0 : index
    %c3_143 = arith.constant 3 : index
    %c0_144 = arith.constant 0 : index
    %c0_145 = arith.constant 0 : index
    %179 = vector.load %arg9[%c0_142, %c3_143, %c0_144, %c0_145] : memref<1x4x1x8xf32, #tpu.memory_space<vmem>>, vector<1x1x1x8xf32>
    %180 = vector.shape_cast %179 : vector<1x1x1x8xf32> to vector<1x8xf32>
    %181 = vector.broadcast %180 : vector<1x8xf32> to vector<16x8xf32>
    %182 = arith.addf %178, %181 : vector<16x8xf32>
    %183 = vector.shape_cast %182 : vector<16x8xf32> to vector<2x8x8xf32>
    "tpu.trace_start"() <{level = 10 : i32, message = "bqd,bkd->bqk"}> : () -> ()
    %cst_146 = arith.constant dense<0.000000e+00> : vector<2x8x8xf32>
    %184 = tpu.matmul %167, %175, %cst_146 {dimension_numbers = #tpu.dot_dimension_numbers<[2], [2], [1], [1], [0, 0, 0, 1, 1, 1], [0], [0]>} : vector<2x8x8xf32>, vector<2x8x8xf32>, vector<2x8x8xf32> -> vector<2x8x8xf32>
    "tpu.trace_stop"() : () -> ()
    %185 = vector.broadcast %31 : vector<1x8x8xf32> to vector<2x8x8xf32>
    %186 = arith.addf %184, %185 : vector<2x8x8xf32>
    %cst_147 = arith.constant dense<0xFF800000> : vector<2x8xf32>
    %187 = vector.multi_reduction <maximumf>, %186, %cst_147 [2] : vector<2x8x8xf32> to vector<2x8xf32>
    %188 = vector.shape_cast %187 : vector<2x8xf32> to vector<2x8x1xf32>
    %189 = vector.broadcast %188 : vector<2x8x1xf32> to vector<2x8x8xf32>
    %190 = arith.subf %186, %189 : vector<2x8x8xf32>
    %191 = math.exp %190 : vector<2x8x8xf32>
    %cst_148 = arith.constant dense<0.000000e+00> : vector<2x8xf32>
    %192 = vector.multi_reduction <add>, %191, %cst_148 [2] : vector<2x8x8xf32> to vector<2x8xf32>
    %193 = vector.shape_cast %192 : vector<2x8xf32> to vector<2x8x1xf32>
    %194 = tpu.reciprocal %193 {approx = true} : vector<2x8x1xf32> -> vector<2x8x1xf32>
    %195 = vector.broadcast %194 : vector<2x8x1xf32> to vector<2x8x8xf32>
    %196 = arith.mulf %191, %195 : vector<2x8x8xf32>
    "tpu.trace_start"() <{level = 10 : i32, message = "bqk,bkd->bqd"}> : () -> ()
    %cst_149 = arith.constant dense<0.000000e+00> : vector<2x8x8xf32>
    %197 = tpu.matmul %196, %183, %cst_149 {dimension_numbers = #tpu.dot_dimension_numbers<[2], [1], [1], [2], [0, 0, 0, 1, 1, 2], [0], [0]>} : vector<2x8x8xf32>, vector<2x8x8xf32>, vector<2x8x8xf32> -> vector<2x8x8xf32>
    "tpu.trace_stop"() : () -> ()
    %198 = vector.shape_cast %197 : vector<2x8x8xf32> to vector<16x8xf32>
    %c0_150 = arith.constant 0 : index
    %c3_151 = arith.constant 3 : index
    %c0_152 = arith.constant 0 : index
    %c0_153 = arith.constant 0 : index
    %199 = vector.load %arg10[%c0_150, %c3_151, %c0_152, %c0_153] : memref<1x4x8x32xf32, #tpu.memory_space<vmem>>, vector<1x1x8x32xf32>
    %200 = vector.shape_cast %199 : vector<1x1x8x32xf32> to vector<8x32xf32>
    %cst_154 = arith.constant dense<0.000000e+00> : vector<16x32xf32>
    %201 = tpu.matmul %198, %200, %cst_154 {dimension_numbers = #tpu.dot_dimension_numbers<[1], [0], [0], [1], [0, 0, 1, 1], [], []>} : vector<16x8xf32>, vector<8x32xf32>, vector<16x32xf32> -> vector<16x32xf32>
    %202 = arith.addf %159, %201 : vector<16x32xf32>
    %203 = arith.addf %3, %202 : vector<16x32xf32>
    %c0_155 = arith.constant 0 : index
    %c0_156 = arith.constant 0 : index
    %c0_157 = arith.constant 0 : index
    %204 = vector.load %arg11[%c0_155, %c0_156, %c0_157] : memref<1x1x32xf32, #tpu.memory_space<vmem>>, vector<1x1x32xf32>
    %205 = vector.shape_cast %204 : vector<1x1x32xf32> to vector<1x32xf32>
    %206 = vector.broadcast %205 : vector<1x32xf32> to vector<16x32xf32>
    %207 = arith.addf %203, %206 : vector<16x32xf32>
    %c0_158 = arith.constant 0 : index
    %c0_159 = arith.constant 0 : index
    %c0_160 = arith.constant 0 : index
    %208 = vector.load %arg12[%c0_158, %c0_159, %c0_160] : memref<1x1x32xf32, #tpu.memory_space<vmem>>, vector<1x1x32xf32>
    %209 = vector.shape_cast %208 : vector<1x1x32xf32> to vector<1x32xf32>
    %c0_161 = arith.constant 0 : index
    %c0_162 = arith.constant 0 : index
    %c0_163 = arith.constant 0 : index
    %210 = vector.load %arg13[%c0_161, %c0_162, %c0_163] : memref<1x1x32xf32, #tpu.memory_space<vmem>>, vector<1x1x32xf32>
    %211 = vector.shape_cast %210 : vector<1x1x32xf32> to vector<1x32xf32>
    %cst_164 = arith.constant dense<0.000000e+00> : vector<16xf32>
    %212 = vector.multi_reduction <add>, %207, %cst_164 [1] : vector<16x32xf32> to vector<16xf32>
    %213 = vector.shape_cast %212 : vector<16xf32> to vector<16x1xf32>
    %cst_165 = arith.constant 3.200000e+01 : f32
    %214 = vector.broadcast %cst_165 : f32 to vector<16x1xf32>
    %215 = arith.divf %213, %214 : vector<16x1xf32>
    %216 = vector.broadcast %215 : vector<16x1xf32> to vector<16x32xf32>
    %217 = arith.subf %207, %216 : vector<16x32xf32>
    %218 = arith.mulf %217, %217 : vector<16x32xf32>
    %cst_166 = arith.constant dense<0.000000e+00> : vector<16xf32>
    %219 = vector.multi_reduction <add>, %218, %cst_166 [1] : vector<16x32xf32> to vector<16xf32>
    %220 = vector.shape_cast %219 : vector<16xf32> to vector<16x1xf32>
    %cst_167 = arith.constant 3.200000e+01 : f32
    %221 = vector.broadcast %cst_167 : f32 to vector<16x1xf32>
    %222 = arith.divf %220, %221 : vector<16x1xf32>
    %223 = vector.broadcast %215 : vector<16x1xf32> to vector<16x32xf32>
    %224 = arith.subf %207, %223 : vector<16x32xf32>
    %cst_168 = arith.constant 9.99999974E-6 : f32
    %225 = vector.broadcast %cst_168 : f32 to vector<16x1xf32>
    %226 = arith.addf %222, %225 : vector<16x1xf32>
    %227 = math.rsqrt %226 : vector<16x1xf32>
    %228 = vector.broadcast %227 : vector<16x1xf32> to vector<16x32xf32>
    %229 = arith.mulf %224, %228 : vector<16x32xf32>
    %230 = vector.broadcast %209 : vector<1x32xf32> to vector<16x32xf32>
    %231 = arith.mulf %229, %230 : vector<16x32xf32>
    %232 = vector.broadcast %211 : vector<1x32xf32> to vector<16x32xf32>
    %233 = arith.addf %231, %232 : vector<16x32xf32>
    %c0_169 = arith.constant 0 : index
    %c0_170 = arith.constant 0 : index
    %c0_171 = arith.constant 0 : index
    %234 = vector.load %arg14[%c0_169, %c0_170, %c0_171] : memref<1x32x128xf32, #tpu.memory_space<vmem>>, vector<1x32x128xf32>
    %235 = vector.shape_cast %234 : vector<1x32x128xf32> to vector<32x128xf32>
    %cst_172 = arith.constant dense<0.000000e+00> : vector<16x128xf32>
    %236 = tpu.matmul %233, %235, %cst_172 {dimension_numbers = #tpu.dot_dimension_numbers<[1], [0], [0], [1], [0, 0, 1, 1], [], []>} : vector<16x32xf32>, vector<32x128xf32>, vector<16x128xf32> -> vector<16x128xf32>
    %c0_173 = arith.constant 0 : index
    %c0_174 = arith.constant 0 : index
    %c0_175 = arith.constant 0 : index
    %237 = vector.load %arg15[%c0_173, %c0_174, %c0_175] : memref<1x1x128xf32, #tpu.memory_space<vmem>>, vector<1x1x128xf32>
    %238 = vector.shape_cast %237 : vector<1x1x128xf32> to vector<1x128xf32>
    %239 = vector.broadcast %238 : vector<1x128xf32> to vector<16x128xf32>
    %240 = arith.addf %236, %239 : vector<16x128xf32>
    %cst_176 = arith.constant 1.702000e+00 : f32
    %241 = vector.broadcast %cst_176 : f32 to vector<16x128xf32>
    %242 = arith.mulf %241, %240 : vector<16x128xf32>
    %243 = arith.negf %242 : vector<16x128xf32>
    %244 = math.exp %243 : vector<16x128xf32>
    %cst_177 = arith.constant 1.000000e+00 : f32
    %245 = vector.broadcast %cst_177 : f32 to vector<16x128xf32>
    %246 = arith.addf %245, %244 : vector<16x128xf32>
    %247 = arith.divf %245, %246 : vector<16x128xf32>
    %248 = arith.mulf %240, %247 : vector<16x128xf32>
    %c0_178 = arith.constant 0 : index
    %c0_179 = arith.constant 0 : index
    %c0_180 = arith.constant 0 : index
    %249 = vector.load %arg16[%c0_178, %c0_179, %c0_180] : memref<1x128x32xf32, #tpu.memory_space<vmem>>, vector<1x128x32xf32>
    %250 = vector.shape_cast %249 : vector<1x128x32xf32> to vector<128x32xf32>
    %cst_181 = arith.constant dense<0.000000e+00> : vector<16x32xf32>
    %251 = tpu.matmul %248, %250, %cst_181 {dimension_numbers = #tpu.dot_dimension_numbers<[1], [0], [0], [1], [0, 0, 1, 1], [], []>} : vector<16x128xf32>, vector<128x32xf32>, vector<16x32xf32> -> vector<16x32xf32>
    %c0_182 = arith.constant 0 : index
    %c0_183 = arith.constant 0 : index
    %c0_184 = arith.constant 0 : index
    %252 = vector.load %arg17[%c0_182, %c0_183, %c0_184] : memref<1x1x32xf32, #tpu.memory_space<vmem>>, vector<1x1x32xf32>
    %253 = vector.shape_cast %252 : vector<1x1x32xf32> to vector<1x32xf32>
    %254 = vector.broadcast %253 : vector<1x32xf32> to vector<16x32xf32>
    %255 = arith.addf %251, %254 : vector<16x32xf32>
    %256 = arith.addf %207, %255 : vector<16x32xf32>
    %c0_185 = arith.constant 0 : index
    %c0_186 = arith.constant 0 : index
    %257 = vector.load %arg24[%c0_185, %c0_186] : memref<16x32xf32, #tpu.memory_space<vmem>>, vector<16x32xf32>
    tpu.vector_store %arg24[%c0_185, %c0_186], %256 {strides = array<i32>} : memref<16x32xf32, #tpu.memory_space<vmem>>, vector<16x32xf32>,
    %c1_i32 = arith.constant 1 : i32
    %258 = arith.cmpi eq, %arg0, %c1_i32 : i32
    %259 = arith.extui %258 : i1 to i32
    %c0_i32_187 = arith.constant 0 : i32
    %260 = arith.cmpi ne, %259, %c0_i32_187 : i32
    scf.if %260 {
      %c0_188 = arith.constant 0 : index
      %c0_189 = arith.constant 0 : index
      %261 = vector.load %arg19[%c0_188, %c0_189] : memref<1x32xf32, #tpu.memory_space<vmem>>, vector<1x32xf32>
      %c0_190 = arith.constant 0 : index
      %c0_191 = arith.constant 0 : index
      %262 = vector.load %arg20[%c0_190, %c0_191] : memref<1x32xf32, #tpu.memory_space<vmem>>, vector<1x32xf32>
      %cst_192 = arith.constant dense<0.000000e+00> : vector<16xf32>
      %263 = vector.multi_reduction <add>, %256, %cst_192 [1] : vector<16x32xf32> to vector<16xf32>
      %264 = vector.shape_cast %263 : vector<16xf32> to vector<16x1xf32>
      %cst_193 = arith.constant 3.200000e+01 : f32
      %265 = vector.broadcast %cst_193 : f32 to vector<16x1xf32>
      %266 = arith.divf %264, %265 : vector<16x1xf32>
      %267 = vector.broadcast %266 : vector<16x1xf32> to vector<16x32xf32>
      %268 = arith.subf %256, %267 : vector<16x32xf32>
      %269 = arith.mulf %268, %268 : vector<16x32xf32>
      %cst_194 = arith.constant dense<0.000000e+00> : vector<16xf32>
      %270 = vector.multi_reduction <add>, %269, %cst_194 [1] : vector<16x32xf32> to vector<16xf32>
      %271 = vector.shape_cast %270 : vector<16xf32> to vector<16x1xf32>
      %cst_195 = arith.constant 3.200000e+01 : f32
      %272 = vector.broadcast %cst_195 : f32 to vector<16x1xf32>
      %273 = arith.divf %271, %272 : vector<16x1xf32>
      %274 = vector.broadcast %266 : vector<16x1xf32> to vector<16x32xf32>
      %275 = arith.subf %256, %274 : vector<16x32xf32>
      %cst_196 = arith.constant 9.99999974E-6 : f32
      %276 = vector.broadcast %cst_196 : f32 to vector<16x1xf32>
      %277 = arith.addf %273, %276 : vector<16x1xf32>
      %278 = math.rsqrt %277 : vector<16x1xf32>
      %279 = vector.broadcast %278 : vector<16x1xf32> to vector<16x32xf32>
      %280 = arith.mulf %275, %279 : vector<16x32xf32>
      %281 = vector.broadcast %261 : vector<1x32xf32> to vector<16x32xf32>
      %282 = arith.mulf %280, %281 : vector<16x32xf32>
      %283 = vector.broadcast %262 : vector<1x32xf32> to vector<16x32xf32>
      %284 = arith.addf %282, %283 : vector<16x32xf32>
      %c0_197 = arith.constant 0 : index
      %c0_198 = arith.constant 0 : index
      %285 = vector.load %arg21[%c0_197, %c0_198] : memref<2x16xf32, #tpu.memory_space<vmem>>, vector<2x16xf32>
      %cst_199 = arith.constant dense<0.000000e+00> : vector<2x32xf32>
      %286 = tpu.matmul %285, %284, %cst_199 {dimension_numbers = #tpu.dot_dimension_numbers<[1], [0], [0], [1], [0, 0, 1, 1], [], []>} : vector<2x16xf32>, vector<16x32xf32>, vector<2x32xf32> -> vector<2x32xf32>
      %c0_200 = arith.constant 0 : index
      %c0_201 = arith.constant 0 : index
      %287 = vector.load %arg22[%c0_200, %c0_201] : memref<32x32xf32, #tpu.memory_space<vmem>>, vector<32x32xf32>
      %cst_202 = arith.constant dense<0.000000e+00> : vector<2x32xf32>
      %288 = tpu.matmul %286, %287, %cst_202 {dimension_numbers = #tpu.dot_dimension_numbers<[1], [0], [0], [1], [0, 0, 1, 1], [], []>} : vector<2x32xf32>, vector<32x32xf32>, vector<2x32xf32> -> vector<2x32xf32>
      %c0_203 = arith.constant 0 : index
      %c0_204 = arith.constant 0 : index
      %289 = vector.load %arg23[%c0_203, %c0_204] : memref<2x32xf32, #tpu.memory_space<vmem>>, vector<2x32xf32>
      tpu.vector_store %arg23[%c0_203, %c0_204], %288 {strides = array<i32>} : memref<2x32xf32, #tpu.memory_space<vmem>>, vector<2x32xf32>,
    } else {
    }
    return
  }
  func.func @transform_0(%arg0: i32) -> (i32, i32) {
    %c0_i32 = arith.constant 0 : i32
    %c0_i32_0 = arith.constant 0 : i32
    %c0_i32_1 = arith.constant 0 : i32
    return %c0_i32, %c0_i32_0 : i32, i32
  }
  func.func @transform_1(%arg0: i32) -> (i32, i32, i32) {
    %c0_i32 = arith.constant 0 : i32
    %c0_i32_0 = arith.constant 0 : i32
    %c0_i32_1 = arith.constant 0 : i32
    return %arg0, %c0_i32, %c0_i32_0 : i32, i32, i32
  }
  func.func @transform_2(%arg0: i32) -> (i32, i32, i32) {
    %c0_i32 = arith.constant 0 : i32
    %c0_i32_0 = arith.constant 0 : i32
    %c0_i32_1 = arith.constant 0 : i32
    return %arg0, %c0_i32, %c0_i32_0 : i32, i32, i32
  }
  func.func @transform_3(%arg0: i32) -> (i32, i32, i32, i32) {
    %c0_i32 = arith.constant 0 : i32
    %c0_i32_0 = arith.constant 0 : i32
    %c0_i32_1 = arith.constant 0 : i32
    %c0_i32_2 = arith.constant 0 : i32
    return %arg0, %c0_i32, %c0_i32_0, %c0_i32_1 : i32, i32, i32, i32
  }
  func.func @transform_4(%arg0: i32) -> (i32, i32, i32, i32) {
    %c0_i32 = arith.constant 0 : i32
    %c0_i32_0 = arith.constant 0 : i32
    %c0_i32_1 = arith.constant 0 : i32
    %c0_i32_2 = arith.constant 0 : i32
    return %arg0, %c0_i32, %c0_i32_0, %c0_i32_1 : i32, i32, i32, i32
  }
  func.func @transform_5(%arg0: i32) -> (i32, i32, i32, i32) {
    %c0_i32 = arith.constant 0 : i32
    %c0_i32_0 = arith.constant 0 : i32
    %c0_i32_1 = arith.constant 0 : i32
    %c0_i32_2 = arith.constant 0 : i32
    return %arg0, %c0_i32, %c0_i32_0, %c0_i32_1 : i32, i32, i32, i32
  }
  func.func @transform_6(%arg0: i32) -> (i32, i32, i32, i32) {
    %c0_i32 = arith.constant 0 : i32
    %c0_i32_0 = arith.constant 0 : i32
    %c0_i32_1 = arith.constant 0 : i32
    %c0_i32_2 = arith.constant 0 : i32
    return %arg0, %c0_i32, %c0_i32_0, %c0_i32_1 : i32, i32, i32, i32
  }
  func.func @transform_7(%arg0: i32) -> (i32, i32, i32, i32) {
    %c0_i32 = arith.constant 0 : i32
    %c0_i32_0 = arith.constant 0 : i32
    %c0_i32_1 = arith.constant 0 : i32
    %c0_i32_2 = arith.constant 0 : i32
    return %arg0, %c0_i32, %c0_i32_0, %c0_i32_1 : i32, i32, i32, i32
  }
  func.func @transform_8(%arg0: i32) -> (i32, i32, i32, i32) {
    %c0_i32 = arith.constant 0 : i32
    %c0_i32_0 = arith.constant 0 : i32
    %c0_i32_1 = arith.constant 0 : i32
    %c0_i32_2 = arith.constant 0 : i32
    return %arg0, %c0_i32, %c0_i32_0, %c0_i32_1 : i32, i32, i32, i32
  }
  func.func @transform_9(%arg0: i32) -> (i32, i32, i32, i32) {
    %c0_i32 = arith.constant 0 : i32
    %c0_i32_0 = arith.constant 0 : i32
    %c0_i32_1 = arith.constant 0 : i32
    %c0_i32_2 = arith.constant 0 : i32
    return %arg0, %c0_i32, %c0_i32_0, %c0_i32_1 : i32, i32, i32, i32
  }
  func.func @transform_10(%arg0: i32) -> (i32, i32, i32) {
    %c0_i32 = arith.constant 0 : i32
    %c0_i32_0 = arith.constant 0 : i32
    %c0_i32_1 = arith.constant 0 : i32
    return %arg0, %c0_i32, %c0_i32_0 : i32, i32, i32
  }
  func.func @transform_11(%arg0: i32) -> (i32, i32, i32) {
    %c0_i32 = arith.constant 0 : i32
    %c0_i32_0 = arith.constant 0 : i32
    %c0_i32_1 = arith.constant 0 : i32
    return %arg0, %c0_i32, %c0_i32_0 : i32, i32, i32
  }
  func.func @transform_12(%arg0: i32) -> (i32, i32, i32) {
    %c0_i32 = arith.constant 0 : i32
    %c0_i32_0 = arith.constant 0 : i32
    %c0_i32_1 = arith.constant 0 : i32
    return %arg0, %c0_i32, %c0_i32_0 : i32, i32, i32
  }
  func.func @transform_13(%arg0: i32) -> (i32, i32, i32) {
    %c0_i32 = arith.constant 0 : i32
    %c0_i32_0 = arith.constant 0 : i32
    %c0_i32_1 = arith.constant 0 : i32
    return %arg0, %c0_i32, %c0_i32_0 : i32, i32, i32
  }
  func.func @transform_14(%arg0: i32) -> (i32, i32, i32) {
    %c0_i32 = arith.constant 0 : i32
    %c0_i32_0 = arith.constant 0 : i32
    %c0_i32_1 = arith.constant 0 : i32
    return %arg0, %c0_i32, %c0_i32_0 : i32, i32, i32
  }
  func.func @transform_15(%arg0: i32) -> (i32, i32, i32) {
    %c0_i32 = arith.constant 0 : i32
    %c0_i32_0 = arith.constant 0 : i32
    %c0_i32_1 = arith.constant 0 : i32
    return %arg0, %c0_i32, %c0_i32_0 : i32, i32, i32
  }
  func.func @transform_16(%arg0: i32) -> (i32, i32, i32) {
    %c0_i32 = arith.constant 0 : i32
    %c0_i32_0 = arith.constant 0 : i32
    %c0_i32_1 = arith.constant 0 : i32
    return %arg0, %c0_i32, %c0_i32_0 : i32, i32, i32
  }
  func.func @transform_17(%arg0: i32) -> (i32, i32) {
    %c0_i32 = arith.constant 0 : i32
    %c0_i32_0 = arith.constant 0 : i32
    %c0_i32_1 = arith.constant 0 : i32
    return %c0_i32, %c0_i32_0 : i32, i32
  }
  func.func @transform_18(%arg0: i32) -> (i32, i32) {
    %c0_i32 = arith.constant 0 : i32
    %c0_i32_0 = arith.constant 0 : i32
    %c0_i32_1 = arith.constant 0 : i32
    return %c0_i32, %c0_i32_0 : i32, i32
  }
  func.func @transform_19(%arg0: i32) -> (i32, i32) {
    %c0_i32 = arith.constant 0 : i32
    %c0_i32_0 = arith.constant 0 : i32
    %c0_i32_1 = arith.constant 0 : i32
    return %c0_i32, %c0_i32_0 : i32, i32
  }
  func.func @transform_20(%arg0: i32) -> (i32, i32) {
    %c0_i32 = arith.constant 0 : i32
    %c0_i32_0 = arith.constant 0 : i32
    %c0_i32_1 = arith.constant 0 : i32
    return %c0_i32, %c0_i32_0 : i32, i32
  }
  func.func @transform_21(%arg0: i32) -> (i32, i32) {
    %c0_i32 = arith.constant 0 : i32
    %c0_i32_0 = arith.constant 0 : i32
    %c0_i32_1 = arith.constant 0 : i32
    return %c0_i32, %c0_i32_0 : i32, i32
  }
  func.func @transform_22(%arg0: i32) -> (i32, i32) {
    %c0_i32 = arith.constant 0 : i32
    %c0_i32_0 = arith.constant 0 : i32
    %c0_i32_1 = arith.constant 0 : i32
    return %c0_i32, %c0_i32_0 : i32, i32
  }
}

</mosaic_0001>

<llo_original>
// kernel: _lambda_.3
$region0: #{_lambda_.3}
  #allocation0 [shape = 'u32[]', space=smem, size = 0x4, offset = 0x4, fixed_abs, tag = 'smem constant byte address 0x4 - core index']
  #allocation1 [shape = 'u32[144,128]{1,0:T(1,128)}', space=vmem, size = 0x12000, scoped, tag = 'internal scratch']
  %s0 = inlined_call_operand.vmem [shape: f32[2,32], index: 0, kind: input, shape index: {}]
  %s1 = inlined_call_operand.vmem [shape: f32[32,32], index: 1, kind: input, shape index: {}]
  %s2 = inlined_call_operand.vmem [shape: f32[1,32], index: 2, kind: input, shape index: {}]
  %s3 = inlined_call_operand.hbm [shape: f32[2,32], index: 3, kind: output, shape index: {}]
  %s4 = sld [smem:[#allocation0]]
  $region22: #{_lambda_.3} parent=0
    _
  %s6 = ssub.s32 1, %s4
  %s7 = scalar_select 0, %s6, %s4
  $region1: #{_lambda_.3} parent=0
    #allocation2 [shape = 'u8[1024]{0}', space=vmem, size = 0x400, scoped, tag = 'output window, operand 0, single buffered']
    #allocation3 [shape = 's32[1]{0}', space=sflag, size = 0x4, scoped, tag = 'scoped memory for _lambda_.3']
    %8 = vsyncpa [#allocation3], 0
    // Predicated region
    $region2: #{_lambda_.3} parent=1 // pred_check
      _
    $region3: #{_lambda_.3} parent=1 // pred_check_branch
      %10 = sbr.rel (0) target = $region5
    $region4: #{_lambda_.3} parent=1 // pred_region
      _
    $region5: #{_lambda_.3} parent=1 // pred_fallthru
      _
    // Predicated region
    $region6: #{_lambda_.3} parent=1 // pred_check
      _
    $region7: #{_lambda_.3} parent=1 // pred_check_branch
      %12 = sbr.rel (0) target = $region9
    $region8: #{_lambda_.3} parent=1 // pred_region
      _
    $region9: #{_lambda_.3} parent=1 // pred_fallthru
      _
    // Predicated region
    $region10: #{_lambda_.3} parent=1 // pred_check
      _
    $region11: #{_lambda_.3} parent=1 // pred_check_branch
      %14 = sbr.rel (0) target = $region13
    $region12: #{_lambda_.3} parent=1 // pred_region
      _
    $region13: #{_lambda_.3} parent=1 // pred_fallthru
      _
    %v15 = vld [vmem:[%s0] sm:$0x3]
    %v16 = vld [vmem:[%s1] sm:$0xff]
    %v17 = vld [vmem:[%s1 + $0x8] sm:$0xff]
    %v18 = vld [vmem:[%s1 + $0x10] sm:$0xff]
    %v19 = vld [vmem:[%s1 + $0x18] sm:$0xff]
    %v20 = vld [vmem:[%s2] sm:$0x1]
    %v22 = vlaneseq
    %v23 = vshrl.u32 %v22, 7
    %v24 = vsub.s32 0, %v23
    %v25 = vrot.slane %v20, %v24
    %vm27 = vcmask 261120
    %v29 = vsel %vm27, %v15, 0
    %31 = vmatprep.subr.mxu0 0.0
    %32 = vmatpush1.msra.mxu0 %v16
    %33 = vmatprep.subr.mxu0 0.0
    %34 = vmatpush1.msra.mxu0 %v17
    %35 = vmatprep.subr.mxu0 0.0
    %36 = vmatpush1.msra.mxu0 %v18
    %37 = vmatprep.subr.mxu0 0.0
    %38 = vmatpush1.msra.mxu0 %v19
    %39 = vmatprep.subr.mxu0 0.0
    %40 = vmatpush1.msra.mxu0 0.0
    %41 = vmatprep.subr.mxu0 0.0
    %42 = vmatpush1.msra.mxu0 0.0
    %43 = vmatprep.subr.mxu0 0.0
    %44 = vmatpush1.msra.mxu0 0.0
    %45 = vmatprep.subr.mxu0 0.0
    %46 = vmatpush1.msra.mxu0 0.0
    %47 = vmatprep.subr.mxu0 0.0
    %48 = vmatpush1.msra.mxu0 0.0
    %49 = vmatprep.subr.mxu0 0.0
    %50 = vmatpush1.msra.mxu0 0.0
    %51 = vmatprep.subr.mxu0 0.0
    %52 = vmatpush1.msra.mxu0 0.0
    %53 = vmatprep.subr.mxu0 0.0
    %54 = vmatpush1.msra.mxu0 0.0
    %55 = vmatprep.subr.mxu0 0.0
    %56 = vmatpush1.msra.mxu0 0.0
    %57 = vmatprep.subr.mxu0 0.0
    %58 = vmatpush1.msra.mxu0 0.0
    %59 = vmatprep.subr.mxu0 0.0
    %60 = vmatpush1.msra.mxu0 0.0
    %61 = vmatprep.subr.mxu0 0.0
    %62 = vmatpush1.msra.mxu0 0.0
    %63 = vmatprep.subr.mxu0 0.0
    %64 = vmatpush1.msra.mxu0 0.0
    %65 = vmatprep.subr.mxu0 0.0
    %66 = vmatpush1.msra.mxu0 0.0
    %67 = vmatprep.subr.mxu0 0.0
    %68 = vmatpush1.msra.mxu0 0.0
    %69 = vmatprep.subr.mxu0 0.0
    %70 = vmatpush1.msra.mxu0 0.0
    %71 = vmatprep.subr.mxu0 0.0
    %72 = vmatpush1.msra.mxu0 0.0
    %73 = vmatprep.subr.mxu0 0.0
    %74 = vmatpush1.msra.mxu0 0.0
    %75 = vmatprep.subr.mxu0 0.0
    %76 = vmatpush1.msra.mxu0 0.0
    %77 = vmatprep.subr.mxu0 0.0
    %78 = vmatpush1.msra.mxu0 0.0
    %79 = vmatprep.subr.mxu0 0.0
    %80 = vmatpush1.msra.mxu0 0.0
    %81 = vmatprep.subr.mxu0 0.0
    %82 = vmatpush1.msra.mxu0 0.0
    %83 = vmatprep.subr.mxu0 0.0
    %84 = vmatpush1.msra.mxu0 0.0
    %85 = vmatprep.subr.mxu0 0.0
    %86 = vmatpush1.msra.mxu0 0.0
    %87 = vmatprep.subr.mxu0 0.0
    %88 = vmatpush1.msra.mxu0 0.0
    %89 = vmatprep.subr.mxu0 0.0
    %90 = vmatpush1.msra.mxu0 0.0
    %91 = vmatprep.subr.mxu0 0.0
    %92 = vmatpush1.msra.mxu0 0.0
    %93 = vmatprep.subr.mxu0 0.0
    %94 = vmatpush1.msra.mxu0 0.0
    %95 = vmatprep.mubr.f32.mxu0 0.0
    %96 = vmatmul.mubr.f32.gmra.mrb[0].mxu0 %v29
    %v97 = vpop.f32.mrb[0].mxu0
    %v98 = vadd.f32 %v25, %v97
    %v99 = vpop.f32.mrb[0].mxu0
    %100 = vdwg.mxu0
    %vm101 = vcmask 254976
    %102 = vst.msk [vmem:[#allocation2] sm:$0x3] %vm101, %v98
    // Predicated region
    $region14: #{_lambda_.3} parent=1 // pred_check
      _
    $region15: #{_lambda_.3} parent=1 // pred_check_branch
      %104 = sbr.rel (0) target = $region17
    $region16: #{_lambda_.3} parent=1 // pred_region
      %s106 = ssub.s32 32, 32
      %107 = vsyncadd [#allocation3], %s106
      %s109 = sshll.u32 [#allocation2], 4
      %s110 = int_to_ptr.vmem [resolvable:$true] %s109
      %112 = dma.vmem_to_hbm [thread:$0]  %s110, 32, %s3, [#allocation3]
    $region17: #{_lambda_.3} parent=1 // pred_fallthru
      _
    // Predicated region
    $region18: #{_lambda_.3} parent=1 // pred_check
      _
    $region19: #{_lambda_.3} parent=1 // pred_check_branch
      %114 = sbr.rel (0) target = $region21
    $region20: #{_lambda_.3} parent=1 // pred_region
      %115 = dma.done [#allocation3], 32
    $region21: #{_lambda_.3} parent=1 // pred_fallthru
      _
    %116 = vsyncpa [#allocation3], 1

// kernel: _lambda_.2
$region0: #{_lambda_.2}
  #allocation0 [shape = 'u32[]', space=smem, size = 0x4, offset = 0x4, fixed_abs, tag = 'smem constant byte address 0x4 - core index']
  #allocation1 [shape = 'u32[144,128]{1,0:T(1,128)}', space=vmem, size = 0x12000, scoped, tag = 'internal scratch']
  #allocation2 [shape = 'f32[16,32]{1,0:T(8,128)}', space=vmem, size = 0x2000, scoped, tag = 'scratch operand']
  %s0 = inlined_call_operand.vmem [shape: f32[16,32], index: 0, kind: input, shape index: {}]
  %s1 = inlined_call_operand.vmem [shape: f32[2,1,32], index: 1, kind: input, shape index: {}, may-alias: {1,11}]
  %s2 = inlined_call_operand.vmem [shape: f32[2,1,32], index: 2, kind: input, shape index: {}, may-alias: {2,10,12,16}]
  %s3 = inlined_call_operand.hbm [shape: f32[2,4,32,8], index: 3, kind: input, shape index: {}]
  %s4 = inlined_call_operand.vmem [shape: f32[2,4,1,8], index: 4, kind: input, shape index: {}, may-alias: {4,6,8}]
  %s5 = inlined_call_operand.hbm [shape: f32[2,4,32,8], index: 5, kind: input, shape index: {}]
  %s6 = inlined_call_operand.vmem [shape: f32[2,4,1,8], index: 6, kind: input, shape index: {}, may-alias: {4,6,8}]
  %s7 = inlined_call_operand.hbm [shape: f32[2,4,32,8], index: 7, kind: input, shape index: {}]
  %s8 = inlined_call_operand.vmem [shape: f32[2,4,1,8], index: 8, kind: input, shape index: {}, may-alias: {4,6,8}]
  %s9 = inlined_call_operand.hbm [shape: f32[2,4,8,32], index: 9, kind: input, shape index: {}]
  %s10 = inlined_call_operand.vmem [shape: f32[2,1,32], index: 10, kind: input, shape index: {}, may-alias: {2,10,12,16}]
  %s11 = inlined_call_operand.vmem [shape: f32[2,1,32], index: 11, kind: input, shape index: {}, may-alias: {1,11}]
  %s12 = inlined_call_operand.vmem [shape: f32[2,1,32], index: 12, kind: input, shape index: {}, may-alias: {2,10,12,16}]
  %s13 = inlined_call_operand.hbm [shape: f32[2,32,128], index: 13, kind: input, shape index: {}]
  %s14 = inlined_call_operand.vmem [shape: f32[2,1,128], index: 14, kind: input, shape index: {}]
  %s15 = inlined_call_operand.vmem [shape: f32[2,128,32], index: 15, kind: input, shape index: {}]
  %s16 = inlined_call_operand.vmem [shape: f32[2,1,32], index: 16, kind: input, shape index: {}, may-alias: {2,10,12,16}]
  %s17 = inlined_call_operand.vmem [shape: f32[8,8], index: 17, kind: input, shape index: {}]
  %s18 = inlined_call_operand.vmem [shape: f32[1,32], index: 18, kind: input, shape index: {}]
  %s19 = inlined_call_operand.vmem [shape: f32[1,32], index: 19, kind: input, shape index: {}]
  %s20 = inlined_call_operand.vmem [shape: f32[2,16], index: 20, kind: input, shape index: {}]
  %s21 = inlined_call_operand.hbm [shape: f32[32,32], index: 21, kind: input, shape index: {}]
  %s22 = inlined_call_operand.vmem [shape: f32[2,32], index: 22, kind: output, shape index: {}]
  %s23 = sld [smem:[#allocation0]]
  $region153: #{_lambda_.2} parent=0
    _
  %s25 = ssub.s32 1, %s23
  %s26 = scalar_select 0, %s25, %s23
  $region1: #{_lambda_.2} parent=0
    #allocation3 [shape = 'u8[131072]{0}', space=vmem, size = 0x20000, scoped, tag = 'input window, operand 3']
    #allocation4 [shape = 's32[2]{0}', space=sflag, size = 0x8, scoped, tag = 'scoped memory for _lambda_.2']
    #allocation5 [shape = 'u8[131072]{0}', space=vmem, size = 0x20000, scoped, tag = 'input window, operand 5']
    #allocation6 [shape = 's32[2]{0}', space=sflag, size = 0x8, scoped, tag = 'scoped memory for _lambda_.2']
    #allocation7 [shape = 'u8[131072]{0}', space=vmem, size = 0x20000, scoped, tag = 'input window, operand 7']
    #allocation8 [shape = 'u8[32768]{0}', space=vmem, size = 0x8000, scoped, tag = 'input window, operand 9']
    #allocation9 [shape = 's32[2]{0}', space=sflag, size = 0x8, scoped, tag = 'scoped memory for _lambda_.2']
    #allocation10 [shape = 'u8[32768]{0}', space=vmem, size = 0x8000, scoped, tag = 'input window, operand 13']
    #allocation11 [shape = 'u8[16384]{0}', space=vmem, size = 0x4000, scoped, tag = 'input window, operand 21, single buffered']
    #allocation12 [shape = 's32[1]{0}', space=sflag, size = 0x4, scoped, tag = 'scoped memory for _lambda_.2']
    %27 = vsyncpa [#allocation4], 0
    %s28 = scalar_lea.sflag [#allocation4], 1
    %29 = vsyncpa %s28, 0
    %30 = vsyncpa [#allocation6], 0
    %s31 = scalar_lea.sflag [#allocation6], 1
    %32 = vsyncpa %s31, 0
    %33 = vsyncpa [#allocation9], 0
    %s34 = scalar_lea.sflag [#allocation9], 1
    %35 = vsyncpa %s34, 0
    %36 = vsyncpa [#allocation12], 0
    loop: start=0, step=1, limit=4
    $region2: #{_lambda_.2} parent=1 // loop_pre_header
      _
    $region3: #{_lambda_.2} parent=1 // loop_header
      %s38 = sphi 0, %s42
      %p39 = scmp.ge.s32.totalorder %s38, 4
      %s46 = sphi 0, %s46
      %s48 = sphi 0, %s46
      %s49 = sphi 0, %s48
      %s63 = sphi 0, %s49
      %s69 = sphi 0, %s71
      %s72 = sphi 0, %s69
      %s73 = sphi 0, %s72
      %s89 = sphi 0, %s73
      %s95 = sphi 0, %s97
      %s98 = sphi 0, %s95
      %s99 = sphi 0, %s98
      %s115 = sphi 0, %s99
      %s121 = sphi 0, %s123
      %s124 = sphi 0, %s121
      %s125 = sphi 0, %s124
      %s141 = sphi 0, %s125
      %s147 = sphi 0, %s149
      %s150 = sphi 0, %s147
      %s151 = sphi 0, %s150
      %s167 = sphi 0, %s151
      %s173 = sphi 0, %s175
      %s176 = sphi 0, %s173
      %s177 = sphi 0, %s176
      %s193 = sphi 0, %s177
      %s199 = sphi 0, %s201
      %s202 = sphi 0, %s199
      %s203 = sphi 0, %s202
      %s219 = sphi 0, %s203
      %s225 = sphi 0, %s227
      %s228 = sphi 0, %s225
      %s229 = sphi 0, %s228
      %s245 = sphi 0, %s229
      %s251 = sphi 0, %s253
      %s254 = sphi 0, %s251
      %s255 = sphi 0, %s254
      %s271 = sphi 0, %s255
      %s277 = sphi 0, %s279
      %s280 = sphi 0, %s277
      %s281 = sphi 0, %s280
      %s297 = sphi 0, %s281
      %s303 = sphi 0, %s305
      %s306 = sphi 0, %s303
      %s307 = sphi 0, %s306
      %s323 = sphi 0, %s307
      %s329 = sphi 0, %s331
      %s332 = sphi 0, %s329
      %s333 = sphi 0, %s332
      %s349 = sphi 0, %s333
      %s355 = sphi 0, %s357
      %s358 = sphi 0, %s355
      %s359 = sphi 0, %s358
      %s375 = sphi 0, %s359
      %s381 = sphi 0, %s383
      %s384 = sphi 0, %s381
      %s385 = sphi 0, %s384
      %s401 = sphi 0, %s385
      %s407 = sphi 0, %s409
      %s410 = sphi 0, %s407
      %s411 = sphi 0, %s410
      %s427 = sphi 0, %s411
      %s433 = sphi 0, %s435
      %s436 = sphi 0, %s433
      %s437 = sphi 0, %s436
      %s453 = sphi 0, %s437
      %s459 = sphi 0, %s461
      %s462 = sphi 0, %s459
      %s463 = sphi 0, %s462
      %s479 = sphi 0, %s463
      %s483 = sphi 0, %s483
      %s485 = sphi 0, %s483
      %s486 = sphi 0, %s485
      %s500 = sphi 0, %s486
      %s504 = sphi 0, %s504
      %s506 = sphi 0, %s504
      %s507 = sphi 0, %s506
      %s521 = sphi 0, %s507
      %s525 = sphi 0, %s525
      %s527 = sphi 0, %s525
      %s528 = sphi 0, %s527
      %s542 = sphi 0, %s528
      %s546 = sphi 0, %s546
      %s548 = sphi 0, %s546
      %s549 = sphi 0, %s548
      %s563 = sphi 0, %s549
      %s567 = sphi 0, %s567
      %s569 = sphi 0, %s567
      %s570 = sphi 0, %s569
      %s584 = sphi 0, %s570
      %s588 = sphi 0, %s588
      %s590 = sphi 0, %s588
      %s591 = sphi 0, %s590
      %s605 = sphi 0, %s591
    $region4: #{_lambda_.2} parent=1 // loop_header_branch
      %41 = sbr.rel (%p39) target = $region8
    $region5: #{_lambda_.2} parent=1 // loop_body
      %s43 = ssub.s32 %s38, 1
      %s44 = ssub.s32 %s38, 2
      %s45 = sadd.s32 %s38, 1
      %s47 = sadd.s32 %s46, 1
      %p50 = scmp.eq.s32.totalorder %s38, 1
      %p51 = scmp.ne.s32.totalorder %s46, %s48
      %p52 = scmp.eq.s32.totalorder %s38, 0
      %p53 = por %p51, %p52
      %p54 = scmp.ne.s32.totalorder %s46, %s48
      %p55 = scmp.eq.s32.totalorder %s43, 1
      %p56 = por %p54, %p55
      %p57 = scmp.ne.s32.totalorder %s48, %s49
      %p58 = scmp.eq.s32.totalorder %s43, 0
      %p59 = por %p57, %p58
      %p60 = scmp.ne.s32.totalorder %s48, %s49
      %p61 = scmp.eq.s32.totalorder %s44, 1
      %p62 = por %p60, %p61
      %p64 = scmp.ne.s32.totalorder %s49, %s63
      %p65 = scmp.eq.s32.totalorder %s44, 0
      %p66 = por %p64, %p65
      %s67 = ssub.s32 %s38, %s45
      %p68 = scmp.eq.s32.totalorder %s67, 0
      %s70 = sadd.s32 %s69, 1
      %s71 = scalar_select %p68, %s69, %s70
      %p74 = pneg %p68
      %p75 = scmp.eq.s32.totalorder %s38, 1
      %p76 = por %p74, %p75
      %p77 = scmp.ne.s32.totalorder %s69, %s72
      %p78 = scmp.eq.s32.totalorder %s38, 0
      %p79 = por %p77, %p78
      %p80 = scmp.ne.s32.totalorder %s69, %s72
      %p81 = scmp.eq.s32.totalorder %s43, 1
      %p82 = por %p80, %p81
      %p83 = scmp.ne.s32.totalorder %s72, %s73
      %p84 = scmp.eq.s32.totalorder %s43, 0
      %p85 = por %p83, %p84
      %p86 = scmp.ne.s32.totalorder %s72, %s73
      %p87 = scmp.eq.s32.totalorder %s44, 1
      %p88 = por %p86, %p87
      %p90 = scmp.ne.s32.totalorder %s73, %s89
      %p91 = scmp.eq.s32.totalorder %s44, 0
      %p92 = por %p90, %p91
      %s93 = ssub.s32 %s38, %s45
      %p94 = scmp.eq.s32.totalorder %s93, 0
      %s96 = sadd.s32 %s95, 1
      %s97 = scalar_select %p94, %s95, %s96
      %p100 = pneg %p94
      %p101 = scmp.eq.s32.totalorder %s38, 1
      %p102 = por %p100, %p101
      %p103 = scmp.ne.s32.totalorder %s95, %s98
      %p104 = scmp.eq.s32.totalorder %s38, 0
      %p105 = por %p103, %p104
      %p106 = scmp.ne.s32.totalorder %s95, %s98
      %p107 = scmp.eq.s32.totalorder %s43, 1
      %p108 = por %p106, %p107
      %p109 = scmp.ne.s32.totalorder %s98, %s99
      %p110 = scmp.eq.s32.totalorder %s43, 0
      %p111 = por %p109, %p110
      %p112 = scmp.ne.s32.totalorder %s98, %s99
      %p113 = scmp.eq.s32.totalorder %s44, 1
      %p114 = por %p112, %p113
      %p116 = scmp.ne.s32.totalorder %s99, %s115
      %p117 = scmp.eq.s32.totalorder %s44, 0
      %p118 = por %p116, %p117
      %s119 = ssub.s32 %s38, %s45
      %p120 = scmp.eq.s32.totalorder %s119, 0
      %s122 = sadd.s32 %s121, 1
      %s123 = scalar_select %p120, %s121, %s122
      %p126 = pneg %p120
      %p127 = scmp.eq.s32.totalorder %s38, 1
      %p128 = por %p126, %p127
      %p129 = scmp.ne.s32.totalorder %s121, %s124
      %p130 = scmp.eq.s32.totalorder %s38, 0
      %p131 = por %p129, %p130
      %p132 = scmp.ne.s32.totalorder %s121, %s124
      %p133 = scmp.eq.s32.totalorder %s43, 1
      %p134 = por %p132, %p133
      %p135 = scmp.ne.s32.totalorder %s124, %s125
      %p136 = scmp.eq.s32.totalorder %s43, 0
      %p137 = por %p135, %p136
      %p138 = scmp.ne.s32.totalorder %s124, %s125
      %p139 = scmp.eq.s32.totalorder %s44, 1
      %p140 = por %p138, %p139
      %p142 = scmp.ne.s32.totalorder %s125, %s141
      %p143 = scmp.eq.s32.totalorder %s44, 0
      %p144 = por %p142, %p143
      %s145 = ssub.s32 %s38, %s45
      %p146 = scmp.eq.s32.totalorder %s145, 0
      %s148 = sadd.s32 %s147, 1
      %s149 = scalar_select %p146, %s147, %s148
      %p152 = pneg %p146
      %p153 = scmp.eq.s32.totalorder %s38, 1
      %p154 = por %p152, %p153
      %p155 = scmp.ne.s32.totalorder %s147, %s150
      %p156 = scmp.eq.s32.totalorder %s38, 0
      %p157 = por %p155, %p156
      %p158 = scmp.ne.s32.totalorder %s147, %s150
      %p159 = scmp.eq.s32.totalorder %s43, 1
      %p160 = por %p158, %p159
      %p161 = scmp.ne.s32.totalorder %s150, %s151
      %p162 = scmp.eq.s32.totalorder %s43, 0
      %p163 = por %p161, %p162
      %p164 = scmp.ne.s32.totalorder %s150, %s151
      %p165 = scmp.eq.s32.totalorder %s44, 1
      %p166 = por %p164, %p165
      %p168 = scmp.ne.s32.totalorder %s151, %s167
      %p169 = scmp.eq.s32.totalorder %s44, 0
      %p170 = por %p168, %p169
      %s171 = ssub.s32 %s38, %s45
      %p172 = scmp.eq.s32.totalorder %s171, 0
      %s174 = sadd.s32 %s173, 1
      %s175 = scalar_select %p172, %s173, %s174
      %p178 = pneg %p172
      %p179 = scmp.eq.s32.totalorder %s38, 1
      %p180 = por %p178, %p179
      %p181 = scmp.ne.s32.totalorder %s173, %s176
      %p182 = scmp.eq.s32.totalorder %s38, 0
      %p183 = por %p181, %p182
      %p184 = scmp.ne.s32.totalorder %s173, %s176
      %p185 = scmp.eq.s32.totalorder %s43, 1
      %p186 = por %p184, %p185
      %p187 = scmp.ne.s32.totalorder %s176, %s177
      %p188 = scmp.eq.s32.totalorder %s43, 0
      %p189 = por %p187, %p188
      %p190 = scmp.ne.s32.totalorder %s176, %s177
      %p191 = scmp.eq.s32.totalorder %s44, 1
      %p192 = por %p190, %p191
      %p194 = scmp.ne.s32.totalorder %s177, %s193
      %p195 = scmp.eq.s32.totalorder %s44, 0
      %p196 = por %p194, %p195
      %s197 = ssub.s32 %s38, %s45
      %p198 = scmp.eq.s32.totalorder %s197, 0
      %s200 = sadd.s32 %s199, 1
      %s201 = scalar_select %p198, %s199, %s200
      %p204 = pneg %p198
      %p205 = scmp.eq.s32.totalorder %s38, 1
      %p206 = por %p204, %p205
      %p207 = scmp.ne.s32.totalorder %s199, %s202
      %p208 = scmp.eq.s32.totalorder %s38, 0
      %p209 = por %p207, %p208
      %p210 = scmp.ne.s32.totalorder %s199, %s202
      %p211 = scmp.eq.s32.totalorder %s43, 1
      %p212 = por %p210, %p211
      %p213 = scmp.ne.s32.totalorder %s202, %s203
      %p214 = scmp.eq.s32.totalorder %s43, 0
      %p215 = por %p213, %p214
      %p216 = scmp.ne.s32.totalorder %s202, %s203
      %p217 = scmp.eq.s32.totalorder %s44, 1
      %p218 = por %p216, %p217
      %p220 = scmp.ne.s32.totalorder %s203, %s219
      %p221 = scmp.eq.s32.totalorder %s44, 0
      %p222 = por %p220, %p221
      %s223 = ssub.s32 %s38, %s45
      %p224 = scmp.eq.s32.totalorder %s223, 0
      %s226 = sadd.s32 %s225, 1
      %s227 = scalar_select %p224, %s225, %s226
      %p230 = pneg %p224
      %p231 = scmp.eq.s32.totalorder %s38, 1
      %p232 = por %p230, %p231
      %p233 = scmp.ne.s32.totalorder %s225, %s228
      %p234 = scmp.eq.s32.totalorder %s38, 0
      %p235 = por %p233, %p234
      %p236 = scmp.ne.s32.totalorder %s225, %s228
      %p237 = scmp.eq.s32.totalorder %s43, 1
      %p238 = por %p236, %p237
      %p239 = scmp.ne.s32.totalorder %s228, %s229
      %p240 = scmp.eq.s32.totalorder %s43, 0
      %p241 = por %p239, %p240
      %p242 = scmp.ne.s32.totalorder %s228, %s229
      %p243 = scmp.eq.s32.totalorder %s44, 1
      %p244 = por %p242, %p243
      %p246 = scmp.ne.s32.totalorder %s229, %s245
      %p247 = scmp.eq.s32.totalorder %s44, 0
      %p248 = por %p246, %p247
      %s249 = ssub.s32 %s38, %s45
      %p250 = scmp.eq.s32.totalorder %s249, 0
      %s252 = sadd.s32 %s251, 1
      %s253 = scalar_select %p250, %s251, %s252
      %p256 = pneg %p250
      %p257 = scmp.eq.s32.totalorder %s38, 1
      %p258 = por %p256, %p257
      %p259 = scmp.ne.s32.totalorder %s251, %s254
      %p260 = scmp.eq.s32.totalorder %s38, 0
      %p261 = por %p259, %p260
      %p262 = scmp.ne.s32.totalorder %s251, %s254
      %p263 = scmp.eq.s32.totalorder %s43, 1
      %p264 = por %p262, %p263
      %p265 = scmp.ne.s32.totalorder %s254, %s255
      %p266 = scmp.eq.s32.totalorder %s43, 0
      %p267 = por %p265, %p266
      %p268 = scmp.ne.s32.totalorder %s254, %s255
      %p269 = scmp.eq.s32.totalorder %s44, 1
      %p270 = por %p268, %p269
      %p272 = scmp.ne.s32.totalorder %s255, %s271
      %p273 = scmp.eq.s32.totalorder %s44, 0
      %p274 = por %p272, %p273
      %s275 = ssub.s32 %s38, %s45
      %p276 = scmp.eq.s32.totalorder %s275, 0
      %s278 = sadd.s32 %s277, 1
      %s279 = scalar_select %p276, %s277, %s278
      %p282 = pneg %p276
      %p283 = scmp.eq.s32.totalorder %s38, 1
      %p284 = por %p282, %p283
      %p285 = scmp.ne.s32.totalorder %s277, %s280
      %p286 = scmp.eq.s32.totalorder %s38, 0
      %p287 = por %p285, %p286
      %p288 = scmp.ne.s32.totalorder %s277, %s280
      %p289 = scmp.eq.s32.totalorder %s43, 1
      %p290 = por %p288, %p289
      %p291 = scmp.ne.s32.totalorder %s280, %s281
      %p292 = scmp.eq.s32.totalorder %s43, 0
      %p293 = por %p291, %p292
      %p294 = scmp.ne.s32.totalorder %s280, %s281
      %p295 = scmp.eq.s32.totalorder %s44, 1
      %p296 = por %p294, %p295
      %p298 = scmp.ne.s32.totalorder %s281, %s297
      %p299 = scmp.eq.s32.totalorder %s44, 0
      %p300 = por %p298, %p299
      %s301 = ssub.s32 %s38, %s45
      %p302 = scmp.eq.s32.totalorder %s301, 0
      %s304 = sadd.s32 %s303, 1
      %s305 = scalar_select %p302, %s303, %s304
      %p308 = pneg %p302
      %p309 = scmp.eq.s32.totalorder %s38, 1
      %p310 = por %p308, %p309
      %p311 = scmp.ne.s32.totalorder %s303, %s306
      %p312 = scmp.eq.s32.totalorder %s38, 0
      %p313 = por %p311, %p312
      %p314 = scmp.ne.s32.totalorder %s303, %s306
      %p315 = scmp.eq.s32.totalorder %s43, 1
      %p316 = por %p314, %p315
      %p317 = scmp.ne.s32.totalorder %s306, %s307
      %p318 = scmp.eq.s32.totalorder %s43, 0
      %p319 = por %p317, %p318
      %p320 = scmp.ne.s32.totalorder %s306, %s307
      %p321 = scmp.eq.s32.totalorder %s44, 1
      %p322 = por %p320, %p321
      %p324 = scmp.ne.s32.totalorder %s307, %s323
      %p325 = scmp.eq.s32.totalorder %s44, 0
      %p326 = por %p324, %p325
      %s327 = ssub.s32 %s38, %s45
      %p328 = scmp.eq.s32.totalorder %s327, 0
      %s330 = sadd.s32 %s329, 1
      %s331 = scalar_select %p328, %s329, %s330
      %p334 = pneg %p328
      %p335 = scmp.eq.s32.totalorder %s38, 1
      %p336 = por %p334, %p335
      %p337 = scmp.ne.s32.totalorder %s329, %s332
      %p338 = scmp.eq.s32.totalorder %s38, 0
      %p339 = por %p337, %p338
      %p340 = scmp.ne.s32.totalorder %s329, %s332
      %p341 = scmp.eq.s32.totalorder %s43, 1
      %p342 = por %p340, %p341
      %p343 = scmp.ne.s32.totalorder %s332, %s333
      %p344 = scmp.eq.s32.totalorder %s43, 0
      %p345 = por %p343, %p344
      %p346 = scmp.ne.s32.totalorder %s332, %s333
      %p347 = scmp.eq.s32.totalorder %s44, 1
      %p348 = por %p346, %p347
      %p350 = scmp.ne.s32.totalorder %s333, %s349
      %p351 = scmp.eq.s32.totalorder %s44, 0
      %p352 = por %p350, %p351
      %s353 = ssub.s32 %s38, %s45
      %p354 = scmp.eq.s32.totalorder %s353, 0
      %s356 = sadd.s32 %s355, 1
      %s357 = scalar_select %p354, %s355, %s356
      %p360 = pneg %p354
      %p361 = scmp.eq.s32.totalorder %s38, 1
      %p362 = por %p360, %p361
      %p363 = scmp.ne.s32.totalorder %s355, %s358
      %p364 = scmp.eq.s32.totalorder %s38, 0
      %p365 = por %p363, %p364
      %p366 = scmp.ne.s32.totalorder %s355, %s358
      %p367 = scmp.eq.s32.totalorder %s43, 1
      %p368 = por %p366, %p367
      %p369 = scmp.ne.s32.totalorder %s358, %s359
      %p370 = scmp.eq.s32.totalorder %s43, 0
      %p371 = por %p369, %p370
      %p372 = scmp.ne.s32.totalorder %s358, %s359
      %p373 = scmp.eq.s32.totalorder %s44, 1
      %p374 = por %p372, %p373
      %p376 = scmp.ne.s32.totalorder %s359, %s375
      %p377 = scmp.eq.s32.totalorder %s44, 0
      %p378 = por %p376, %p377
      %s379 = ssub.s32 %s38, %s45
      %p380 = scmp.eq.s32.totalorder %s379, 0
      %s382 = sadd.s32 %s381, 1
      %s383 = scalar_select %p380, %s381, %s382
      %p386 = pneg %p380
      %p387 = scmp.eq.s32.totalorder %s38, 1
      %p388 = por %p386, %p387
      %p389 = scmp.ne.s32.totalorder %s381, %s384
      %p390 = scmp.eq.s32.totalorder %s38, 0
      %p391 = por %p389, %p390
      %p392 = scmp.ne.s32.totalorder %s381, %s384
      %p393 = scmp.eq.s32.totalorder %s43, 1
      %p394 = por %p392, %p393
      %p395 = scmp.ne.s32.totalorder %s384, %s385
      %p396 = scmp.eq.s32.totalorder %s43, 0
      %p397 = por %p395, %p396
      %p398 = scmp.ne.s32.totalorder %s384, %s385
      %p399 = scmp.eq.s32.totalorder %s44, 1
      %p400 = por %p398, %p399
      %p402 = scmp.ne.s32.totalorder %s385, %s401
      %p403 = scmp.eq.s32.totalorder %s44, 0
      %p404 = por %p402, %p403
      %s405 = ssub.s32 %s38, %s45
      %p406 = scmp.eq.s32.totalorder %s405, 0
      %s408 = sadd.s32 %s407, 1
      %s409 = scalar_select %p406, %s407, %s408
      %p412 = pneg %p406
      %p413 = scmp.eq.s32.totalorder %s38, 1
      %p414 = por %p412, %p413
      %p415 = scmp.ne.s32.totalorder %s407, %s410
      %p416 = scmp.eq.s32.totalorder %s38, 0
      %p417 = por %p415, %p416
      %p418 = scmp.ne.s32.totalorder %s407, %s410
      %p419 = scmp.eq.s32.totalorder %s43, 1
      %p420 = por %p418, %p419
      %p421 = scmp.ne.s32.totalorder %s410, %s411
      %p422 = scmp.eq.s32.totalorder %s43, 0
      %p423 = por %p421, %p422
      %p424 = scmp.ne.s32.totalorder %s410, %s411
      %p425 = scmp.eq.s32.totalorder %s44, 1
      %p426 = por %p424, %p425
      %p428 = scmp.ne.s32.totalorder %s411, %s427
      %p429 = scmp.eq.s32.totalorder %s44, 0
      %p430 = por %p428, %p429
      %s431 = ssub.s32 %s38, %s45
      %p432 = scmp.eq.s32.totalorder %s431, 0
      %s434 = sadd.s32 %s433, 1
      %s435 = scalar_select %p432, %s433, %s434
      %p438 = pneg %p432
      %p439 = scmp.eq.s32.totalorder %s38, 1
      %p440 = por %p438, %p439
      %p441 = scmp.ne.s32.totalorder %s433, %s436
      %p442 = scmp.eq.s32.totalorder %s38, 0
      %p443 = por %p441, %p442
      %p444 = scmp.ne.s32.totalorder %s433, %s436
      %p445 = scmp.eq.s32.totalorder %s43, 1
      %p446 = por %p444, %p445
      %p447 = scmp.ne.s32.totalorder %s436, %s437
      %p448 = scmp.eq.s32.totalorder %s43, 0
      %p449 = por %p447, %p448
      %p450 = scmp.ne.s32.totalorder %s436, %s437
      %p451 = scmp.eq.s32.totalorder %s44, 1
      %p452 = por %p450, %p451
      %p454 = scmp.ne.s32.totalorder %s437, %s453
      %p455 = scmp.eq.s32.totalorder %s44, 0
      %p456 = por %p454, %p455
      %s457 = ssub.s32 %s38, %s45
      %p458 = scmp.eq.s32.totalorder %s457, 0
      %s460 = sadd.s32 %s459, 1
      %s461 = scalar_select %p458, %s459, %s460
      %p464 = pneg %p458
      %p465 = scmp.eq.s32.totalorder %s38, 1
      %p466 = por %p464, %p465
      %p467 = scmp.ne.s32.totalorder %s459, %s462
      %p468 = scmp.eq.s32.totalorder %s38, 0
      %p469 = por %p467, %p468
      %p470 = scmp.ne.s32.totalorder %s459, %s462
      %p471 = scmp.eq.s32.totalorder %s43, 1
      %p472 = por %p470, %p471
      %p473 = scmp.ne.s32.totalorder %s462, %s463
      %p474 = scmp.eq.s32.totalorder %s43, 0
      %p475 = por %p473, %p474
      %p476 = scmp.ne.s32.totalorder %s462, %s463
      %p477 = scmp.eq.s32.totalorder %s44, 1
      %p478 = por %p476, %p477
      %p480 = scmp.ne.s32.totalorder %s463, %s479
      %p481 = scmp.eq.s32.totalorder %s44, 0
      %p482 = por %p480, %p481
      %s484 = sadd.s32 %s483, 1
      %p487 = scmp.eq.s32.totalorder %s38, 1
      %p488 = scmp.ne.s32.totalorder %s483, %s485
      %p489 = scmp.eq.s32.totalorder %s38, 0
      %p490 = por %p488, %p489
      %p491 = scmp.ne.s32.totalorder %s483, %s485
      %p492 = scmp.eq.s32.totalorder %s43, 1
      %p493 = por %p491, %p492
      %p494 = scmp.ne.s32.totalorder %s485, %s486
      %p495 = scmp.eq.s32.totalorder %s43, 0
      %p496 = por %p494, %p495
      %p497 = scmp.ne.s32.totalorder %s485, %s486
      %p498 = scmp.eq.s32.totalorder %s44, 1
      %p499 = por %p497, %p498
      %p501 = scmp.ne.s32.totalorder %s486, %s500
      %p502 = scmp.eq.s32.totalorder %s44, 0
      %p503 = por %p501, %p502
      %s505 = sadd.s32 %s504, 1
      %p508 = scmp.eq.s32.totalorder %s38, 1
      %p509 = scmp.ne.s32.totalorder %s504, %s506
      %p510 = scmp.eq.s32.totalorder %s38, 0
      %p511 = por %p509, %p510
      %p512 = scmp.ne.s32.totalorder %s504, %s506
      %p513 = scmp.eq.s32.totalorder %s43, 1
      %p514 = por %p512, %p513
      %p515 = scmp.ne.s32.totalorder %s506, %s507
      %p516 = scmp.eq.s32.totalorder %s43, 0
      %p517 = por %p515, %p516
      %p518 = scmp.ne.s32.totalorder %s506, %s507
      %p519 = scmp.eq.s32.totalorder %s44, 1
      %p520 = por %p518, %p519
      %p522 = scmp.ne.s32.totalorder %s507, %s521
      %p523 = scmp.eq.s32.totalorder %s44, 0
      %p524 = por %p522, %p523
      %s526 = sadd.s32 %s525, 1
      %p529 = scmp.eq.s32.totalorder %s38, 1
      %p530 = scmp.ne.s32.totalorder %s525, %s527
      %p531 = scmp.eq.s32.totalorder %s38, 0
      %p532 = por %p530, %p531
      %p533 = scmp.ne.s32.totalorder %s525, %s527
      %p534 = scmp.eq.s32.totalorder %s43, 1
      %p535 = por %p533, %p534
      %p536 = scmp.ne.s32.totalorder %s527, %s528
      %p537 = scmp.eq.s32.totalorder %s43, 0
      %p538 = por %p536, %p537
      %p539 = scmp.ne.s32.totalorder %s527, %s528
      %p540 = scmp.eq.s32.totalorder %s44, 1
      %p541 = por %p539, %p540
      %p543 = scmp.ne.s32.totalorder %s528, %s542
      %p544 = scmp.eq.s32.totalorder %s44, 0
      %p545 = por %p543, %p544
      %s547 = sadd.s32 %s546, 1
      %p550 = scmp.eq.s32.totalorder %s38, 1
      %p551 = scmp.ne.s32.totalorder %s546, %s548
      %p552 = scmp.eq.s32.totalorder %s38, 0
      %p553 = por %p551, %p552
      %p554 = scmp.ne.s32.totalorder %s546, %s548
      %p555 = scmp.eq.s32.totalorder %s43, 1
      %p556 = por %p554, %p555
      %p557 = scmp.ne.s32.totalorder %s548, %s549
      %p558 = scmp.eq.s32.totalorder %s43, 0
      %p559 = por %p557, %p558
      %p560 = scmp.ne.s32.totalorder %s548, %s549
      %p561 = scmp.eq.s32.totalorder %s44, 1
      %p562 = por %p560, %p561
      %p564 = scmp.ne.s32.totalorder %s549, %s563
      %p565 = scmp.eq.s32.totalorder %s44, 0
      %p566 = por %p564, %p565
      %s568 = sadd.s32 %s567, 1
      %p571 = scmp.eq.s32.totalorder %s38, 1
      %p572 = scmp.ne.s32.totalorder %s567, %s569
      %p573 = scmp.eq.s32.totalorder %s38, 0
      %p574 = por %p572, %p573
      %p575 = scmp.ne.s32.totalorder %s567, %s569
      %p576 = scmp.eq.s32.totalorder %s43, 1
      %p577 = por %p575, %p576
      %p578 = scmp.ne.s32.totalorder %s569, %s570
      %p579 = scmp.eq.s32.totalorder %s43, 0
      %p580 = por %p578, %p579
      %p581 = scmp.ne.s32.totalorder %s569, %s570
      %p582 = scmp.eq.s32.totalorder %s44, 1
      %p583 = por %p581, %p582
      %p585 = scmp.ne.s32.totalorder %s570, %s584
      %p586 = scmp.eq.s32.totalorder %s44, 0
      %p587 = por %p585, %p586
      %s589 = sadd.s32 %s588, 1
      %p592 = scmp.eq.s32.totalorder %s38, 1
      %p593 = scmp.ne.s32.totalorder %s588, %s590
      %p594 = scmp.eq.s32.totalorder %s38, 0
      %p595 = por %p593, %p594
      %p596 = scmp.ne.s32.totalorder %s588, %s590
      %p597 = scmp.eq.s32.totalorder %s43, 1
      %p598 = por %p596, %p597
      %p599 = scmp.ne.s32.totalorder %s590, %s591
      %p600 = scmp.eq.s32.totalorder %s43, 0
      %p601 = por %p599, %p600
      %p602 = scmp.ne.s32.totalorder %s590, %s591
      %p603 = scmp.eq.s32.totalorder %s44, 1
      %p604 = por %p602, %p603
      %p606 = scmp.ne.s32.totalorder %s591, %s605
      %p607 = scmp.eq.s32.totalorder %s44, 0
      %p608 = por %p606, %p607
      %p609 = scmp.le.s32.totalorder 1, %s38
      %p610 = scmp.lt.s32.totalorder %s38, 3
      %p611 = pnand %p609, %p610
      %p612 = pneg %p611
      // Predicated region
      $region9: #{_lambda_.2} parent=5 // pred_check
        _
      $region10: #{_lambda_.2} parent=5 // pred_check_branch
        %614 = sbr.rel (%p611) target = $region12
      $region11: #{_lambda_.2} parent=5 // pred_region
        %s615 = ssub.s32 %s38, 1
        // Predicated region
        $region13: #{_lambda_.2} parent=11 // pred_check
          %p616 = pneg %p59
        $region14: #{_lambda_.2} parent=11 // pred_check_branch
          %618 = sbr.rel (%p616) target = $region16
        $region15: #{_lambda_.2} parent=11 // pred_region
          _
        $region16: #{_lambda_.2} parent=11 // pred_fallthru
          _
        // Predicated region
        $region17: #{_lambda_.2} parent=11 // pred_check
          %p619 = pneg %p496
        $region18: #{_lambda_.2} parent=11 // pred_check_branch
          %621 = sbr.rel (%p619) target = $region20
        $region19: #{_lambda_.2} parent=11 // pred_region
          _
        $region20: #{_lambda_.2} parent=11 // pred_fallthru
          _
        // Predicated region
        $region21: #{_lambda_.2} parent=11 // pred_check
          %p622 = pneg %p517
        $region22: #{_lambda_.2} parent=11 // pred_check_branch
          %624 = sbr.rel (%p622) target = $region24
        $region23: #{_lambda_.2} parent=11 // pred_region
          _
        $region24: #{_lambda_.2} parent=11 // pred_fallthru
          _
        // Predicated region
        $region25: #{_lambda_.2} parent=11 // pred_check
          %p625 = pneg %p538
        $region26: #{_lambda_.2} parent=11 // pred_check_branch
          %627 = sbr.rel (%p625) target = $region28
        $region27: #{_lambda_.2} parent=11 // pred_region
          _
        $region28: #{_lambda_.2} parent=11 // pred_fallthru
          _
        // Predicated region
        $region29: #{_lambda_.2} parent=11 // pred_check
          %p628 = pneg %p559
        $region30: #{_lambda_.2} parent=11 // pred_check_branch
          %630 = sbr.rel (%p628) target = $region32
        $region31: #{_lambda_.2} parent=11 // pred_region
          _
        $region32: #{_lambda_.2} parent=11 // pred_fallthru
          _
        // Predicated region
        $region33: #{_lambda_.2} parent=11 // pred_check
          %p631 = pneg %p580
        $region34: #{_lambda_.2} parent=11 // pred_check_branch
          %633 = sbr.rel (%p631) target = $region36
        $region35: #{_lambda_.2} parent=11 // pred_region
          %s635 = ssub.s32 512, 512
          %636 = vsyncadd [#allocation12], %s635
          %s637 = sshll.u32 [#allocation11], 4
          %s638 = int_to_ptr.vmem [resolvable:$true] %s637
          %643 = dma.hbm_to_vmem [thread:$0]  %s21, 512, %s638, [#allocation12], 128, 128, 8
        $region36: #{_lambda_.2} parent=11 // pred_fallthru
          _
      $region12: #{_lambda_.2} parent=5 // pred_fallthru
        _
      %p644 = scmp.lt.s32.totalorder %s38, 2
      // Predicated region
      $region37: #{_lambda_.2} parent=5 // pred_check
        %p645 = pneg %p644
      $region38: #{_lambda_.2} parent=5 // pred_check_branch
        %647 = sbr.rel (%p645) target = $region40
      $region39: #{_lambda_.2} parent=5 // pred_region
        // Predicated region
        $region41: #{_lambda_.2} parent=39 // pred_check
          %p648 = pneg %p79
        $region42: #{_lambda_.2} parent=39 // pred_check_branch
          %650 = sbr.rel (%p648) target = $region44
        $region43: #{_lambda_.2} parent=39 // pred_region
          %p651 = scmp.lt.s32.totalorder %s38, 1
          %s652 = scalar_select %p651, %s38, 1
          %s653 = scalar_lea.vmem %s1, %s652
        $region44: #{_lambda_.2} parent=39 // pred_fallthru
          _
        // Predicated region
        $region45: #{_lambda_.2} parent=39 // pred_check
          %p654 = pneg %p105
        $region46: #{_lambda_.2} parent=39 // pred_check_branch
          %656 = sbr.rel (%p654) target = $region48
        $region47: #{_lambda_.2} parent=39 // pred_region
          %p657 = scmp.lt.s32.totalorder %s38, 1
          %s658 = scalar_select %p657, %s38, 1
          %s659 = scalar_lea.vmem %s2, %s658
        $region48: #{_lambda_.2} parent=39 // pred_fallthru
          _
        // Predicated region
        $region49: #{_lambda_.2} parent=39 // pred_check
          %p660 = pneg %p131
        $region50: #{_lambda_.2} parent=39 // pred_check_branch
          %662 = sbr.rel (%p660) target = $region52
        $region51: #{_lambda_.2} parent=39 // pred_region
          %s663 = sand.u32 %s121, 1
          %s664 = scalar_lea.sflag [#allocation4], %s663
          %s665 = sand.u32 %s121, 1
          %s666 = smul.addr %s665, 128
          %s667 = scalar_lea.vmem [#allocation3], %s666
          %s669 = ssub.s32 2048, 2048
          %670 = vsyncadd %s664, %s669
          %s671 = smul.addr %s38, 16
          %s672 = smul.addr %s671, 128
          %s673 = scalar_lea.hbm %s3, %s672
          %s674 = sshll.u32 %s667, 4
          %s675 = int_to_ptr.vmem [resolvable:$true] %s674
          %680 = dma.hbm_to_vmem [thread:$0]  %s673, 2048, %s675, %s664, 128, 128, 8
        $region52: #{_lambda_.2} parent=39 // pred_fallthru
          _
        // Predicated region
        $region53: #{_lambda_.2} parent=39 // pred_check
          %p681 = pneg %p157
        $region54: #{_lambda_.2} parent=39 // pred_check_branch
          %683 = sbr.rel (%p681) target = $region56
        $region55: #{_lambda_.2} parent=39 // pred_region
          %p684 = scmp.lt.s32.totalorder %s38, 1
          %s685 = scalar_select %p684, %s38, 1
          %s686 = smul.addr %s685, 4
          %s687 = scalar_lea.vmem %s4, %s686
        $region56: #{_lambda_.2} parent=39 // pred_fallthru
          _
        // Predicated region
        $region57: #{_lambda_.2} parent=39 // pred_check
          %p688 = pneg %p183
        $region58: #{_lambda_.2} parent=39 // pred_check_branch
          %690 = sbr.rel (%p688) target = $region60
        $region59: #{_lambda_.2} parent=39 // pred_region
          %s691 = sand.u32 %s38, 1
          %s692 = scalar_lea.sflag [#allocation6], %s691
          %s693 = sand.u32 %s173, 1
          %s694 = smul.addr %s693, 128
          %s695 = scalar_lea.vmem [#allocation5], %s694
          %s697 = ssub.s32 2048, 2048
          %698 = vsyncadd %s692, %s697
          %s699 = smul.addr %s38, 16
          %s700 = smul.addr %s699, 128
          %s701 = scalar_lea.hbm %s5, %s700
          %s702 = sshll.u32 %s695, 4
          %s703 = int_to_ptr.vmem [resolvable:$true] %s702
          %708 = dma.hbm_to_vmem [thread:$0]  %s701, 2048, %s703, %s692, 128, 128, 8
        $region60: #{_lambda_.2} parent=39 // pred_fallthru
          _
        // Predicated region
        $region61: #{_lambda_.2} parent=39 // pred_check
          %p709 = pneg %p209
        $region62: #{_lambda_.2} parent=39 // pred_check_branch
          %711 = sbr.rel (%p709) target = $region64
        $region63: #{_lambda_.2} parent=39 // pred_region
          %p712 = scmp.lt.s32.totalorder %s38, 1
          %s713 = scalar_select %p712, %s38, 1
          %s714 = smul.addr %s713, 4
          %s715 = scalar_lea.vmem %s6, %s714
        $region64: #{_lambda_.2} parent=39 // pred_fallthru
          _
        // Predicated region
        $region65: #{_lambda_.2} parent=39 // pred_check
          %p716 = pneg %p235
        $region66: #{_lambda_.2} parent=39 // pred_check_branch
          %718 = sbr.rel (%p716) target = $region68
        $region67: #{_lambda_.2} parent=39 // pred_region
          %s719 = sand.u32 %s38, 1
          %s720 = scalar_lea.sflag [#allocation6], %s719
          %s721 = sand.u32 %s225, 1
          %s722 = smul.addr %s721, 128
          %s723 = scalar_lea.vmem [#allocation7], %s722
          %s725 = ssub.s32 2048, 2048
          %726 = vsyncadd %s720, %s725
          %s727 = smul.addr %s38, 16
          %s728 = smul.addr %s727, 128
          %s729 = scalar_lea.hbm %s7, %s728
          %s730 = sshll.u32 %s723, 4
          %s731 = int_to_ptr.vmem [resolvable:$true] %s730
          %736 = dma.hbm_to_vmem [thread:$0]  %s729, 2048, %s731, %s720, 128, 128, 8
        $region68: #{_lambda_.2} parent=39 // pred_fallthru
          _
        // Predicated region
        $region69: #{_lambda_.2} parent=39 // pred_check
          %p737 = pneg %p261
        $region70: #{_lambda_.2} parent=39 // pred_check_branch
          %739 = sbr.rel (%p737) target = $region72
        $region71: #{_lambda_.2} parent=39 // pred_region
          %p740 = scmp.lt.s32.totalorder %s38, 1
          %s741 = scalar_select %p740, %s38, 1
          %s742 = smul.addr %s741, 4
          %s743 = scalar_lea.vmem %s8, %s742
        $region72: #{_lambda_.2} parent=39 // pred_fallthru
          _
        // Predicated region
        $region73: #{_lambda_.2} parent=39 // pred_check
          %p744 = pneg %p287
        $region74: #{_lambda_.2} parent=39 // pred_check_branch
          %746 = sbr.rel (%p744) target = $region76
        $region75: #{_lambda_.2} parent=39 // pred_region
          %s747 = sand.u32 %s38, 1
          %s748 = scalar_lea.sflag [#allocation9], %s747
          %s749 = sand.u32 %s277, 1
          %s750 = smul.addr %s749, 32
          %s751 = scalar_lea.vmem [#allocation8], %s750
          %s753 = ssub.s32 512, 512
          %754 = vsyncadd %s748, %s753
          %s755 = smul.addr %s38, 4
          %s756 = smul.addr %s755, 128
          %s757 = scalar_lea.hbm %s9, %s756
          %s758 = sshll.u32 %s751, 4
          %s759 = int_to_ptr.vmem [resolvable:$true] %s758
          %764 = dma.hbm_to_vmem [thread:$0]  %s757, 512, %s759, %s748, 128, 128, 8
        $region76: #{_lambda_.2} parent=39 // pred_fallthru
          _
        // Predicated region
        $region77: #{_lambda_.2} parent=39 // pred_check
          %p765 = pneg %p313
        $region78: #{_lambda_.2} parent=39 // pred_check_branch
          %767 = sbr.rel (%p765) target = $region80
        $region79: #{_lambda_.2} parent=39 // pred_region
          %p768 = scmp.lt.s32.totalorder %s38, 1
          %s769 = scalar_select %p768, %s38, 1
          %s770 = scalar_lea.vmem %s10, %s769
        $region80: #{_lambda_.2} parent=39 // pred_fallthru
          _
        // Predicated region
        $region81: #{_lambda_.2} parent=39 // pred_check
          %p771 = pneg %p339
        $region82: #{_lambda_.2} parent=39 // pred_check_branch
          %773 = sbr.rel (%p771) target = $region84
        $region83: #{_lambda_.2} parent=39 // pred_region
          %p774 = scmp.lt.s32.totalorder %s38, 1
          %s775 = scalar_select %p774, %s38, 1
          %s776 = scalar_lea.vmem %s11, %s775
        $region84: #{_lambda_.2} parent=39 // pred_fallthru
          _
        // Predicated region
        $region85: #{_lambda_.2} parent=39 // pred_check
          %p777 = pneg %p365
        $region86: #{_lambda_.2} parent=39 // pred_check_branch
          %779 = sbr.rel (%p777) target = $region88
        $region87: #{_lambda_.2} parent=39 // pred_region
          %p780 = scmp.lt.s32.totalorder %s38, 1
          %s781 = scalar_select %p780, %s38, 1
          %s782 = scalar_lea.vmem %s12, %s781
        $region88: #{_lambda_.2} parent=39 // pred_fallthru
          _
        // Predicated region
        $region89: #{_lambda_.2} parent=39 // pred_check
          %p783 = pneg %p391
        $region90: #{_lambda_.2} parent=39 // pred_check_branch
          %785 = sbr.rel (%p783) target = $region92
        $region91: #{_lambda_.2} parent=39 // pred_region
          %s786 = sand.u32 %s38, 1
          %s787 = scalar_lea.sflag [#allocation9], %s786
          %s788 = sand.u32 %s381, 1
          %s789 = smul.addr %s788, 32
          %s790 = scalar_lea.vmem [#allocation10], %s789
          %s792 = ssub.s32 512, 512
          %793 = vsyncadd %s787, %s792
          %s794 = smul.addr %s38, 4
          %s795 = smul.addr %s794, 128
          %s796 = scalar_lea.hbm %s13, %s795
          %s797 = sshll.u32 %s790, 4
          %s798 = int_to_ptr.vmem [resolvable:$true] %s797
          %803 = dma.hbm_to_vmem [thread:$0]  %s796, 512, %s798, %s787, 128, 128, 8
        $region92: #{_lambda_.2} parent=39 // pred_fallthru
          _
        // Predicated region
        $region93: #{_lambda_.2} parent=39 // pred_check
          %p804 = pneg %p417
        $region94: #{_lambda_.2} parent=39 // pred_check_branch
          %806 = sbr.rel (%p804) target = $region96
        $region95: #{_lambda_.2} parent=39 // pred_region
          %p807 = scmp.lt.s32.totalorder %s38, 1
          %s808 = scalar_select %p807, %s38, 1
          %s809 = scalar_lea.vmem %s14, %s808
        $region96: #{_lambda_.2} parent=39 // pred_fallthru
          _
        // Predicated region
        $region97: #{_lambda_.2} parent=39 // pred_check
          %p810 = pneg %p443
        $region98: #{_lambda_.2} parent=39 // pred_check_branch
          %812 = sbr.rel (%p810) target = $region100
        $region99: #{_lambda_.2} parent=39 // pred_region
          %p813 = scmp.lt.s32.totalorder %s38, 1
          %s814 = scalar_select %p813, %s38, 1
          %s815 = smul.addr %s814, 16
          %s816 = smul.addr %s815, 8
          %s817 = scalar_lea.vmem %s15, %s816
        $region100: #{_lambda_.2} parent=39 // pred_fallthru
          _
        // Predicated region
        $region101: #{_lambda_.2} parent=39 // pred_check
          %p818 = pneg %p469
        $region102: #{_lambda_.2} parent=39 // pred_check_branch
          %820 = sbr.rel (%p818) target = $region104
        $region103: #{_lambda_.2} parent=39 // pred_region
          %p821 = scmp.lt.s32.totalorder %s38, 1
          %s822 = scalar_select %p821, %s38, 1
          %s823 = scalar_lea.vmem %s16, %s822
        $region104: #{_lambda_.2} parent=39 // pred_fallthru
          _
      $region40: #{_lambda_.2} parent=5 // pred_fallthru
        _
      %p824 = scmp.le.s32.totalorder 1, %s38
      %p825 = scmp.lt.s32.totalorder %s38, 3
      %p826 = pnand %p824, %p825
      %p827 = pneg %p826
      // Predicated region
      $region105: #{_lambda_.2} parent=5 // pred_check
        _
      $region106: #{_lambda_.2} parent=5 // pred_check_branch
        %829 = sbr.rel (%p826) target = $region108
      $region107: #{_lambda_.2} parent=5 // pred_region
        %s830 = ssub.s32 %s38, 1
        %s831 = sand.u32 %s124, 1
        %s832 = scalar_lea.sflag [#allocation4], %s831
        %s833 = sand.u32 %s124, 1
        %s834 = smul.addr %s833, 128
        %s835 = scalar_lea.vmem [#allocation3], %s834
        // Predicated region
        $region109: #{_lambda_.2} parent=107 // pred_check
          %p836 = pneg %p137
        $region110: #{_lambda_.2} parent=107 // pred_check_branch
          %838 = sbr.rel (%p836) target = $region112
        $region111: #{_lambda_.2} parent=107 // pred_region
          %839 = dma.done %s832, 2048
        $region112: #{_lambda_.2} parent=107 // pred_fallthru
          _
        %s840 = sand.u32 %s43, 1
        %s841 = scalar_lea.sflag [#allocation6], %s840
        %s842 = sand.u32 %s176, 1
        %s843 = smul.addr %s842, 128
        %s844 = scalar_lea.vmem [#allocation5], %s843
        // Predicated region
        $region113: #{_lambda_.2} parent=107 // pred_check
          %p845 = pneg %p189
        $region114: #{_lambda_.2} parent=107 // pred_check_branch
          %847 = sbr.rel (%p845) target = $region116
        $region115: #{_lambda_.2} parent=107 // pred_region
          %848 = dma.done %s841, 2048
        $region116: #{_lambda_.2} parent=107 // pred_fallthru
          _
        %s849 = sand.u32 %s43, 1
        %s850 = scalar_lea.sflag [#allocation6], %s849
        %s851 = sand.u32 %s228, 1
        %s852 = smul.addr %s851, 128
        %s853 = scalar_lea.vmem [#allocation7], %s852
        // Predicated region
        $region117: #{_lambda_.2} parent=107 // pred_check
          %p854 = pneg %p241
        $region118: #{_lambda_.2} parent=107 // pred_check_branch
          %856 = sbr.rel (%p854) target = $region120
        $region119: #{_lambda_.2} parent=107 // pred_region
          %857 = dma.done %s850, 2048
        $region120: #{_lambda_.2} parent=107 // pred_fallthru
          _
        %s858 = sand.u32 %s43, 1
        %s859 = scalar_lea.sflag [#allocation9], %s858
        %s860 = sand.u32 %s280, 1
        %s861 = smul.addr %s860, 32
        %s862 = scalar_lea.vmem [#allocation8], %s861
        // Predicated region
        $region121: #{_lambda_.2} parent=107 // pred_check
          %p863 = pneg %p293
        $region122: #{_lambda_.2} parent=107 // pred_check_branch
          %865 = sbr.rel (%p863) target = $region124
        $region123: #{_lambda_.2} parent=107 // pred_region
          %866 = dma.done %s859, 512
        $region124: #{_lambda_.2} parent=107 // pred_fallthru
          _
        %s867 = sand.u32 %s43, 1
        %s868 = scalar_lea.sflag [#allocation9], %s867
        %s869 = sand.u32 %s384, 1
        %s870 = smul.addr %s869, 32
        %s871 = scalar_lea.vmem [#allocation10], %s870
        // Predicated region
        $region125: #{_lambda_.2} parent=107 // pred_check
          %p872 = pneg %p397
        $region126: #{_lambda_.2} parent=107 // pred_check_branch
          %874 = sbr.rel (%p872) target = $region128
        $region127: #{_lambda_.2} parent=107 // pred_region
          %875 = dma.done %s868, 512
        $region128: #{_lambda_.2} parent=107 // pred_fallthru
          _
        // Predicated region
        $region129: #{_lambda_.2} parent=107 // pred_check
          %p876 = pneg %p580
        $region130: #{_lambda_.2} parent=107 // pred_check_branch
          %878 = sbr.rel (%p876) target = $region132
        $region131: #{_lambda_.2} parent=107 // pred_region
          %879 = dma.done [#allocation12], 512
        $region132: #{_lambda_.2} parent=107 // pred_fallthru
          _
        %p880 = pneg %p59
        %p881 = pneg %p56
        %p882 = scmp.lt.s32.totalorder %s43, 1
        %s883 = scalar_select %p882, %s43, 1
        %s884 = scalar_lea.vmem %s1, %s883
        %p885 = pneg %p85
        %p886 = pneg %p82
        %p887 = scmp.lt.s32.totalorder %s43, 1
        %s888 = scalar_select %p887, %s43, 1
        %s889 = scalar_lea.vmem %s2, %s888
        %p890 = pneg %p111
        %p891 = pneg %p108
        %s892 = sand.u32 %s124, 1
        %s893 = scalar_lea.sflag [#allocation4], %s892
        %s894 = sand.u32 %s124, 1
        %s895 = smul.addr %s894, 128
        %s896 = scalar_lea.vmem [#allocation3], %s895
        %p897 = pneg %p137
        %p898 = pneg %p134
        %p899 = scmp.lt.s32.totalorder %s43, 1
        %s900 = scalar_select %p899, %s43, 1
        %s901 = smul.addr %s900, 4
        %s902 = scalar_lea.vmem %s4, %s901
        %p903 = pneg %p163
        %p904 = pneg %p160
        %s905 = sand.u32 %s43, 1
        %s906 = scalar_lea.sflag [#allocation6], %s905
        %s907 = sand.u32 %s176, 1
        %s908 = smul.addr %s907, 128
        %s909 = scalar_lea.vmem [#allocation5], %s908
        %p910 = pneg %p189
        %p911 = pneg %p186
        %p912 = scmp.lt.s32.totalorder %s43, 1
        %s913 = scalar_select %p912, %s43, 1
        %s914 = smul.addr %s913, 4
        %s915 = scalar_lea.vmem %s6, %s914
        %p916 = pneg %p215
        %p917 = pneg %p212
        %s918 = sand.u32 %s43, 1
        %s919 = scalar_lea.sflag [#allocation6], %s918
        %s920 = sand.u32 %s228, 1
        %s921 = smul.addr %s920, 128
        %s922 = scalar_lea.vmem [#allocation7], %s921
        %p923 = pneg %p241
        %p924 = pneg %p238
        %p925 = scmp.lt.s32.totalorder %s43, 1
        %s926 = scalar_select %p925, %s43, 1
        %s927 = smul.addr %s926, 4
        %s928 = scalar_lea.vmem %s8, %s927
        %p929 = pneg %p267
        %p930 = pneg %p264
        %s931 = sand.u32 %s43, 1
        %s932 = scalar_lea.sflag [#allocation9], %s931
        %s933 = sand.u32 %s280, 1
        %s934 = smul.addr %s933, 32
        %s935 = scalar_lea.vmem [#allocation8], %s934
        %p936 = pneg %p293
        %p937 = pneg %p290
        %p938 = scmp.lt.s32.totalorder %s43, 1
        %s939 = scalar_select %p938, %s43, 1
        %s940 = scalar_lea.vmem %s10, %s939
        %p941 = pneg %p319
        %p942 = pneg %p316
        %p943 = scmp.lt.s32.totalorder %s43, 1
        %s944 = scalar_select %p943, %s43, 1
        %s945 = scalar_lea.vmem %s11, %s944
        %p946 = pneg %p345
        %p947 = pneg %p342
        %p948 = scmp.lt.s32.totalorder %s43, 1
        %s949 = scalar_select %p948, %s43, 1
        %s950 = scalar_lea.vmem %s12, %s949
        %p951 = pneg %p371
        %p952 = pneg %p368
        %s953 = sand.u32 %s43, 1
        %s954 = scalar_lea.sflag [#allocation9], %s953
        %s955 = sand.u32 %s384, 1
        %s956 = smul.addr %s955, 32
        %s957 = scalar_lea.vmem [#allocation10], %s956
        %p958 = pneg %p397
        %p959 = pneg %p394
        %p960 = scmp.lt.s32.totalorder %s43, 1
        %s961 = scalar_select %p960, %s43, 1
        %s962 = scalar_lea.vmem %s14, %s961
        %p963 = pneg %p423
        %p964 = pneg %p420
        %p965 = scmp.lt.s32.totalorder %s43, 1
        %s966 = scalar_select %p965, %s43, 1
        %s967 = smul.addr %s966, 16
        %s968 = smul.addr %s967, 8
        %s969 = scalar_lea.vmem %s15, %s968
        %p970 = pneg %p449
        %p971 = pneg %p446
        %p972 = scmp.lt.s32.totalorder %s43, 1
        %s973 = scalar_select %p972, %s43, 1
        %s974 = scalar_lea.vmem %s16, %s973
        %p975 = pneg %p475
        %p976 = pneg %p472
        %p977 = pneg %p496
        %p978 = pneg %p493
        %p979 = pneg %p517
        %p980 = pneg %p514
        %p981 = pneg %p538
        %p982 = pneg %p535
        %p983 = pneg %p559
        %p984 = pneg %p556
        %p985 = pneg %p580
        %p986 = pneg %p577
        %p987 = pneg %p601
        %p988 = pneg %p598
        %p989 = scmp.lt.s32.totalorder %s43, 1
        %s990 = scalar_select %p989, %s43, 1
        %s991 = scalar_lea.vmem %s1, %s990
        %p992 = scmp.lt.s32.totalorder %s43, 1
        %s993 = scalar_select %p992, %s43, 1
        %s994 = scalar_lea.vmem %s2, %s993
        %p995 = scmp.lt.s32.totalorder %s43, 1
        %s996 = scalar_select %p995, %s43, 1
        %s997 = smul.addr %s996, 4
        %s998 = scalar_lea.vmem %s4, %s997
        %p999 = scmp.lt.s32.totalorder %s43, 1
        %s1000 = scalar_select %p999, %s43, 1
        %s1001 = smul.addr %s1000, 4
        %s1002 = scalar_lea.vmem %s6, %s1001
        %p1003 = scmp.lt.s32.totalorder %s43, 1
        %s1004 = scalar_select %p1003, %s43, 1
        %s1005 = smul.addr %s1004, 4
        %s1006 = scalar_lea.vmem %s8, %s1005
        %p1007 = scmp.lt.s32.totalorder %s43, 1
        %s1008 = scalar_select %p1007, %s43, 1
        %s1009 = scalar_lea.vmem %s10, %s1008
        %p1010 = scmp.lt.s32.totalorder %s43, 1
        %s1011 = scalar_select %p1010, %s43, 1
        %s1012 = scalar_lea.vmem %s11, %s1011
        %p1013 = scmp.lt.s32.totalorder %s43, 1
        %s1014 = scalar_select %p1013, %s43, 1
        %s1015 = scalar_lea.vmem %s12, %s1014
        %p1016 = scmp.lt.s32.totalorder %s43, 1
        %s1017 = scalar_select %p1016, %s43, 1
        %s1018 = scalar_lea.vmem %s14, %s1017
        %p1019 = scmp.lt.s32.totalorder %s43, 1
        %s1020 = scalar_select %p1019, %s43, 1
        %s1021 = smul.addr %s1020, 16
        %s1022 = smul.addr %s1021, 8
        %s1023 = scalar_lea.vmem %s15, %s1022
        %p1024 = scmp.lt.s32.totalorder %s43, 1
        %s1025 = scalar_select %p1024, %s43, 1
        %s1026 = scalar_lea.vmem %s16, %s1025
        %p1027 = scmp.eq.s32.totalorder %s43, 0
        // Predicated region
        $region133: #{_lambda_.2} parent=107 // pred_check
          %p1028 = pneg %p1027
        $region134: #{_lambda_.2} parent=107 // pred_check_branch
          %1030 = sbr.rel (%p1028) target = $region136
        $region135: #{_lambda_.2} parent=107 // pred_region
          %v1031 = vld [vmem:[%s0] sm:$0xff]
          %v1032 = vld [vmem:[%s0 + $0x8] sm:$0xff]
          %vm1033 = vcmask 261120
          %1034 = vst.msk [vmem:[#allocation2] sm:$0xff] %vm1033, %v1031
          %1035 = vst.msk [vmem:[#allocation2 + $0x8] sm:$0xff] %vm1033, %v1032
        $region136: #{_lambda_.2} parent=107 // pred_fallthru
          _
        %v1036 = vld [vmem:[#allocation2] sm:$0xff]
        %v1037 = vld [vmem:[#allocation2 + $0x8] sm:$0xff]
        %v1038 = vld [vmem:[%s991] sm:$0x1]
        %v1039 = vld [vmem:[%s994] sm:$0x1]
        %vm1040 = vcmask 261120
        %v1041 = vsel %vm1040, %v1036, 0.0
        %1042 = vadd.xlane.f32.xlu0 %v1041
        %v1043 = vpop.xlane.xlu0 %1042
        %v1044 = vsel %vm1040, %v1037, 0.0
        %1045 = vadd.xlane.f32.xlu0 %v1044
        %v1046 = vpop.xlane.xlu0 %1045
        %v1047 = vrcp.pop 32.0
        %v1048 = vmul.f32 %v1043, %v1047
        %v1049 = vmul.f32 %v1046, %v1047
        %v1050 = vsub.f32 %v1036, %v1048
        %v1051 = vsub.f32 %v1037, %v1049
        %v1052 = vmul.f32 %v1050, %v1050
        %v1053 = vmul.f32 %v1051, %v1051
        %v1054 = vsel %vm1040, %v1052, 0.0
        %1055 = vadd.xlane.f32.xlu0 %v1054
        %v1056 = vpop.xlane.xlu0 %1055
        %v1057 = vsel %vm1040, %v1053, 0.0
        %1058 = vadd.xlane.f32.xlu0 %v1057
        %v1059 = vpop.xlane.xlu0 %1058
        %v1060 = vmul.f32 %v1056, %v1047
        %v1061 = vmul.f32 %v1059, %v1047
        %v1062 = vadd.f32 %v1060, 1e-05
        %v1063 = vadd.f32 %v1061, 1e-05
        %v1064 = vrsqrt.pop %v1062
        %v1065 = vrsqrt.pop %v1063
        %v1066 = vmul.f32 %v1050, %v1064
        %v1067 = vmul.f32 %v1051, %v1065
        %v1069 = vlaneseq
        %v1070 = vshrl.u32 %v1069, 7
        %v1071 = vsub.s32 0, %v1070
        %v1072 = vrot.slane %v1038, %v1071
        %v1074 = vmul.f32 %v1066, %v1072
        %v1075 = vmul.f32 %v1067, %v1072
        %v1077 = vlaneseq
        %v1078 = vshrl.u32 %v1077, 7
        %v1079 = vsub.s32 0, %v1078
        %v1080 = vrot.slane %v1039, %v1079
        %v1082 = vadd.f32 %v1074, %v1080
        %v1083 = vadd.f32 %v1075, %v1080
        %v1084 = vld [vmem:[%s17] sm:$0xff]
        %v1085 = vld [vmem:[%s835] sm:$0xff]
        %v1086 = vld [vmem:[%s835 + $0x8] sm:$0xff]
        %v1087 = vld [vmem:[%s835 + $0x10] sm:$0xff]
        %v1088 = vld [vmem:[%s835 + $0x18] sm:$0xff]
        %v1089 = vld [vmem:[%s998] sm:$0x1]
        %v1091 = vlaneseq
        %v1092 = vshrl.u32 %v1091, 7
        %v1093 = vsub.s32 0, %v1092
        %v1094 = vrot.slane %v1089, %v1093
        %v1097 = vsel %vm1040, %v1082, 0
        %v1100 = vsel %vm1040, %v1083, 0
        %1102 = vmatprep.subr.mxu0 0.0
        %1103 = vmatpush1.msra.mxu0 %v1085
        %1104 = vmatprep.subr.mxu0 0.0
        %1105 = vmatpush1.msra.mxu0 %v1086
        %1106 = vmatprep.subr.mxu0 0.0
        %1107 = vmatpush1.msra.mxu0 %v1087
        %1108 = vmatprep.subr.mxu0 0.0
        %1109 = vmatpush1.msra.mxu0 %v1088
        %1110 = vmatprep.subr.mxu0 0.0
        %1111 = vmatpush1.msra.mxu0 0.0
        %1112 = vmatprep.subr.mxu0 0.0
        %1113 = vmatpush1.msra.mxu0 0.0
        %1114 = vmatprep.subr.mxu0 0.0
        %1115 = vmatpush1.msra.mxu0 0.0
        %1116 = vmatprep.subr.mxu0 0.0
        %1117 = vmatpush1.msra.mxu0 0.0
        %1118 = vmatprep.subr.mxu0 0.0
        %1119 = vmatpush1.msra.mxu0 0.0
        %1120 = vmatprep.subr.mxu0 0.0
        %1121 = vmatpush1.msra.mxu0 0.0
        %1122 = vmatprep.subr.mxu0 0.0
        %1123 = vmatpush1.msra.mxu0 0.0
        %1124 = vmatprep.subr.mxu0 0.0
        %1125 = vmatpush1.msra.mxu0 0.0
        %1126 = vmatprep.subr.mxu0 0.0
        %1127 = vmatpush1.msra.mxu0 0.0
        %1128 = vmatprep.subr.mxu0 0.0
        %1129 = vmatpush1.msra.mxu0 0.0
        %1130 = vmatprep.subr.mxu0 0.0
        %1131 = vmatpush1.msra.mxu0 0.0
        %1132 = vmatprep.subr.mxu0 0.0
        %1133 = vmatpush1.msra.mxu0 0.0
        %1134 = vmatprep.subr.mxu0 0.0
        %1135 = vmatpush1.msra.mxu0 0.0
        %1136 = vmatprep.subr.mxu0 0.0
        %1137 = vmatpush1.msra.mxu0 0.0
        %1138 = vmatprep.subr.mxu0 0.0
        %1139 = vmatpush1.msra.mxu0 0.0
        %1140 = vmatprep.subr.mxu0 0.0
        %1141 = vmatpush1.msra.mxu0 0.0
        %1142 = vmatprep.subr.mxu0 0.0
        %1143 = vmatpush1.msra.mxu0 0.0
        %1144 = vmatprep.subr.mxu0 0.0
        %1145 = vmatpush1.msra.mxu0 0.0
        %1146 = vmatprep.subr.mxu0 0.0
        %1147 = vmatpush1.msra.mxu0 0.0
        %1148 = vmatprep.subr.mxu0 0.0
        %1149 = vmatpush1.msra.mxu0 0.0
        %1150 = vmatprep.subr.mxu0 0.0
        %1151 = vmatpush1.msra.mxu0 0.0
        %1152 = vmatprep.subr.mxu0 0.0
        %1153 = vmatpush1.msra.mxu0 0.0
        %1154 = vmatprep.subr.mxu0 0.0
        %1155 = vmatpush1.msra.mxu0 0.0
        %1156 = vmatprep.subr.mxu0 0.0
        %1157 = vmatpush1.msra.mxu0 0.0
        %1158 = vmatprep.subr.mxu0 0.0
        %1159 = vmatpush1.msra.mxu0 0.0
        %1160 = vmatprep.subr.mxu0 0.0
        %1161 = vmatpush1.msra.mxu0 0.0
        %1162 = vmatprep.subr.mxu0 0.0
        %1163 = vmatpush1.msra.mxu0 0.0
        %1164 = vmatprep.subr.mxu0 0.0
        %1165 = vmatpush1.msra.mxu0 0.0
        %1166 = vmatprep.mubr.f32.mxu0 0.0
        %1167 = vmatmul.mubr.f32.gmra.mrb[0].mxu0 %v1097
        %v1168 = vpop.f32.mrb[0].mxu0
        %v1169 = vadd.f32 %v1094, %v1168
        %v1170 = vpop.f32.mrb[0].mxu0
        %1171 = vmatprep.mubr.f32.mxu0 0.0
        %1172 = vmatmul.mubr.f32.gmra.mrb[0].mxu0 %v1100
        %v1173 = vpop.f32.mrb[0].mxu0
        %v1174 = vadd.f32 %v1094, %v1173
        %v1175 = vpop.f32.mrb[0].mxu0
        %1176 = vdwg.mxu0
        %v1177 = vld [vmem:[%s844] sm:$0xff]
        %v1178 = vld [vmem:[%s844 + $0x8] sm:$0xff]
        %v1179 = vld [vmem:[%s844 + $0x10] sm:$0xff]
        %v1180 = vld [vmem:[%s844 + $0x18] sm:$0xff]
        %v1181 = vld [vmem:[%s1002] sm:$0x1]
        %v1183 = vlaneseq
        %v1184 = vshrl.u32 %v1183, 7
        %v1185 = vsub.s32 0, %v1184
        %v1186 = vrot.slane %v1181, %v1185
        %1188 = vmatprep.subr.mxu0 0.0
        %1189 = vmatpush1.msra.mxu0 %v1177
        %1190 = vmatprep.subr.mxu0 0.0
        %1191 = vmatpush1.msra.mxu0 %v1178
        %1192 = vmatprep.subr.mxu0 0.0
        %1193 = vmatpush1.msra.mxu0 %v1179
        %1194 = vmatprep.subr.mxu0 0.0
        %1195 = vmatpush1.msra.mxu0 %v1180
        %1196 = vmatprep.subr.mxu0 0.0
        %1197 = vmatpush1.msra.mxu0 0.0
        %1198 = vmatprep.subr.mxu0 0.0
        %1199 = vmatpush1.msra.mxu0 0.0
        %1200 = vmatprep.subr.mxu0 0.0
        %1201 = vmatpush1.msra.mxu0 0.0
        %1202 = vmatprep.subr.mxu0 0.0
        %1203 = vmatpush1.msra.mxu0 0.0
        %1204 = vmatprep.subr.mxu0 0.0
        %1205 = vmatpush1.msra.mxu0 0.0
        %1206 = vmatprep.subr.mxu0 0.0
        %1207 = vmatpush1.msra.mxu0 0.0
        %1208 = vmatprep.subr.mxu0 0.0
        %1209 = vmatpush1.msra.mxu0 0.0
        %1210 = vmatprep.subr.mxu0 0.0
        %1211 = vmatpush1.msra.mxu0 0.0
        %1212 = vmatprep.subr.mxu0 0.0
        %1213 = vmatpush1.msra.mxu0 0.0
        %1214 = vmatprep.subr.mxu0 0.0
        %1215 = vmatpush1.msra.mxu0 0.0
        %1216 = vmatprep.subr.mxu0 0.0
        %1217 = vmatpush1.msra.mxu0 0.0
        %1218 = vmatprep.subr.mxu0 0.0
        %1219 = vmatpush1.msra.mxu0 0.0
        %1220 = vmatprep.subr.mxu0 0.0
        %1221 = vmatpush1.msra.mxu0 0.0
        %1222 = vmatprep.subr.mxu0 0.0
        %1223 = vmatpush1.msra.mxu0 0.0
        %1224 = vmatprep.subr.mxu0 0.0
        %1225 = vmatpush1.msra.mxu0 0.0
        %1226 = vmatprep.subr.mxu0 0.0
        %1227 = vmatpush1.msra.mxu0 0.0
        %1228 = vmatprep.subr.mxu0 0.0
        %1229 = vmatpush1.msra.mxu0 0.0
        %1230 = vmatprep.subr.mxu0 0.0
        %1231 = vmatpush1.msra.mxu0 0.0
        %1232 = vmatprep.subr.mxu0 0.0
        %1233 = vmatpush1.msra.mxu0 0.0
        %1234 = vmatprep.subr.mxu0 0.0
        %1235 = vmatpush1.msra.mxu0 0.0
        %1236 = vmatprep.subr.mxu0 0.0
        %1237 = vmatpush1.msra.mxu0 0.0
        %1238 = vmatprep.subr.mxu0 0.0
        %1239 = vmatpush1.msra.mxu0 0.0
        %1240 = vmatprep.subr.mxu0 0.0
        %1241 = vmatpush1.msra.mxu0 0.0
        %1242 = vmatprep.subr.mxu0 0.0
        %1243 = vmatpush1.msra.mxu0 0.0
        %1244 = vmatprep.subr.mxu0 0.0
        %1245 = vmatpush1.msra.mxu0 0.0
        %1246 = vmatprep.subr.mxu0 0.0
        %1247 = vmatpush1.msra.mxu0 0.0
        %1248 = vmatprep.subr.mxu0 0.0
        %1249 = vmatpush1.msra.mxu0 0.0
        %1250 = vmatprep.subr.mxu0 0.0
        %1251 = vmatpush1.msra.mxu0 0.0
        %1252 = vmatprep.mubr.f32.mxu0 0.0
        %1253 = vmatmul.mubr.f32.gmra.mrb[0].mxu0 %v1097
        %v1254 = vpop.f32.mrb[0].mxu0
        %v1255 = vadd.f32 %v1186, %v1254
        %v1256 = vpop.f32.mrb[0].mxu0
        %1257 = vmatprep.mubr.f32.mxu0 0.0
        %1258 = vmatmul.mubr.f32.gmra.mrb[0].mxu0 %v1100
        %v1259 = vpop.f32.mrb[0].mxu0
        %v1260 = vadd.f32 %v1186, %v1259
        %v1261 = vpop.f32.mrb[0].mxu0
        %1262 = vdwg.mxu0
        %v1263 = vld [vmem:[%s853] sm:$0xff]
        %v1264 = vld [vmem:[%s853 + $0x8] sm:$0xff]
        %v1265 = vld [vmem:[%s853 + $0x10] sm:$0xff]
        %v1266 = vld [vmem:[%s853 + $0x18] sm:$0xff]
        %v1267 = vld [vmem:[%s1006] sm:$0x1]
        %v1269 = vlaneseq
        %v1270 = vshrl.u32 %v1269, 7
        %v1271 = vsub.s32 0, %v1270
        %v1272 = vrot.slane %v1267, %v1271
        %1274 = vmatprep.subr.mxu0 0.0
        %1275 = vmatpush1.msra.mxu0 %v1263
        %1276 = vmatprep.subr.mxu0 0.0
        %1277 = vmatpush1.msra.mxu0 %v1264
        %1278 = vmatprep.subr.mxu0 0.0
        %1279 = vmatpush1.msra.mxu0 %v1265
        %1280 = vmatprep.subr.mxu0 0.0
        %1281 = vmatpush1.msra.mxu0 %v1266
        %1282 = vmatprep.subr.mxu0 0.0
        %1283 = vmatpush1.msra.mxu0 0.0
        %1284 = vmatprep.subr.mxu0 0.0
        %1285 = vmatpush1.msra.mxu0 0.0
        %1286 = vmatprep.subr.mxu0 0.0
        %1287 = vmatpush1.msra.mxu0 0.0
        %1288 = vmatprep.subr.mxu0 0.0
        %1289 = vmatpush1.msra.mxu0 0.0
        %1290 = vmatprep.subr.mxu0 0.0
        %1291 = vmatpush1.msra.mxu0 0.0
        %1292 = vmatprep.subr.mxu0 0.0
        %1293 = vmatpush1.msra.mxu0 0.0
        %1294 = vmatprep.subr.mxu0 0.0
        %1295 = vmatpush1.msra.mxu0 0.0
        %1296 = vmatprep.subr.mxu0 0.0
        %1297 = vmatpush1.msra.mxu0 0.0
        %1298 = vmatprep.subr.mxu0 0.0
        %1299 = vmatpush1.msra.mxu0 0.0
        %1300 = vmatprep.subr.mxu0 0.0
        %1301 = vmatpush1.msra.mxu0 0.0
        %1302 = vmatprep.subr.mxu0 0.0
        %1303 = vmatpush1.msra.mxu0 0.0
        %1304 = vmatprep.subr.mxu0 0.0
        %1305 = vmatpush1.msra.mxu0 0.0
        %1306 = vmatprep.subr.mxu0 0.0
        %1307 = vmatpush1.msra.mxu0 0.0
        %1308 = vmatprep.subr.mxu0 0.0
        %1309 = vmatpush1.msra.mxu0 0.0
        %1310 = vmatprep.subr.mxu0 0.0
        %1311 = vmatpush1.msra.mxu0 0.0
        %1312 = vmatprep.subr.mxu0 0.0
        %1313 = vmatpush1.msra.mxu0 0.0
        %1314 = vmatprep.subr.mxu0 0.0
        %1315 = vmatpush1.msra.mxu0 0.0
        %1316 = vmatprep.subr.mxu0 0.0
        %1317 = vmatpush1.msra.mxu0 0.0
        %1318 = vmatprep.subr.mxu0 0.0
        %1319 = vmatpush1.msra.mxu0 0.0
        %1320 = vmatprep.subr.mxu0 0.0
        %1321 = vmatpush1.msra.mxu0 0.0
        %1322 = vmatprep.subr.mxu0 0.0
        %1323 = vmatpush1.msra.mxu0 0.0
        %1324 = vmatprep.subr.mxu0 0.0
        %1325 = vmatpush1.msra.mxu0 0.0
        %1326 = vmatprep.subr.mxu0 0.0
        %1327 = vmatpush1.msra.mxu0 0.0
        %1328 = vmatprep.subr.mxu0 0.0
        %1329 = vmatpush1.msra.mxu0 0.0
        %1330 = vmatprep.subr.mxu0 0.0
        %1331 = vmatpush1.msra.mxu0 0.0
        %1332 = vmatprep.subr.mxu0 0.0
        %1333 = vmatpush1.msra.mxu0 0.0
        %1334 = vmatprep.subr.mxu0 0.0
        %1335 = vmatpush1.msra.mxu0 0.0
        %1336 = vmatprep.subr.mxu0 0.0
        %1337 = vmatpush1.msra.mxu0 0.0
        %1338 = vmatprep.mubr.f32.mxu0 0.0
        %1339 = vmatmul.mubr.f32.gmra.mrb[0].mxu0 %v1097
        %v1340 = vpop.f32.mrb[0].mxu0
        %v1341 = vadd.f32 %v1272, %v1340
        %v1342 = vpop.f32.mrb[0].mxu0
        %1343 = vmatprep.mubr.f32.mxu0 0.0
        %1344 = vmatmul.mubr.f32.gmra.mrb[0].mxu0 %v1100
        %v1345 = vpop.f32.mrb[0].mxu0
        %v1346 = vadd.f32 %v1272, %v1345
        %v1347 = vpop.f32.mrb[0].mxu0
        %1348 = vdwg.mxu0
        %vm1349 = vcmask 64512
        %v1351 = vsel %vm1349, %v1169, 0
        %v1354 = vsel %vm1349, %v1255, 0
        %1356 = vmatprep.subr.mxu0 0.0
        %1357 = vmatpush1.xpose.msra.mxu0 %v1354
        %1358 = vmatprep.subr.mxu0 0.0
        %1359 = vmatpush1.xpose.msra.mxu0 0.0
        %1360 = vmatprep.subr.mxu0 0.0
        %1361 = vmatpush1.xpose.msra.mxu0 0.0
        %1362 = vmatprep.subr.mxu0 0.0
        %1363 = vmatpush1.xpose.msra.mxu0 0.0
        %1364 = vmatprep.subr.mxu0 0.0
        %1365 = vmatpush1.xpose.msra.mxu0 0.0
        %1366 = vmatprep.subr.mxu0 0.0
        %1367 = vmatpush1.xpose.msra.mxu0 0.0
        %1368 = vmatprep.subr.mxu0 0.0
        %1369 = vmatpush1.xpose.msra.mxu0 0.0
        %1370 = vmatprep.subr.mxu0 0.0
        %1371 = vmatpush1.xpose.msra.mxu0 0.0
        %1372 = vmatprep.subr.mxu0 0.0
        %1373 = vmatpush1.xpose.msra.mxu0 0.0
        %1374 = vmatprep.subr.mxu0 0.0
        %1375 = vmatpush1.xpose.msra.mxu0 0.0
        %1376 = vmatprep.subr.mxu0 0.0
        %1377 = vmatpush1.xpose.msra.mxu0 0.0
        %1378 = vmatprep.subr.mxu0 0.0
        %1379 = vmatpush1.xpose.msra.mxu0 0.0
        %1380 = vmatprep.subr.mxu0 0.0
        %1381 = vmatpush1.xpose.msra.mxu0 0.0
        %1382 = vmatprep.subr.mxu0 0.0
        %1383 = vmatpush1.xpose.msra.mxu0 0.0
        %1384 = vmatprep.subr.mxu0 0.0
        %1385 = vmatpush1.xpose.msra.mxu0 0.0
        %1386 = vmatprep.subr.mxu0 0.0
        %1387 = vmatpush1.xpose.msra.mxu0 0.0
        %1388 = vmatprep.subr.mxu0 0.0
        %1389 = vmatpush1.xpose.msra.mxu0 0.0
        %1390 = vmatprep.subr.mxu0 0.0
        %1391 = vmatpush1.xpose.msra.mxu0 0.0
        %1392 = vmatprep.subr.mxu0 0.0
        %1393 = vmatpush1.xpose.msra.mxu0 0.0
        %1394 = vmatprep.subr.mxu0 0.0
        %1395 = vmatpush1.xpose.msra.mxu0 0.0
        %1396 = vmatprep.subr.mxu0 0.0
        %1397 = vmatpush1.xpose.msra.mxu0 0.0
        %1398 = vmatprep.subr.mxu0 0.0
        %1399 = vmatpush1.xpose.msra.mxu0 0.0
        %1400 = vmatprep.subr.mxu0 0.0
        %1401 = vmatpush1.xpose.msra.mxu0 0.0
        %1402 = vmatprep.subr.mxu0 0.0
        %1403 = vmatpush1.xpose.msra.mxu0 0.0
        %1404 = vmatprep.subr.mxu0 0.0
        %1405 = vmatpush1.xpose.msra.mxu0 0.0
        %1406 = vmatprep.subr.mxu0 0.0
        %1407 = vmatpush1.xpose.msra.mxu0 0.0
        %1408 = vmatprep.subr.mxu0 0.0
        %1409 = vmatpush1.xpose.msra.mxu0 0.0
        %1410 = vmatprep.subr.mxu0 0.0
        %1411 = vmatpush1.xpose.msra.mxu0 0.0
        %1412 = vmatprep.subr.mxu0 0.0
        %1413 = vmatpush1.xpose.msra.mxu0 0.0
        %1414 = vmatprep.subr.mxu0 0.0
        %1415 = vmatpush1.xpose.msra.mxu0 0.0
        %1416 = vmatprep.subr.mxu0 0.0
        %1417 = vmatpush1.xpose.msra.mxu0 0.0
        %1418 = vmatprep.subr.mxu0 0.0
        %1419 = vmatpush1.xpose.msra.mxu0 0.0
        %1420 = vmatprep.mubr.f32.mxu0 0.0
        %1421 = vmatmul.mubr.f32.gmra.mrb[0].mxu0 %v1351
        %v1422 = vpop.f32.mrb[0].mxu0
        %v1423 = vadd.f32 %v1084, %v1422
        %v1424 = vpop.f32.mrb[0].mxu0
        %1425 = vdwg.mxu0
        %v1427 = vsel %vm1349, %v1174, 0
        %v1430 = vsel %vm1349, %v1260, 0
        %1432 = vmatprep.subr.mxu0 0.0
        %1433 = vmatpush1.xpose.msra.mxu0 %v1430
        %1434 = vmatprep.subr.mxu0 0.0
        %1435 = vmatpush1.xpose.msra.mxu0 0.0
        %1436 = vmatprep.subr.mxu0 0.0
        %1437 = vmatpush1.xpose.msra.mxu0 0.0
        %1438 = vmatprep.subr.mxu0 0.0
        %1439 = vmatpush1.xpose.msra.mxu0 0.0
        %1440 = vmatprep.subr.mxu0 0.0
        %1441 = vmatpush1.xpose.msra.mxu0 0.0
        %1442 = vmatprep.subr.mxu0 0.0
        %1443 = vmatpush1.xpose.msra.mxu0 0.0
        %1444 = vmatprep.subr.mxu0 0.0
        %1445 = vmatpush1.xpose.msra.mxu0 0.0
        %1446 = vmatprep.subr.mxu0 0.0
        %1447 = vmatpush1.xpose.msra.mxu0 0.0
        %1448 = vmatprep.subr.mxu0 0.0
        %1449 = vmatpush1.xpose.msra.mxu0 0.0
        %1450 = vmatprep.subr.mxu0 0.0
        %1451 = vmatpush1.xpose.msra.mxu0 0.0
        %1452 = vmatprep.subr.mxu0 0.0
        %1453 = vmatpush1.xpose.msra.mxu0 0.0
        %1454 = vmatprep.subr.mxu0 0.0
        %1455 = vmatpush1.xpose.msra.mxu0 0.0
        %1456 = vmatprep.subr.mxu0 0.0
        %1457 = vmatpush1.xpose.msra.mxu0 0.0
        %1458 = vmatprep.subr.mxu0 0.0
        %1459 = vmatpush1.xpose.msra.mxu0 0.0
        %1460 = vmatprep.subr.mxu0 0.0
        %1461 = vmatpush1.xpose.msra.mxu0 0.0
        %1462 = vmatprep.subr.mxu0 0.0
        %1463 = vmatpush1.xpose.msra.mxu0 0.0
        %1464 = vmatprep.subr.mxu0 0.0
        %1465 = vmatpush1.xpose.msra.mxu0 0.0
        %1466 = vmatprep.subr.mxu0 0.0
        %1467 = vmatpush1.xpose.msra.mxu0 0.0
        %1468 = vmatprep.subr.mxu0 0.0
        %1469 = vmatpush1.xpose.msra.mxu0 0.0
        %1470 = vmatprep.subr.mxu0 0.0
        %1471 = vmatpush1.xpose.msra.mxu0 0.0
        %1472 = vmatprep.subr.mxu0 0.0
        %1473 = vmatpush1.xpose.msra.mxu0 0.0
        %1474 = vmatprep.subr.mxu0 0.0
        %1475 = vmatpush1.xpose.msra.mxu0 0.0
        %1476 = vmatprep.subr.mxu0 0.0
        %1477 = vmatpush1.xpose.msra.mxu0 0.0
        %1478 = vmatprep.subr.mxu0 0.0
        %1479 = vmatpush1.xpose.msra.mxu0 0.0
        %1480 = vmatprep.subr.mxu0 0.0
        %1481 = vmatpush1.xpose.msra.mxu0 0.0
        %1482 = vmatprep.subr.mxu0 0.0
        %1483 = vmatpush1.xpose.msra.mxu0 0.0
        %1484 = vmatprep.subr.mxu0 0.0
        %1485 = vmatpush1.xpose.msra.mxu0 0.0
        %1486 = vmatprep.subr.mxu0 0.0
        %1487 = vmatpush1.xpose.msra.mxu0 0.0
        %1488 = vmatprep.subr.mxu0 0.0
        %1489 = vmatpush1.xpose.msra.mxu0 0.0
        %1490 = vmatprep.subr.mxu0 0.0
        %1491 = vmatpush1.xpose.msra.mxu0 0.0
        %1492 = vmatprep.subr.mxu0 0.0
        %1493 = vmatpush1.xpose.msra.mxu0 0.0
        %1494 = vmatprep.subr.mxu0 0.0
        %1495 = vmatpush1.xpose.msra.mxu0 0.0
        %1496 = vmatprep.mubr.f32.mxu0 0.0
        %1497 = vmatmul.mubr.f32.gmra.mrb[0].mxu0 %v1427
        %v1498 = vpop.f32.mrb[0].mxu0
        %v1499 = vadd.f32 %v1084, %v1498
        %v1500 = vpop.f32.mrb[0].mxu0
        %1501 = vdwg.mxu0
        %v1502 = vsel %vm1349, %v1423, -inf
        %1503 = vmax.xlane.f32.xlu0 %v1502
        %v1504 = vpop.xlane.xlu0 %1503
        %v1505 = vsel %vm1349, %v1499, -inf
        %1506 = vmax.xlane.f32.xlu0 %v1505
        %v1507 = vpop.xlane.xlu0 %1506
        %v1508 = vsub.f32 %v1423, %v1504
        %v1509 = vsub.f32 %v1499, %v1507
        %v1510 = vmul.f32 %v1508, 1.442695
        %v1511 = vpow.pop %v1510
        %v1512 = vmul.f32 %v1509, 1.442695
        %v1513 = vpow.pop %v1512
        %v1514 = vsel %vm1349, %v1511, 0.0
        %1515 = vadd.xlane.f32.xlu0 %v1514
        %v1516 = vpop.xlane.xlu0 %1515
        %v1517 = vsel %vm1349, %v1513, 0.0
        %1518 = vadd.xlane.f32.xlu0 %v1517
        %v1519 = vpop.xlane.xlu0 %1518
        %v1520 = vrcp.pop %v1516
        %v1521 = vrcp.pop %v1519
        %v1522 = vmul.f32 %v1511, %v1520
        %v1523 = vmul.f32 %v1513, %v1521
        %v1525 = vsel %vm1349, %v1522, 0
        %1527 = vmatprep.subr.mxu0 0.0
        %1528 = vmatpush1.msra.mxu0 %v1341
        %1529 = vmatprep.subr.mxu0 0.0
        %1530 = vmatpush1.msra.mxu0 0.0
        %1531 = vmatprep.subr.mxu0 0.0
        %1532 = vmatpush1.msra.mxu0 0.0
        %1533 = vmatprep.subr.mxu0 0.0
        %1534 = vmatpush1.msra.mxu0 0.0
        %1535 = vmatprep.subr.mxu0 0.0
        %1536 = vmatpush1.msra.mxu0 0.0
        %1537 = vmatprep.subr.mxu0 0.0
        %1538 = vmatpush1.msra.mxu0 0.0
        %1539 = vmatprep.subr.mxu0 0.0
        %1540 = vmatpush1.msra.mxu0 0.0
        %1541 = vmatprep.subr.mxu0 0.0
        %1542 = vmatpush1.msra.mxu0 0.0
        %1543 = vmatprep.subr.mxu0 0.0
        %1544 = vmatpush1.msra.mxu0 0.0
        %1545 = vmatprep.subr.mxu0 0.0
        %1546 = vmatpush1.msra.mxu0 0.0
        %1547 = vmatprep.subr.mxu0 0.0
        %1548 = vmatpush1.msra.mxu0 0.0
        %1549 = vmatprep.subr.mxu0 0.0
        %1550 = vmatpush1.msra.mxu0 0.0
        %1551 = vmatprep.subr.mxu0 0.0
        %1552 = vmatpush1.msra.mxu0 0.0
        %1553 = vmatprep.subr.mxu0 0.0
        %1554 = vmatpush1.msra.mxu0 0.0
        %1555 = vmatprep.subr.mxu0 0.0
        %1556 = vmatpush1.msra.mxu0 0.0
        %1557 = vmatprep.subr.mxu0 0.0
        %1558 = vmatpush1.msra.mxu0 0.0
        %1559 = vmatprep.subr.mxu0 0.0
        %1560 = vmatpush1.msra.mxu0 0.0
        %1561 = vmatprep.subr.mxu0 0.0
        %1562 = vmatpush1.msra.mxu0 0.0
        %1563 = vmatprep.subr.mxu0 0.0
        %1564 = vmatpush1.msra.mxu0 0.0
        %1565 = vmatprep.subr.mxu0 0.0
        %1566 = vmatpush1.msra.mxu0 0.0
        %1567 = vmatprep.subr.mxu0 0.0
        %1568 = vmatpush1.msra.mxu0 0.0
        %1569 = vmatprep.subr.mxu0 0.0
        %1570 = vmatpush1.msra.mxu0 0.0
        %1571 = vmatprep.subr.mxu0 0.0
        %1572 = vmatpush1.msra.mxu0 0.0
        %1573 = vmatprep.subr.mxu0 0.0
        %1574 = vmatpush1.msra.mxu0 0.0
        %1575 = vmatprep.subr.mxu0 0.0
        %1576 = vmatpush1.msra.mxu0 0.0
        %1577 = vmatprep.subr.mxu0 0.0
        %1578 = vmatpush1.msra.mxu0 0.0
        %1579 = vmatprep.subr.mxu0 0.0
        %1580 = vmatpush1.msra.mxu0 0.0
        %1581 = vmatprep.subr.mxu0 0.0
        %1582 = vmatpush1.msra.mxu0 0.0
        %1583 = vmatprep.subr.mxu0 0.0
        %1584 = vmatpush1.msra.mxu0 0.0
        %1585 = vmatprep.subr.mxu0 0.0
        %1586 = vmatpush1.msra.mxu0 0.0
        %1587 = vmatprep.subr.mxu0 0.0
        %1588 = vmatpush1.msra.mxu0 0.0
        %1589 = vmatprep.subr.mxu0 0.0
        %1590 = vmatpush1.msra.mxu0 0.0
        %1591 = vmatprep.mubr.f32.mxu0 0.0
        %1592 = vmatmul.mubr.f32.gmra.mrb[0].mxu0 %v1525
        %v1593 = vpop.f32.mrb[0].mxu0
        %v1594 = vadd.f32 0.0, %v1593
        %v1595 = vpop.f32.mrb[0].mxu0
        %1596 = vdwg.mxu0
        %v1598 = vsel %vm1349, %v1523, 0
        %1600 = vmatprep.subr.mxu0 0.0
        %1601 = vmatpush1.msra.mxu0 %v1346
        %1602 = vmatprep.subr.mxu0 0.0
        %1603 = vmatpush1.msra.mxu0 0.0
        %1604 = vmatprep.subr.mxu0 0.0
        %1605 = vmatpush1.msra.mxu0 0.0
        %1606 = vmatprep.subr.mxu0 0.0
        %1607 = vmatpush1.msra.mxu0 0.0
        %1608 = vmatprep.subr.mxu0 0.0
        %1609 = vmatpush1.msra.mxu0 0.0
        %1610 = vmatprep.subr.mxu0 0.0
        %1611 = vmatpush1.msra.mxu0 0.0
        %1612 = vmatprep.subr.mxu0 0.0
        %1613 = vmatpush1.msra.mxu0 0.0
        %1614 = vmatprep.subr.mxu0 0.0
        %1615 = vmatpush1.msra.mxu0 0.0
        %1616 = vmatprep.subr.mxu0 0.0
        %1617 = vmatpush1.msra.mxu0 0.0
        %1618 = vmatprep.subr.mxu0 0.0
        %1619 = vmatpush1.msra.mxu0 0.0
        %1620 = vmatprep.subr.mxu0 0.0
        %1621 = vmatpush1.msra.mxu0 0.0
        %1622 = vmatprep.subr.mxu0 0.0
        %1623 = vmatpush1.msra.mxu0 0.0
        %1624 = vmatprep.subr.mxu0 0.0
        %1625 = vmatpush1.msra.mxu0 0.0
        %1626 = vmatprep.subr.mxu0 0.0
        %1627 = vmatpush1.msra.mxu0 0.0
        %1628 = vmatprep.subr.mxu0 0.0
        %1629 = vmatpush1.msra.mxu0 0.0
        %1630 = vmatprep.subr.mxu0 0.0
        %1631 = vmatpush1.msra.mxu0 0.0
        %1632 = vmatprep.subr.mxu0 0.0
        %1633 = vmatpush1.msra.mxu0 0.0
        %1634 = vmatprep.subr.mxu0 0.0
        %1635 = vmatpush1.msra.mxu0 0.0
        %1636 = vmatprep.subr.mxu0 0.0
        %1637 = vmatpush1.msra.mxu0 0.0
        %1638 = vmatprep.subr.mxu0 0.0
        %1639 = vmatpush1.msra.mxu0 0.0
        %1640 = vmatprep.subr.mxu0 0.0
        %1641 = vmatpush1.msra.mxu0 0.0
        %1642 = vmatprep.subr.mxu0 0.0
        %1643 = vmatpush1.msra.mxu0 0.0
        %1644 = vmatprep.subr.mxu0 0.0
        %1645 = vmatpush1.msra.mxu0 0.0
        %1646 = vmatprep.subr.mxu0 0.0
        %1647 = vmatpush1.msra.mxu0 0.0
        %1648 = vmatprep.subr.mxu0 0.0
        %1649 = vmatpush1.msra.mxu0 0.0
        %1650 = vmatprep.subr.mxu0 0.0
        %1651 = vmatpush1.msra.mxu0 0.0
        %1652 = vmatprep.subr.mxu0 0.0
        %1653 = vmatpush1.msra.mxu0 0.0
        %1654 = vmatprep.subr.mxu0 0.0
        %1655 = vmatpush1.msra.mxu0 0.0
        %1656 = vmatprep.subr.mxu0 0.0
        %1657 = vmatpush1.msra.mxu0 0.0
        %1658 = vmatprep.subr.mxu0 0.0
        %1659 = vmatpush1.msra.mxu0 0.0
        %1660 = vmatprep.subr.mxu0 0.0
        %1661 = vmatpush1.msra.mxu0 0.0
        %1662 = vmatprep.subr.mxu0 0.0
        %1663 = vmatpush1.msra.mxu0 0.0
        %1664 = vmatprep.mubr.f32.mxu0 0.0
        %1665 = vmatmul.mubr.f32.gmra.mrb[0].mxu0 %v1598
        %v1666 = vpop.f32.mrb[0].mxu0
        %v1667 = vadd.f32 0.0, %v1666
        %v1668 = vpop.f32.mrb[0].mxu0
        %1669 = vdwg.mxu0
        %v1670 = vld [vmem:[%s862] sm:$0xff]
        %s1671 = scalar_lea.vmem %s835, 32 [#allocation3]
        %v1672 = vld [vmem:[%s1671] sm:$0xff]
        %v1673 = vld [vmem:[%s1671 + $0x8] sm:$0xff]
        %v1674 = vld [vmem:[%s1671 + $0x10] sm:$0xff]
        %v1675 = vld [vmem:[%s1671 + $0x18] sm:$0xff]
        %s1676 = scalar_lea.vmem %s998, 1
        %v1677 = vld [vmem:[%s1676] sm:$0x1]
        %v1679 = vlaneseq
        %v1680 = vshrl.u32 %v1679, 7
        %v1681 = vsub.s32 0, %v1680
        %v1682 = vrot.slane %v1677, %v1681
        %1684 = vmatprep.subr.mxu0 0.0
        %1685 = vmatpush1.msra.mxu0 %v1672
        %1686 = vmatprep.subr.mxu0 0.0
        %1687 = vmatpush1.msra.mxu0 %v1673
        %1688 = vmatprep.subr.mxu0 0.0
        %1689 = vmatpush1.msra.mxu0 %v1674
        %1690 = vmatprep.subr.mxu0 0.0
        %1691 = vmatpush1.msra.mxu0 %v1675
        %1692 = vmatprep.subr.mxu0 0.0
        %1693 = vmatpush1.msra.mxu0 0.0
        %1694 = vmatprep.subr.mxu0 0.0
        %1695 = vmatpush1.msra.mxu0 0.0
        %1696 = vmatprep.subr.mxu0 0.0
        %1697 = vmatpush1.msra.mxu0 0.0
        %1698 = vmatprep.subr.mxu0 0.0
        %1699 = vmatpush1.msra.mxu0 0.0
        %1700 = vmatprep.subr.mxu0 0.0
        %1701 = vmatpush1.msra.mxu0 0.0
        %1702 = vmatprep.subr.mxu0 0.0
        %1703 = vmatpush1.msra.mxu0 0.0
        %1704 = vmatprep.subr.mxu0 0.0
        %1705 = vmatpush1.msra.mxu0 0.0
        %1706 = vmatprep.subr.mxu0 0.0
        %1707 = vmatpush1.msra.mxu0 0.0
        %1708 = vmatprep.subr.mxu0 0.0
        %1709 = vmatpush1.msra.mxu0 0.0
        %1710 = vmatprep.subr.mxu0 0.0
        %1711 = vmatpush1.msra.mxu0 0.0
        %1712 = vmatprep.subr.mxu0 0.0
        %1713 = vmatpush1.msra.mxu0 0.0
        %1714 = vmatprep.subr.mxu0 0.0
        %1715 = vmatpush1.msra.mxu0 0.0
        %1716 = vmatprep.subr.mxu0 0.0
        %1717 = vmatpush1.msra.mxu0 0.0
        %1718 = vmatprep.subr.mxu0 0.0
        %1719 = vmatpush1.msra.mxu0 0.0
        %1720 = vmatprep.subr.mxu0 0.0
        %1721 = vmatpush1.msra.mxu0 0.0
        %1722 = vmatprep.subr.mxu0 0.0
        %1723 = vmatpush1.msra.mxu0 0.0
        %1724 = vmatprep.subr.mxu0 0.0
        %1725 = vmatpush1.msra.mxu0 0.0
        %1726 = vmatprep.subr.mxu0 0.0
        %1727 = vmatpush1.msra.mxu0 0.0
        %1728 = vmatprep.subr.mxu0 0.0
        %1729 = vmatpush1.msra.mxu0 0.0
        %1730 = vmatprep.subr.mxu0 0.0
        %1731 = vmatpush1.msra.mxu0 0.0
        %1732 = vmatprep.subr.mxu0 0.0
        %1733 = vmatpush1.msra.mxu0 0.0
        %1734 = vmatprep.subr.mxu0 0.0
        %1735 = vmatpush1.msra.mxu0 0.0
        %1736 = vmatprep.subr.mxu0 0.0
        %1737 = vmatpush1.msra.mxu0 0.0
        %1738 = vmatprep.subr.mxu0 0.0
        %1739 = vmatpush1.msra.mxu0 0.0
        %1740 = vmatprep.subr.mxu0 0.0
        %1741 = vmatpush1.msra.mxu0 0.0
        %1742 = vmatprep.subr.mxu0 0.0
        %1743 = vmatpush1.msra.mxu0 0.0
        %1744 = vmatprep.subr.mxu0 0.0
        %1745 = vmatpush1.msra.mxu0 0.0
        %1746 = vmatprep.subr.mxu0 0.0
        %1747 = vmatpush1.msra.mxu0 0.0
        %1748 = vmatprep.mubr.f32.mxu0 0.0
        %1749 = vmatmul.mubr.f32.gmra.mrb[0].mxu0 %v1097
        %v1750 = vpop.f32.mrb[0].mxu0
        %v1751 = vadd.f32 %v1682, %v1750
        %v1752 = vpop.f32.mrb[0].mxu0
        %1753 = vmatprep.mubr.f32.mxu0 0.0
        %1754 = vmatmul.mubr.f32.gmra.mrb[0].mxu0 %v1100
        %v1755 = vpop.f32.mrb[0].mxu0
        %v1756 = vadd.f32 %v1682, %v1755
        %v1757 = vpop.f32.mrb[0].mxu0
        %1758 = vdwg.mxu0
        %s1759 = scalar_lea.vmem %s844, 32 [#allocation5]
        %v1760 = vld [vmem:[%s1759] sm:$0xff]
        %v1761 = vld [vmem:[%s1759 + $0x8] sm:$0xff]
        %v1762 = vld [vmem:[%s1759 + $0x10] sm:$0xff]
        %v1763 = vld [vmem:[%s1759 + $0x18] sm:$0xff]
        %s1764 = scalar_lea.vmem %s1002, 1
        %v1765 = vld [vmem:[%s1764] sm:$0x1]
        %v1767 = vlaneseq
        %v1768 = vshrl.u32 %v1767, 7
        %v1769 = vsub.s32 0, %v1768
        %v1770 = vrot.slane %v1765, %v1769
        %1772 = vmatprep.subr.mxu0 0.0
        %1773 = vmatpush1.msra.mxu0 %v1760
        %1774 = vmatprep.subr.mxu0 0.0
        %1775 = vmatpush1.msra.mxu0 %v1761
        %1776 = vmatprep.subr.mxu0 0.0
        %1777 = vmatpush1.msra.mxu0 %v1762
        %1778 = vmatprep.subr.mxu0 0.0
        %1779 = vmatpush1.msra.mxu0 %v1763
        %1780 = vmatprep.subr.mxu0 0.0
        %1781 = vmatpush1.msra.mxu0 0.0
        %1782 = vmatprep.subr.mxu0 0.0
        %1783 = vmatpush1.msra.mxu0 0.0
        %1784 = vmatprep.subr.mxu0 0.0
        %1785 = vmatpush1.msra.mxu0 0.0
        %1786 = vmatprep.subr.mxu0 0.0
        %1787 = vmatpush1.msra.mxu0 0.0
        %1788 = vmatprep.subr.mxu0 0.0
        %1789 = vmatpush1.msra.mxu0 0.0
        %1790 = vmatprep.subr.mxu0 0.0
        %1791 = vmatpush1.msra.mxu0 0.0
        %1792 = vmatprep.subr.mxu0 0.0
        %1793 = vmatpush1.msra.mxu0 0.0
        %1794 = vmatprep.subr.mxu0 0.0
        %1795 = vmatpush1.msra.mxu0 0.0
        %1796 = vmatprep.subr.mxu0 0.0
        %1797 = vmatpush1.msra.mxu0 0.0
        %1798 = vmatprep.subr.mxu0 0.0
        %1799 = vmatpush1.msra.mxu0 0.0
        %1800 = vmatprep.subr.mxu0 0.0
        %1801 = vmatpush1.msra.mxu0 0.0
        %1802 = vmatprep.subr.mxu0 0.0
        %1803 = vmatpush1.msra.mxu0 0.0
        %1804 = vmatprep.subr.mxu0 0.0
        %1805 = vmatpush1.msra.mxu0 0.0
        %1806 = vmatprep.subr.mxu0 0.0
        %1807 = vmatpush1.msra.mxu0 0.0
        %1808 = vmatprep.subr.mxu0 0.0
        %1809 = vmatpush1.msra.mxu0 0.0
        %1810 = vmatprep.subr.mxu0 0.0
        %1811 = vmatpush1.msra.mxu0 0.0
        %1812 = vmatprep.subr.mxu0 0.0
        %1813 = vmatpush1.msra.mxu0 0.0
        %1814 = vmatprep.subr.mxu0 0.0
        %1815 = vmatpush1.msra.mxu0 0.0
        %1816 = vmatprep.subr.mxu0 0.0
        %1817 = vmatpush1.msra.mxu0 0.0
        %1818 = vmatprep.subr.mxu0 0.0
        %1819 = vmatpush1.msra.mxu0 0.0
        %1820 = vmatprep.subr.mxu0 0.0
        %1821 = vmatpush1.msra.mxu0 0.0
        %1822 = vmatprep.subr.mxu0 0.0
        %1823 = vmatpush1.msra.mxu0 0.0
        %1824 = vmatprep.subr.mxu0 0.0
        %1825 = vmatpush1.msra.mxu0 0.0
        %1826 = vmatprep.subr.mxu0 0.0
        %1827 = vmatpush1.msra.mxu0 0.0
        %1828 = vmatprep.subr.mxu0 0.0
        %1829 = vmatpush1.msra.mxu0 0.0
        %1830 = vmatprep.subr.mxu0 0.0
        %1831 = vmatpush1.msra.mxu0 0.0
        %1832 = vmatprep.subr.mxu0 0.0
        %1833 = vmatpush1.msra.mxu0 0.0
        %1834 = vmatprep.subr.mxu0 0.0
        %1835 = vmatpush1.msra.mxu0 0.0
        %1836 = vmatprep.mubr.f32.mxu0 0.0
        %1837 = vmatmul.mubr.f32.gmra.mrb[0].mxu0 %v1097
        %v1838 = vpop.f32.mrb[0].mxu0
        %v1839 = vadd.f32 %v1770, %v1838
        %v1840 = vpop.f32.mrb[0].mxu0
        %1841 = vmatprep.mubr.f32.mxu0 0.0
        %1842 = vmatmul.mubr.f32.gmra.mrb[0].mxu0 %v1100
        %v1843 = vpop.f32.mrb[0].mxu0
        %v1844 = vadd.f32 %v1770, %v1843
        %v1845 = vpop.f32.mrb[0].mxu0
        %1846 = vdwg.mxu0
        %s1847 = scalar_lea.vmem %s853, 32 [#allocation7]
        %v1848 = vld [vmem:[%s1847] sm:$0xff]
        %v1849 = vld [vmem:[%s1847 + $0x8] sm:$0xff]
        %v1850 = vld [vmem:[%s1847 + $0x10] sm:$0xff]
        %v1851 = vld [vmem:[%s1847 + $0x18] sm:$0xff]
        %s1852 = scalar_lea.vmem %s1006, 1
        %v1853 = vld [vmem:[%s1852] sm:$0x1]
        %v1855 = vlaneseq
        %v1856 = vshrl.u32 %v1855, 7
        %v1857 = vsub.s32 0, %v1856
        %v1858 = vrot.slane %v1853, %v1857
        %1860 = vmatprep.subr.mxu0 0.0
        %1861 = vmatpush1.msra.mxu0 %v1848
        %1862 = vmatprep.subr.mxu0 0.0
        %1863 = vmatpush1.msra.mxu0 %v1849
        %1864 = vmatprep.subr.mxu0 0.0
        %1865 = vmatpush1.msra.mxu0 %v1850
        %1866 = vmatprep.subr.mxu0 0.0
        %1867 = vmatpush1.msra.mxu0 %v1851
        %1868 = vmatprep.subr.mxu0 0.0
        %1869 = vmatpush1.msra.mxu0 0.0
        %1870 = vmatprep.subr.mxu0 0.0
        %1871 = vmatpush1.msra.mxu0 0.0
        %1872 = vmatprep.subr.mxu0 0.0
        %1873 = vmatpush1.msra.mxu0 0.0
        %1874 = vmatprep.subr.mxu0 0.0
        %1875 = vmatpush1.msra.mxu0 0.0
        %1876 = vmatprep.subr.mxu0 0.0
        %1877 = vmatpush1.msra.mxu0 0.0
        %1878 = vmatprep.subr.mxu0 0.0
        %1879 = vmatpush1.msra.mxu0 0.0
        %1880 = vmatprep.subr.mxu0 0.0
        %1881 = vmatpush1.msra.mxu0 0.0
        %1882 = vmatprep.subr.mxu0 0.0
        %1883 = vmatpush1.msra.mxu0 0.0
        %1884 = vmatprep.subr.mxu0 0.0
        %1885 = vmatpush1.msra.mxu0 0.0
        %1886 = vmatprep.subr.mxu0 0.0
        %1887 = vmatpush1.msra.mxu0 0.0
        %1888 = vmatprep.subr.mxu0 0.0
        %1889 = vmatpush1.msra.mxu0 0.0
        %1890 = vmatprep.subr.mxu0 0.0
        %1891 = vmatpush1.msra.mxu0 0.0
        %1892 = vmatprep.subr.mxu0 0.0
        %1893 = vmatpush1.msra.mxu0 0.0
        %1894 = vmatprep.subr.mxu0 0.0
        %1895 = vmatpush1.msra.mxu0 0.0
        %1896 = vmatprep.subr.mxu0 0.0
        %1897 = vmatpush1.msra.mxu0 0.0
        %1898 = vmatprep.subr.mxu0 0.0
        %1899 = vmatpush1.msra.mxu0 0.0
        %1900 = vmatprep.subr.mxu0 0.0
        %1901 = vmatpush1.msra.mxu0 0.0
        %1902 = vmatprep.subr.mxu0 0.0
        %1903 = vmatpush1.msra.mxu0 0.0
        %1904 = vmatprep.subr.mxu0 0.0
        %1905 = vmatpush1.msra.mxu0 0.0
        %1906 = vmatprep.subr.mxu0 0.0
        %1907 = vmatpush1.msra.mxu0 0.0
        %1908 = vmatprep.subr.mxu0 0.0
        %1909 = vmatpush1.msra.mxu0 0.0
        %1910 = vmatprep.subr.mxu0 0.0
        %1911 = vmatpush1.msra.mxu0 0.0
        %1912 = vmatprep.subr.mxu0 0.0
        %1913 = vmatpush1.msra.mxu0 0.0
        %1914 = vmatprep.subr.mxu0 0.0
        %1915 = vmatpush1.msra.mxu0 0.0
        %1916 = vmatprep.subr.mxu0 0.0
        %1917 = vmatpush1.msra.mxu0 0.0
        %1918 = vmatprep.subr.mxu0 0.0
        %1919 = vmatpush1.msra.mxu0 0.0
        %1920 = vmatprep.subr.mxu0 0.0
        %1921 = vmatpush1.msra.mxu0 0.0
        %1922 = vmatprep.subr.mxu0 0.0
        %1923 = vmatpush1.msra.mxu0 0.0
        %1924 = vmatprep.mubr.f32.mxu0 0.0
        %1925 = vmatmul.mubr.f32.gmra.mrb[0].mxu0 %v1097
        %v1926 = vpop.f32.mrb[0].mxu0
        %v1927 = vadd.f32 %v1858, %v1926
        %v1928 = vpop.f32.mrb[0].mxu0
        %1929 = vmatprep.mubr.f32.mxu0 0.0
        %1930 = vmatmul.mubr.f32.gmra.mrb[0].mxu0 %v1100
        %v1931 = vpop.f32.mrb[0].mxu0
        %v1932 = vadd.f32 %v1858, %v1931
        %v1933 = vpop.f32.mrb[0].mxu0
        %1934 = vdwg.mxu0
        %v1936 = vsel %vm1349, %v1751, 0
        %v1939 = vsel %vm1349, %v1839, 0
        %1941 = vmatprep.subr.mxu0 0.0
        %1942 = vmatpush1.xpose.msra.mxu0 %v1939
        %1943 = vmatprep.subr.mxu0 0.0
        %1944 = vmatpush1.xpose.msra.mxu0 0.0
        %1945 = vmatprep.subr.mxu0 0.0
        %1946 = vmatpush1.xpose.msra.mxu0 0.0
        %1947 = vmatprep.subr.mxu0 0.0
        %1948 = vmatpush1.xpose.msra.mxu0 0.0
        %1949 = vmatprep.subr.mxu0 0.0
        %1950 = vmatpush1.xpose.msra.mxu0 0.0
        %1951 = vmatprep.subr.mxu0 0.0
        %1952 = vmatpush1.xpose.msra.mxu0 0.0
        %1953 = vmatprep.subr.mxu0 0.0
        %1954 = vmatpush1.xpose.msra.mxu0 0.0
        %1955 = vmatprep.subr.mxu0 0.0
        %1956 = vmatpush1.xpose.msra.mxu0 0.0
        %1957 = vmatprep.subr.mxu0 0.0
        %1958 = vmatpush1.xpose.msra.mxu0 0.0
        %1959 = vmatprep.subr.mxu0 0.0
        %1960 = vmatpush1.xpose.msra.mxu0 0.0
        %1961 = vmatprep.subr.mxu0 0.0
        %1962 = vmatpush1.xpose.msra.mxu0 0.0
        %1963 = vmatprep.subr.mxu0 0.0
        %1964 = vmatpush1.xpose.msra.mxu0 0.0
        %1965 = vmatprep.subr.mxu0 0.0
        %1966 = vmatpush1.xpose.msra.mxu0 0.0
        %1967 = vmatprep.subr.mxu0 0.0
        %1968 = vmatpush1.xpose.msra.mxu0 0.0
        %1969 = vmatprep.subr.mxu0 0.0
        %1970 = vmatpush1.xpose.msra.mxu0 0.0
        %1971 = vmatprep.subr.mxu0 0.0
        %1972 = vmatpush1.xpose.msra.mxu0 0.0
        %1973 = vmatprep.subr.mxu0 0.0
        %1974 = vmatpush1.xpose.msra.mxu0 0.0
        %1975 = vmatprep.subr.mxu0 0.0
        %1976 = vmatpush1.xpose.msra.mxu0 0.0
        %1977 = vmatprep.subr.mxu0 0.0
        %1978 = vmatpush1.xpose.msra.mxu0 0.0
        %1979 = vmatprep.subr.mxu0 0.0
        %1980 = vmatpush1.xpose.msra.mxu0 0.0
        %1981 = vmatprep.subr.mxu0 0.0
        %1982 = vmatpush1.xpose.msra.mxu0 0.0
        %1983 = vmatprep.subr.mxu0 0.0
        %1984 = vmatpush1.xpose.msra.mxu0 0.0
        %1985 = vmatprep.subr.mxu0 0.0
        %1986 = vmatpush1.xpose.msra.mxu0 0.0
        %1987 = vmatprep.subr.mxu0 0.0
        %1988 = vmatpush1.xpose.msra.mxu0 0.0
        %1989 = vmatprep.subr.mxu0 0.0
        %1990 = vmatpush1.xpose.msra.mxu0 0.0
        %1991 = vmatprep.subr.mxu0 0.0
        %1992 = vmatpush1.xpose.msra.mxu0 0.0
        %1993 = vmatprep.subr.mxu0 0.0
        %1994 = vmatpush1.xpose.msra.mxu0 0.0
        %1995 = vmatprep.subr.mxu0 0.0
        %1996 = vmatpush1.xpose.msra.mxu0 0.0
        %1997 = vmatprep.subr.mxu0 0.0
        %1998 = vmatpush1.xpose.msra.mxu0 0.0
        %1999 = vmatprep.subr.mxu0 0.0
        %2000 = vmatpush1.xpose.msra.mxu0 0.0
        %2001 = vmatprep.subr.mxu0 0.0
        %2002 = vmatpush1.xpose.msra.mxu0 0.0
        %2003 = vmatprep.subr.mxu0 0.0
        %2004 = vmatpush1.xpose.msra.mxu0 0.0
        %2005 = vmatprep.mubr.f32.mxu0 0.0
        %2006 = vmatmul.mubr.f32.gmra.mrb[0].mxu0 %v1936
        %v2007 = vpop.f32.mrb[0].mxu0
        %v2008 = vadd.f32 %v1084, %v2007
        %v2009 = vpop.f32.mrb[0].mxu0
        %2010 = vdwg.mxu0
        %v2012 = vsel %vm1349, %v1756, 0
        %v2015 = vsel %vm1349, %v1844, 0
        %2017 = vmatprep.subr.mxu0 0.0
        %2018 = vmatpush1.xpose.msra.mxu0 %v2015
        %2019 = vmatprep.subr.mxu0 0.0
        %2020 = vmatpush1.xpose.msra.mxu0 0.0
        %2021 = vmatprep.subr.mxu0 0.0
        %2022 = vmatpush1.xpose.msra.mxu0 0.0
        %2023 = vmatprep.subr.mxu0 0.0
        %2024 = vmatpush1.xpose.msra.mxu0 0.0
        %2025 = vmatprep.subr.mxu0 0.0
        %2026 = vmatpush1.xpose.msra.mxu0 0.0
        %2027 = vmatprep.subr.mxu0 0.0
        %2028 = vmatpush1.xpose.msra.mxu0 0.0
        %2029 = vmatprep.subr.mxu0 0.0
        %2030 = vmatpush1.xpose.msra.mxu0 0.0
        %2031 = vmatprep.subr.mxu0 0.0
        %2032 = vmatpush1.xpose.msra.mxu0 0.0
        %2033 = vmatprep.subr.mxu0 0.0
        %2034 = vmatpush1.xpose.msra.mxu0 0.0
        %2035 = vmatprep.subr.mxu0 0.0
        %2036 = vmatpush1.xpose.msra.mxu0 0.0
        %2037 = vmatprep.subr.mxu0 0.0
        %2038 = vmatpush1.xpose.msra.mxu0 0.0
        %2039 = vmatprep.subr.mxu0 0.0
        %2040 = vmatpush1.xpose.msra.mxu0 0.0
        %2041 = vmatprep.subr.mxu0 0.0
        %2042 = vmatpush1.xpose.msra.mxu0 0.0
        %2043 = vmatprep.subr.mxu0 0.0
        %2044 = vmatpush1.xpose.msra.mxu0 0.0
        %2045 = vmatprep.subr.mxu0 0.0
        %2046 = vmatpush1.xpose.msra.mxu0 0.0
        %2047 = vmatprep.subr.mxu0 0.0
        %2048 = vmatpush1.xpose.msra.mxu0 0.0
        %2049 = vmatprep.subr.mxu0 0.0
        %2050 = vmatpush1.xpose.msra.mxu0 0.0
        %2051 = vmatprep.subr.mxu0 0.0
        %2052 = vmatpush1.xpose.msra.mxu0 0.0
        %2053 = vmatprep.subr.mxu0 0.0
        %2054 = vmatpush1.xpose.msra.mxu0 0.0
        %2055 = vmatprep.subr.mxu0 0.0
        %2056 = vmatpush1.xpose.msra.mxu0 0.0
        %2057 = vmatprep.subr.mxu0 0.0
        %2058 = vmatpush1.xpose.msra.mxu0 0.0
        %2059 = vmatprep.subr.mxu0 0.0
        %2060 = vmatpush1.xpose.msra.mxu0 0.0
        %2061 = vmatprep.subr.mxu0 0.0
        %2062 = vmatpush1.xpose.msra.mxu0 0.0
        %2063 = vmatprep.subr.mxu0 0.0
        %2064 = vmatpush1.xpose.msra.mxu0 0.0
        %2065 = vmatprep.subr.mxu0 0.0
        %2066 = vmatpush1.xpose.msra.mxu0 0.0
        %2067 = vmatprep.subr.mxu0 0.0
        %2068 = vmatpush1.xpose.msra.mxu0 0.0
        %2069 = vmatprep.subr.mxu0 0.0
        %2070 = vmatpush1.xpose.msra.mxu0 0.0
        %2071 = vmatprep.subr.mxu0 0.0
        %2072 = vmatpush1.xpose.msra.mxu0 0.0
        %2073 = vmatprep.subr.mxu0 0.0
        %2074 = vmatpush1.xpose.msra.mxu0 0.0
        %2075 = vmatprep.subr.mxu0 0.0
        %2076 = vmatpush1.xpose.msra.mxu0 0.0
        %2077 = vmatprep.subr.mxu0 0.0
        %2078 = vmatpush1.xpose.msra.mxu0 0.0
        %2079 = vmatprep.subr.mxu0 0.0
        %2080 = vmatpush1.xpose.msra.mxu0 0.0
        %2081 = vmatprep.mubr.f32.mxu0 0.0
        %2082 = vmatmul.mubr.f32.gmra.mrb[0].mxu0 %v2012
        %v2083 = vpop.f32.mrb[0].mxu0
        %v2084 = vadd.f32 %v1084, %v2083
        %v2085 = vpop.f32.mrb[0].mxu0
        %2086 = vdwg.mxu0
        %v2087 = vsel %vm1349, %v2008, -inf
        %2088 = vmax.xlane.f32.xlu0 %v2087
        %v2089 = vpop.xlane.xlu0 %2088
        %v2090 = vsel %vm1349, %v2084, -inf
        %2091 = vmax.xlane.f32.xlu0 %v2090
        %v2092 = vpop.xlane.xlu0 %2091
        %v2093 = vsub.f32 %v2008, %v2089
        %v2094 = vsub.f32 %v2084, %v2092
        %v2095 = vmul.f32 %v2093, 1.442695
        %v2096 = vpow.pop %v2095
        %v2097 = vmul.f32 %v2094, 1.442695
        %v2098 = vpow.pop %v2097
        %v2099 = vsel %vm1349, %v2096, 0.0
        %2100 = vadd.xlane.f32.xlu0 %v2099
        %v2101 = vpop.xlane.xlu0 %2100
        %v2102 = vsel %vm1349, %v2098, 0.0
        %2103 = vadd.xlane.f32.xlu0 %v2102
        %v2104 = vpop.xlane.xlu0 %2103
        %v2105 = vrcp.pop %v2101
        %v2106 = vrcp.pop %v2104
        %v2107 = vmul.f32 %v2096, %v2105
        %v2108 = vmul.f32 %v2098, %v2106
        %v2110 = vsel %vm1349, %v2107, 0
        %2112 = vmatprep.subr.mxu0 0.0
        %2113 = vmatpush1.msra.mxu0 %v1927
        %2114 = vmatprep.subr.mxu0 0.0
        %2115 = vmatpush1.msra.mxu0 0.0
        %2116 = vmatprep.subr.mxu0 0.0
        %2117 = vmatpush1.msra.mxu0 0.0
        %2118 = vmatprep.subr.mxu0 0.0
        %2119 = vmatpush1.msra.mxu0 0.0
        %2120 = vmatprep.subr.mxu0 0.0
        %2121 = vmatpush1.msra.mxu0 0.0
        %2122 = vmatprep.subr.mxu0 0.0
        %2123 = vmatpush1.msra.mxu0 0.0
        %2124 = vmatprep.subr.mxu0 0.0
        %2125 = vmatpush1.msra.mxu0 0.0
        %2126 = vmatprep.subr.mxu0 0.0
        %2127 = vmatpush1.msra.mxu0 0.0
        %2128 = vmatprep.subr.mxu0 0.0
        %2129 = vmatpush1.msra.mxu0 0.0
        %2130 = vmatprep.subr.mxu0 0.0
        %2131 = vmatpush1.msra.mxu0 0.0
        %2132 = vmatprep.subr.mxu0 0.0
        %2133 = vmatpush1.msra.mxu0 0.0
        %2134 = vmatprep.subr.mxu0 0.0
        %2135 = vmatpush1.msra.mxu0 0.0
        %2136 = vmatprep.subr.mxu0 0.0
        %2137 = vmatpush1.msra.mxu0 0.0
        %2138 = vmatprep.subr.mxu0 0.0
        %2139 = vmatpush1.msra.mxu0 0.0
        %2140 = vmatprep.subr.mxu0 0.0
        %2141 = vmatpush1.msra.mxu0 0.0
        %2142 = vmatprep.subr.mxu0 0.0
        %2143 = vmatpush1.msra.mxu0 0.0
        %2144 = vmatprep.subr.mxu0 0.0
        %2145 = vmatpush1.msra.mxu0 0.0
        %2146 = vmatprep.subr.mxu0 0.0
        %2147 = vmatpush1.msra.mxu0 0.0
        %2148 = vmatprep.subr.mxu0 0.0
        %2149 = vmatpush1.msra.mxu0 0.0
        %2150 = vmatprep.subr.mxu0 0.0
        %2151 = vmatpush1.msra.mxu0 0.0
        %2152 = vmatprep.subr.mxu0 0.0
        %2153 = vmatpush1.msra.mxu0 0.0
        %2154 = vmatprep.subr.mxu0 0.0
        %2155 = vmatpush1.msra.mxu0 0.0
        %2156 = vmatprep.subr.mxu0 0.0
        %2157 = vmatpush1.msra.mxu0 0.0
        %2158 = vmatprep.subr.mxu0 0.0
        %2159 = vmatpush1.msra.mxu0 0.0
        %2160 = vmatprep.subr.mxu0 0.0
        %2161 = vmatpush1.msra.mxu0 0.0
        %2162 = vmatprep.subr.mxu0 0.0
        %2163 = vmatpush1.msra.mxu0 0.0
        %2164 = vmatprep.subr.mxu0 0.0
        %2165 = vmatpush1.msra.mxu0 0.0
        %2166 = vmatprep.subr.mxu0 0.0
        %2167 = vmatpush1.msra.mxu0 0.0
        %2168 = vmatprep.subr.mxu0 0.0
        %2169 = vmatpush1.msra.mxu0 0.0
        %2170 = vmatprep.subr.mxu0 0.0
        %2171 = vmatpush1.msra.mxu0 0.0
        %2172 = vmatprep.subr.mxu0 0.0
        %2173 = vmatpush1.msra.mxu0 0.0
        %2174 = vmatprep.subr.mxu0 0.0
        %2175 = vmatpush1.msra.mxu0 0.0
        %2176 = vmatprep.mubr.f32.mxu0 0.0
        %2177 = vmatmul.mubr.f32.gmra.mrb[0].mxu0 %v2110
        %v2178 = vpop.f32.mrb[0].mxu0
        %v2179 = vadd.f32 0.0, %v2178
        %v2180 = vpop.f32.mrb[0].mxu0
        %2181 = vdwg.mxu0
        %v2183 = vsel %vm1349, %v2108, 0
        %2185 = vmatprep.subr.mxu0 0.0
        %2186 = vmatpush1.msra.mxu0 %v1932
        %2187 = vmatprep.subr.mxu0 0.0
        %2188 = vmatpush1.msra.mxu0 0.0
        %2189 = vmatprep.subr.mxu0 0.0
        %2190 = vmatpush1.msra.mxu0 0.0
        %2191 = vmatprep.subr.mxu0 0.0
        %2192 = vmatpush1.msra.mxu0 0.0
        %2193 = vmatprep.subr.mxu0 0.0
        %2194 = vmatpush1.msra.mxu0 0.0
        %2195 = vmatprep.subr.mxu0 0.0
        %2196 = vmatpush1.msra.mxu0 0.0
        %2197 = vmatprep.subr.mxu0 0.0
        %2198 = vmatpush1.msra.mxu0 0.0
        %2199 = vmatprep.subr.mxu0 0.0
        %2200 = vmatpush1.msra.mxu0 0.0
        %2201 = vmatprep.subr.mxu0 0.0
        %2202 = vmatpush1.msra.mxu0 0.0
        %2203 = vmatprep.subr.mxu0 0.0
        %2204 = vmatpush1.msra.mxu0 0.0
        %2205 = vmatprep.subr.mxu0 0.0
        %2206 = vmatpush1.msra.mxu0 0.0
        %2207 = vmatprep.subr.mxu0 0.0
        %2208 = vmatpush1.msra.mxu0 0.0
        %2209 = vmatprep.subr.mxu0 0.0
        %2210 = vmatpush1.msra.mxu0 0.0
        %2211 = vmatprep.subr.mxu0 0.0
        %2212 = vmatpush1.msra.mxu0 0.0
        %2213 = vmatprep.subr.mxu0 0.0
        %2214 = vmatpush1.msra.mxu0 0.0
        %2215 = vmatprep.subr.mxu0 0.0
        %2216 = vmatpush1.msra.mxu0 0.0
        %2217 = vmatprep.subr.mxu0 0.0
        %2218 = vmatpush1.msra.mxu0 0.0
        %2219 = vmatprep.subr.mxu0 0.0
        %2220 = vmatpush1.msra.mxu0 0.0
        %2221 = vmatprep.subr.mxu0 0.0
        %2222 = vmatpush1.msra.mxu0 0.0
        %2223 = vmatprep.subr.mxu0 0.0
        %2224 = vmatpush1.msra.mxu0 0.0
        %2225 = vmatprep.subr.mxu0 0.0
        %2226 = vmatpush1.msra.mxu0 0.0
        %2227 = vmatprep.subr.mxu0 0.0
        %2228 = vmatpush1.msra.mxu0 0.0
        %2229 = vmatprep.subr.mxu0 0.0
        %2230 = vmatpush1.msra.mxu0 0.0
        %2231 = vmatprep.subr.mxu0 0.0
        %2232 = vmatpush1.msra.mxu0 0.0
        %2233 = vmatprep.subr.mxu0 0.0
        %2234 = vmatpush1.msra.mxu0 0.0
        %2235 = vmatprep.subr.mxu0 0.0
        %2236 = vmatpush1.msra.mxu0 0.0
        %2237 = vmatprep.subr.mxu0 0.0
        %2238 = vmatpush1.msra.mxu0 0.0
        %2239 = vmatprep.subr.mxu0 0.0
        %2240 = vmatpush1.msra.mxu0 0.0
        %2241 = vmatprep.subr.mxu0 0.0
        %2242 = vmatpush1.msra.mxu0 0.0
        %2243 = vmatprep.subr.mxu0 0.0
        %2244 = vmatpush1.msra.mxu0 0.0
        %2245 = vmatprep.subr.mxu0 0.0
        %2246 = vmatpush1.msra.mxu0 0.0
        %2247 = vmatprep.subr.mxu0 0.0
        %2248 = vmatpush1.msra.mxu0 0.0
        %2249 = vmatprep.mubr.f32.mxu0 0.0
        %2250 = vmatmul.mubr.f32.gmra.mrb[0].mxu0 %v2183
        %v2251 = vpop.f32.mrb[0].mxu0
        %v2252 = vadd.f32 0.0, %v2251
        %v2253 = vpop.f32.mrb[0].mxu0
        %2254 = vdwg.mxu0
        %s2255 = scalar_lea.vmem %s862, 8 [#allocation8]
        %v2256 = vld [vmem:[%s2255] sm:$0xff]
        %v2258 = vsel %vm1349, %v2179, 0
        %v2261 = vsel %vm1349, %v2252, 0
        %2263 = vmatprep.subr.mxu0 0.0
        %2264 = vmatpush1.msra.mxu0 %v2256
        %2265 = vmatprep.subr.mxu0 0.0
        %2266 = vmatpush1.msra.mxu0 0.0
        %2267 = vmatprep.subr.mxu0 0.0
        %2268 = vmatpush1.msra.mxu0 0.0
        %2269 = vmatprep.subr.mxu0 0.0
        %2270 = vmatpush1.msra.mxu0 0.0
        %2271 = vmatprep.subr.mxu0 0.0
        %2272 = vmatpush1.msra.mxu0 0.0
        %2273 = vmatprep.subr.mxu0 0.0
        %2274 = vmatpush1.msra.mxu0 0.0
        %2275 = vmatprep.subr.mxu0 0.0
        %2276 = vmatpush1.msra.mxu0 0.0
        %2277 = vmatprep.subr.mxu0 0.0
        %2278 = vmatpush1.msra.mxu0 0.0
        %2279 = vmatprep.subr.mxu0 0.0
        %2280 = vmatpush1.msra.mxu0 0.0
        %2281 = vmatprep.subr.mxu0 0.0
        %2282 = vmatpush1.msra.mxu0 0.0
        %2283 = vmatprep.subr.mxu0 0.0
        %2284 = vmatpush1.msra.mxu0 0.0
        %2285 = vmatprep.subr.mxu0 0.0
        %2286 = vmatpush1.msra.mxu0 0.0
        %2287 = vmatprep.subr.mxu0 0.0
        %2288 = vmatpush1.msra.mxu0 0.0
        %2289 = vmatprep.subr.mxu0 0.0
        %2290 = vmatpush1.msra.mxu0 0.0
        %2291 = vmatprep.subr.mxu0 0.0
        %2292 = vmatpush1.msra.mxu0 0.0
        %2293 = vmatprep.subr.mxu0 0.0
        %2294 = vmatpush1.msra.mxu0 0.0
        %2295 = vmatprep.subr.mxu0 0.0
        %2296 = vmatpush1.msra.mxu0 0.0
        %2297 = vmatprep.subr.mxu0 0.0
        %2298 = vmatpush1.msra.mxu0 0.0
        %2299 = vmatprep.subr.mxu0 0.0
        %2300 = vmatpush1.msra.mxu0 0.0
        %2301 = vmatprep.subr.mxu0 0.0
        %2302 = vmatpush1.msra.mxu0 0.0
        %2303 = vmatprep.subr.mxu0 0.0
        %2304 = vmatpush1.msra.mxu0 0.0
        %2305 = vmatprep.subr.mxu0 0.0
        %2306 = vmatpush1.msra.mxu0 0.0
        %2307 = vmatprep.subr.mxu0 0.0
        %2308 = vmatpush1.msra.mxu0 0.0
        %2309 = vmatprep.subr.mxu0 0.0
        %2310 = vmatpush1.msra.mxu0 0.0
        %2311 = vmatprep.subr.mxu0 0.0
        %2312 = vmatpush1.msra.mxu0 0.0
        %2313 = vmatprep.subr.mxu0 0.0
        %2314 = vmatpush1.msra.mxu0 0.0
        %2315 = vmatprep.subr.mxu0 0.0
        %2316 = vmatpush1.msra.mxu0 0.0
        %2317 = vmatprep.subr.mxu0 0.0
        %2318 = vmatpush1.msra.mxu0 0.0
        %2319 = vmatprep.subr.mxu0 0.0
        %2320 = vmatpush1.msra.mxu0 0.0
        %2321 = vmatprep.subr.mxu0 0.0
        %2322 = vmatpush1.msra.mxu0 0.0
        %2323 = vmatprep.subr.mxu0 0.0
        %2324 = vmatpush1.msra.mxu0 0.0
        %2325 = vmatprep.subr.mxu0 0.0
        %2326 = vmatpush1.msra.mxu0 0.0
        %2327 = vmatprep.mubr.f32.mxu0 0.0
        %2328 = vmatmul.mubr.f32.gmra.mrb[0].mxu0 %v2258
        %v2329 = vpop.f32.mrb[0].mxu0
        %v2330 = vadd.f32 0.0, %v2329
        %v2331 = vpop.f32.mrb[0].mxu0
        %2332 = vmatprep.mubr.f32.mxu0 0.0
        %2333 = vmatmul.mubr.f32.gmra.mrb[0].mxu0 %v2261
        %v2334 = vpop.f32.mrb[0].mxu0
        %v2335 = vadd.f32 0.0, %v2334
        %v2336 = vpop.f32.mrb[0].mxu0
        %2337 = vdwg.mxu0
        %v2339 = vsel %vm1349, %v1594, 0
        %v2342 = vsel %vm1349, %v1667, 0
        %2344 = vmatprep.subr.mxu0 0.0
        %2345 = vmatpush1.msra.mxu0 %v1670
        %2346 = vmatprep.subr.mxu0 0.0
        %2347 = vmatpush1.msra.mxu0 0.0
        %2348 = vmatprep.subr.mxu0 0.0
        %2349 = vmatpush1.msra.mxu0 0.0
        %2350 = vmatprep.subr.mxu0 0.0
        %2351 = vmatpush1.msra.mxu0 0.0
        %2352 = vmatprep.subr.mxu0 0.0
        %2353 = vmatpush1.msra.mxu0 0.0
        %2354 = vmatprep.subr.mxu0 0.0
        %2355 = vmatpush1.msra.mxu0 0.0
        %2356 = vmatprep.subr.mxu0 0.0
        %2357 = vmatpush1.msra.mxu0 0.0
        %2358 = vmatprep.subr.mxu0 0.0
        %2359 = vmatpush1.msra.mxu0 0.0
        %2360 = vmatprep.subr.mxu0 0.0
        %2361 = vmatpush1.msra.mxu0 0.0
        %2362 = vmatprep.subr.mxu0 0.0
        %2363 = vmatpush1.msra.mxu0 0.0
        %2364 = vmatprep.subr.mxu0 0.0
        %2365 = vmatpush1.msra.mxu0 0.0
        %2366 = vmatprep.subr.mxu0 0.0
        %2367 = vmatpush1.msra.mxu0 0.0
        %2368 = vmatprep.subr.mxu0 0.0
        %2369 = vmatpush1.msra.mxu0 0.0
        %2370 = vmatprep.subr.mxu0 0.0
        %2371 = vmatpush1.msra.mxu0 0.0
        %2372 = vmatprep.subr.mxu0 0.0
        %2373 = vmatpush1.msra.mxu0 0.0
        %2374 = vmatprep.subr.mxu0 0.0
        %2375 = vmatpush1.msra.mxu0 0.0
        %2376 = vmatprep.subr.mxu0 0.0
        %2377 = vmatpush1.msra.mxu0 0.0
        %2378 = vmatprep.subr.mxu0 0.0
        %2379 = vmatpush1.msra.mxu0 0.0
        %2380 = vmatprep.subr.mxu0 0.0
        %2381 = vmatpush1.msra.mxu0 0.0
        %2382 = vmatprep.subr.mxu0 0.0
        %2383 = vmatpush1.msra.mxu0 0.0
        %2384 = vmatprep.subr.mxu0 0.0
        %2385 = vmatpush1.msra.mxu0 0.0
        %2386 = vmatprep.subr.mxu0 0.0
        %2387 = vmatpush1.msra.mxu0 0.0
        %2388 = vmatprep.subr.mxu0 0.0
        %2389 = vmatpush1.msra.mxu0 0.0
        %2390 = vmatprep.subr.mxu0 0.0
        %2391 = vmatpush1.msra.mxu0 0.0
        %2392 = vmatprep.subr.mxu0 0.0
        %2393 = vmatpush1.msra.mxu0 0.0
        %2394 = vmatprep.subr.mxu0 0.0
        %2395 = vmatpush1.msra.mxu0 0.0
        %2396 = vmatprep.subr.mxu0 0.0
        %2397 = vmatpush1.msra.mxu0 0.0
        %2398 = vmatprep.subr.mxu0 0.0
        %2399 = vmatpush1.msra.mxu0 0.0
        %2400 = vmatprep.subr.mxu0 0.0
        %2401 = vmatpush1.msra.mxu0 0.0
        %2402 = vmatprep.subr.mxu0 0.0
        %2403 = vmatpush1.msra.mxu0 0.0
        %2404 = vmatprep.subr.mxu0 0.0
        %2405 = vmatpush1.msra.mxu0 0.0
        %2406 = vmatprep.subr.mxu0 0.0
        %2407 = vmatpush1.msra.mxu0 0.0
        %2408 = vmatprep.mubr.f32.mxu0 0.0
        %2409 = vmatmul.mubr.f32.gmra.mrb[0].mxu0 %v2339
        %v2410 = vpop.f32.mrb[0].mxu0
        %v2411 = vadd.f32 %v2330, %v2410
        %v2412 = vpop.f32.mrb[0].mxu0
        %2413 = vmatprep.mubr.f32.mxu0 0.0
        %2414 = vmatmul.mubr.f32.gmra.mrb[0].mxu0 %v2342
        %v2415 = vpop.f32.mrb[0].mxu0
        %v2416 = vadd.f32 %v2335, %v2415
        %v2417 = vpop.f32.mrb[0].mxu0
        %2418 = vdwg.mxu0
        %s2419 = scalar_lea.vmem %s835, 64 [#allocation3]
        %v2420 = vld [vmem:[%s2419] sm:$0xff]
        %v2421 = vld [vmem:[%s2419 + $0x8] sm:$0xff]
        %v2422 = vld [vmem:[%s2419 + $0x10] sm:$0xff]
        %v2423 = vld [vmem:[%s2419 + $0x18] sm:$0xff]
        %s2424 = scalar_lea.vmem %s998, 2
        %v2425 = vld [vmem:[%s2424] sm:$0x1]
        %v2427 = vlaneseq
        %v2428 = vshrl.u32 %v2427, 7
        %v2429 = vsub.s32 0, %v2428
        %v2430 = vrot.slane %v2425, %v2429
        %2432 = vmatprep.subr.mxu0 0.0
        %2433 = vmatpush1.msra.mxu0 %v2420
        %2434 = vmatprep.subr.mxu0 0.0
        %2435 = vmatpush1.msra.mxu0 %v2421
        %2436 = vmatprep.subr.mxu0 0.0
        %2437 = vmatpush1.msra.mxu0 %v2422
        %2438 = vmatprep.subr.mxu0 0.0
        %2439 = vmatpush1.msra.mxu0 %v2423
        %2440 = vmatprep.subr.mxu0 0.0
        %2441 = vmatpush1.msra.mxu0 0.0
        %2442 = vmatprep.subr.mxu0 0.0
        %2443 = vmatpush1.msra.mxu0 0.0
        %2444 = vmatprep.subr.mxu0 0.0
        %2445 = vmatpush1.msra.mxu0 0.0
        %2446 = vmatprep.subr.mxu0 0.0
        %2447 = vmatpush1.msra.mxu0 0.0
        %2448 = vmatprep.subr.mxu0 0.0
        %2449 = vmatpush1.msra.mxu0 0.0
        %2450 = vmatprep.subr.mxu0 0.0
        %2451 = vmatpush1.msra.mxu0 0.0
        %2452 = vmatprep.subr.mxu0 0.0
        %2453 = vmatpush1.msra.mxu0 0.0
        %2454 = vmatprep.subr.mxu0 0.0
        %2455 = vmatpush1.msra.mxu0 0.0
        %2456 = vmatprep.subr.mxu0 0.0
        %2457 = vmatpush1.msra.mxu0 0.0
        %2458 = vmatprep.subr.mxu0 0.0
        %2459 = vmatpush1.msra.mxu0 0.0
        %2460 = vmatprep.subr.mxu0 0.0
        %2461 = vmatpush1.msra.mxu0 0.0
        %2462 = vmatprep.subr.mxu0 0.0
        %2463 = vmatpush1.msra.mxu0 0.0
        %2464 = vmatprep.subr.mxu0 0.0
        %2465 = vmatpush1.msra.mxu0 0.0
        %2466 = vmatprep.subr.mxu0 0.0
        %2467 = vmatpush1.msra.mxu0 0.0
        %2468 = vmatprep.subr.mxu0 0.0
        %2469 = vmatpush1.msra.mxu0 0.0
        %2470 = vmatprep.subr.mxu0 0.0
        %2471 = vmatpush1.msra.mxu0 0.0
        %2472 = vmatprep.subr.mxu0 0.0
        %2473 = vmatpush1.msra.mxu0 0.0
        %2474 = vmatprep.subr.mxu0 0.0
        %2475 = vmatpush1.msra.mxu0 0.0
        %2476 = vmatprep.subr.mxu0 0.0
        %2477 = vmatpush1.msra.mxu0 0.0
        %2478 = vmatprep.subr.mxu0 0.0
        %2479 = vmatpush1.msra.mxu0 0.0
        %2480 = vmatprep.subr.mxu0 0.0
        %2481 = vmatpush1.msra.mxu0 0.0
        %2482 = vmatprep.subr.mxu0 0.0
        %2483 = vmatpush1.msra.mxu0 0.0
        %2484 = vmatprep.subr.mxu0 0.0
        %2485 = vmatpush1.msra.mxu0 0.0
        %2486 = vmatprep.subr.mxu0 0.0
        %2487 = vmatpush1.msra.mxu0 0.0
        %2488 = vmatprep.subr.mxu0 0.0
        %2489 = vmatpush1.msra.mxu0 0.0
        %2490 = vmatprep.subr.mxu0 0.0
        %2491 = vmatpush1.msra.mxu0 0.0
        %2492 = vmatprep.subr.mxu0 0.0
        %2493 = vmatpush1.msra.mxu0 0.0
        %2494 = vmatprep.subr.mxu0 0.0
        %2495 = vmatpush1.msra.mxu0 0.0
        %2496 = vmatprep.mubr.f32.mxu0 0.0
        %2497 = vmatmul.mubr.f32.gmra.mrb[0].mxu0 %v1097
        %v2498 = vpop.f32.mrb[0].mxu0
        %v2499 = vadd.f32 %v2430, %v2498
        %v2500 = vpop.f32.mrb[0].mxu0
        %2501 = vmatprep.mubr.f32.mxu0 0.0
        %2502 = vmatmul.mubr.f32.gmra.mrb[0].mxu0 %v1100
        %v2503 = vpop.f32.mrb[0].mxu0
        %v2504 = vadd.f32 %v2430, %v2503
        %v2505 = vpop.f32.mrb[0].mxu0
        %2506 = vdwg.mxu0
        %s2507 = scalar_lea.vmem %s844, 64 [#allocation5]
        %v2508 = vld [vmem:[%s2507] sm:$0xff]
        %v2509 = vld [vmem:[%s2507 + $0x8] sm:$0xff]
        %v2510 = vld [vmem:[%s2507 + $0x10] sm:$0xff]
        %v2511 = vld [vmem:[%s2507 + $0x18] sm:$0xff]
        %s2512 = scalar_lea.vmem %s1002, 2
        %v2513 = vld [vmem:[%s2512] sm:$0x1]
        %v2515 = vlaneseq
        %v2516 = vshrl.u32 %v2515, 7
        %v2517 = vsub.s32 0, %v2516
        %v2518 = vrot.slane %v2513, %v2517
        %2520 = vmatprep.subr.mxu0 0.0
        %2521 = vmatpush1.msra.mxu0 %v2508
        %2522 = vmatprep.subr.mxu0 0.0
        %2523 = vmatpush1.msra.mxu0 %v2509
        %2524 = vmatprep.subr.mxu0 0.0
        %2525 = vmatpush1.msra.mxu0 %v2510
        %2526 = vmatprep.subr.mxu0 0.0
        %2527 = vmatpush1.msra.mxu0 %v2511
        %2528 = vmatprep.subr.mxu0 0.0
        %2529 = vmatpush1.msra.mxu0 0.0
        %2530 = vmatprep.subr.mxu0 0.0
        %2531 = vmatpush1.msra.mxu0 0.0
        %2532 = vmatprep.subr.mxu0 0.0
        %2533 = vmatpush1.msra.mxu0 0.0
        %2534 = vmatprep.subr.mxu0 0.0
        %2535 = vmatpush1.msra.mxu0 0.0
        %2536 = vmatprep.subr.mxu0 0.0
        %2537 = vmatpush1.msra.mxu0 0.0
        %2538 = vmatprep.subr.mxu0 0.0
        %2539 = vmatpush1.msra.mxu0 0.0
        %2540 = vmatprep.subr.mxu0 0.0
        %2541 = vmatpush1.msra.mxu0 0.0
        %2542 = vmatprep.subr.mxu0 0.0
        %2543 = vmatpush1.msra.mxu0 0.0
        %2544 = vmatprep.subr.mxu0 0.0
        %2545 = vmatpush1.msra.mxu0 0.0
        %2546 = vmatprep.subr.mxu0 0.0
        %2547 = vmatpush1.msra.mxu0 0.0
        %2548 = vmatprep.subr.mxu0 0.0
        %2549 = vmatpush1.msra.mxu0 0.0
        %2550 = vmatprep.subr.mxu0 0.0
        %2551 = vmatpush1.msra.mxu0 0.0
        %2552 = vmatprep.subr.mxu0 0.0
        %2553 = vmatpush1.msra.mxu0 0.0
        %2554 = vmatprep.subr.mxu0 0.0
        %2555 = vmatpush1.msra.mxu0 0.0
        %2556 = vmatprep.subr.mxu0 0.0
        %2557 = vmatpush1.msra.mxu0 0.0
        %2558 = vmatprep.subr.mxu0 0.0
        %2559 = vmatpush1.msra.mxu0 0.0
        %2560 = vmatprep.subr.mxu0 0.0
        %2561 = vmatpush1.msra.mxu0 0.0
        %2562 = vmatprep.subr.mxu0 0.0
        %2563 = vmatpush1.msra.mxu0 0.0
        %2564 = vmatprep.subr.mxu0 0.0
        %2565 = vmatpush1.msra.mxu0 0.0
        %2566 = vmatprep.subr.mxu0 0.0
        %2567 = vmatpush1.msra.mxu0 0.0
        %2568 = vmatprep.subr.mxu0 0.0
        %2569 = vmatpush1.msra.mxu0 0.0
        %2570 = vmatprep.subr.mxu0 0.0
        %2571 = vmatpush1.msra.mxu0 0.0
        %2572 = vmatprep.subr.mxu0 0.0
        %2573 = vmatpush1.msra.mxu0 0.0
        %2574 = vmatprep.subr.mxu0 0.0
        %2575 = vmatpush1.msra.mxu0 0.0
        %2576 = vmatprep.subr.mxu0 0.0
        %2577 = vmatpush1.msra.mxu0 0.0
        %2578 = vmatprep.subr.mxu0 0.0
        %2579 = vmatpush1.msra.mxu0 0.0
        %2580 = vmatprep.subr.mxu0 0.0
        %2581 = vmatpush1.msra.mxu0 0.0
        %2582 = vmatprep.subr.mxu0 0.0
        %2583 = vmatpush1.msra.mxu0 0.0
        %2584 = vmatprep.mubr.f32.mxu0 0.0
        %2585 = vmatmul.mubr.f32.gmra.mrb[0].mxu0 %v1097
        %v2586 = vpop.f32.mrb[0].mxu0
        %v2587 = vadd.f32 %v2518, %v2586
        %v2588 = vpop.f32.mrb[0].mxu0
        %2589 = vmatprep.mubr.f32.mxu0 0.0
        %2590 = vmatmul.mubr.f32.gmra.mrb[0].mxu0 %v1100
        %v2591 = vpop.f32.mrb[0].mxu0
        %v2592 = vadd.f32 %v2518, %v2591
        %v2593 = vpop.f32.mrb[0].mxu0
        %2594 = vdwg.mxu0
        %s2595 = scalar_lea.vmem %s853, 64 [#allocation7]
        %v2596 = vld [vmem:[%s2595] sm:$0xff]
        %v2597 = vld [vmem:[%s2595 + $0x8] sm:$0xff]
        %v2598 = vld [vmem:[%s2595 + $0x10] sm:$0xff]
        %v2599 = vld [vmem:[%s2595 + $0x18] sm:$0xff]
        %s2600 = scalar_lea.vmem %s1006, 2
        %v2601 = vld [vmem:[%s2600] sm:$0x1]
        %v2603 = vlaneseq
        %v2604 = vshrl.u32 %v2603, 7
        %v2605 = vsub.s32 0, %v2604
        %v2606 = vrot.slane %v2601, %v2605
        %2608 = vmatprep.subr.mxu0 0.0
        %2609 = vmatpush1.msra.mxu0 %v2596
        %2610 = vmatprep.subr.mxu0 0.0
        %2611 = vmatpush1.msra.mxu0 %v2597
        %2612 = vmatprep.subr.mxu0 0.0
        %2613 = vmatpush1.msra.mxu0 %v2598
        %2614 = vmatprep.subr.mxu0 0.0
        %2615 = vmatpush1.msra.mxu0 %v2599
        %2616 = vmatprep.subr.mxu0 0.0
        %2617 = vmatpush1.msra.mxu0 0.0
        %2618 = vmatprep.subr.mxu0 0.0
        %2619 = vmatpush1.msra.mxu0 0.0
        %2620 = vmatprep.subr.mxu0 0.0
        %2621 = vmatpush1.msra.mxu0 0.0
        %2622 = vmatprep.subr.mxu0 0.0
        %2623 = vmatpush1.msra.mxu0 0.0
        %2624 = vmatprep.subr.mxu0 0.0
        %2625 = vmatpush1.msra.mxu0 0.0
        %2626 = vmatprep.subr.mxu0 0.0
        %2627 = vmatpush1.msra.mxu0 0.0
        %2628 = vmatprep.subr.mxu0 0.0
        %2629 = vmatpush1.msra.mxu0 0.0
        %2630 = vmatprep.subr.mxu0 0.0
        %2631 = vmatpush1.msra.mxu0 0.0
        %2632 = vmatprep.subr.mxu0 0.0
        %2633 = vmatpush1.msra.mxu0 0.0
        %2634 = vmatprep.subr.mxu0 0.0
        %2635 = vmatpush1.msra.mxu0 0.0
        %2636 = vmatprep.subr.mxu0 0.0
        %2637 = vmatpush1.msra.mxu0 0.0
        %2638 = vmatprep.subr.mxu0 0.0
        %2639 = vmatpush1.msra.mxu0 0.0
        %2640 = vmatprep.subr.mxu0 0.0
        %2641 = vmatpush1.msra.mxu0 0.0
        %2642 = vmatprep.subr.mxu0 0.0
        %2643 = vmatpush1.msra.mxu0 0.0
        %2644 = vmatprep.subr.mxu0 0.0
        %2645 = vmatpush1.msra.mxu0 0.0
        %2646 = vmatprep.subr.mxu0 0.0
        %2647 = vmatpush1.msra.mxu0 0.0
        %2648 = vmatprep.subr.mxu0 0.0
        %2649 = vmatpush1.msra.mxu0 0.0
        %2650 = vmatprep.subr.mxu0 0.0
        %2651 = vmatpush1.msra.mxu0 0.0
        %2652 = vmatprep.subr.mxu0 0.0
        %2653 = vmatpush1.msra.mxu0 0.0
        %2654 = vmatprep.subr.mxu0 0.0
        %2655 = vmatpush1.msra.mxu0 0.0
        %2656 = vmatprep.subr.mxu0 0.0
        %2657 = vmatpush1.msra.mxu0 0.0
        %2658 = vmatprep.subr.mxu0 0.0
        %2659 = vmatpush1.msra.mxu0 0.0
        %2660 = vmatprep.subr.mxu0 0.0
        %2661 = vmatpush1.msra.mxu0 0.0
        %2662 = vmatprep.subr.mxu0 0.0
        %2663 = vmatpush1.msra.mxu0 0.0
        %2664 = vmatprep.subr.mxu0 0.0
        %2665 = vmatpush1.msra.mxu0 0.0
        %2666 = vmatprep.subr.mxu0 0.0
        %2667 = vmatpush1.msra.mxu0 0.0
        %2668 = vmatprep.subr.mxu0 0.0
        %2669 = vmatpush1.msra.mxu0 0.0
        %2670 = vmatprep.subr.mxu0 0.0
        %2671 = vmatpush1.msra.mxu0 0.0
        %2672 = vmatprep.mubr.f32.mxu0 0.0
        %2673 = vmatmul.mubr.f32.gmra.mrb[0].mxu0 %v1097
        %v2674 = vpop.f32.mrb[0].mxu0
        %v2675 = vadd.f32 %v2606, %v2674
        %v2676 = vpop.f32.mrb[0].mxu0
        %2677 = vmatprep.mubr.f32.mxu0 0.0
        %2678 = vmatmul.mubr.f32.gmra.mrb[0].mxu0 %v1100
        %v2679 = vpop.f32.mrb[0].mxu0
        %v2680 = vadd.f32 %v2606, %v2679
        %v2681 = vpop.f32.mrb[0].mxu0
        %2682 = vdwg.mxu0
        %v2684 = vsel %vm1349, %v2499, 0
        %v2687 = vsel %vm1349, %v2587, 0
        %2689 = vmatprep.subr.mxu0 0.0
        %2690 = vmatpush1.xpose.msra.mxu0 %v2687
        %2691 = vmatprep.subr.mxu0 0.0
        %2692 = vmatpush1.xpose.msra.mxu0 0.0
        %2693 = vmatprep.subr.mxu0 0.0
        %2694 = vmatpush1.xpose.msra.mxu0 0.0
        %2695 = vmatprep.subr.mxu0 0.0
        %2696 = vmatpush1.xpose.msra.mxu0 0.0
        %2697 = vmatprep.subr.mxu0 0.0
        %2698 = vmatpush1.xpose.msra.mxu0 0.0
        %2699 = vmatprep.subr.mxu0 0.0
        %2700 = vmatpush1.xpose.msra.mxu0 0.0
        %2701 = vmatprep.subr.mxu0 0.0
        %2702 = vmatpush1.xpose.msra.mxu0 0.0
        %2703 = vmatprep.subr.mxu0 0.0
        %2704 = vmatpush1.xpose.msra.mxu0 0.0
        %2705 = vmatprep.subr.mxu0 0.0
        %2706 = vmatpush1.xpose.msra.mxu0 0.0
        %2707 = vmatprep.subr.mxu0 0.0
        %2708 = vmatpush1.xpose.msra.mxu0 0.0
        %2709 = vmatprep.subr.mxu0 0.0
        %2710 = vmatpush1.xpose.msra.mxu0 0.0
        %2711 = vmatprep.subr.mxu0 0.0
        %2712 = vmatpush1.xpose.msra.mxu0 0.0
        %2713 = vmatprep.subr.mxu0 0.0
        %2714 = vmatpush1.xpose.msra.mxu0 0.0
        %2715 = vmatprep.subr.mxu0 0.0
        %2716 = vmatpush1.xpose.msra.mxu0 0.0
        %2717 = vmatprep.subr.mxu0 0.0
        %2718 = vmatpush1.xpose.msra.mxu0 0.0
        %2719 = vmatprep.subr.mxu0 0.0
        %2720 = vmatpush1.xpose.msra.mxu0 0.0
        %2721 = vmatprep.subr.mxu0 0.0
        %2722 = vmatpush1.xpose.msra.mxu0 0.0
        %2723 = vmatprep.subr.mxu0 0.0
        %2724 = vmatpush1.xpose.msra.mxu0 0.0
        %2725 = vmatprep.subr.mxu0 0.0
        %2726 = vmatpush1.xpose.msra.mxu0 0.0
        %2727 = vmatprep.subr.mxu0 0.0
        %2728 = vmatpush1.xpose.msra.mxu0 0.0
        %2729 = vmatprep.subr.mxu0 0.0
        %2730 = vmatpush1.xpose.msra.mxu0 0.0
        %2731 = vmatprep.subr.mxu0 0.0
        %2732 = vmatpush1.xpose.msra.mxu0 0.0
        %2733 = vmatprep.subr.mxu0 0.0
        %2734 = vmatpush1.xpose.msra.mxu0 0.0
        %2735 = vmatprep.subr.mxu0 0.0
        %2736 = vmatpush1.xpose.msra.mxu0 0.0
        %2737 = vmatprep.subr.mxu0 0.0
        %2738 = vmatpush1.xpose.msra.mxu0 0.0
        %2739 = vmatprep.subr.mxu0 0.0
        %2740 = vmatpush1.xpose.msra.mxu0 0.0
        %2741 = vmatprep.subr.mxu0 0.0
        %2742 = vmatpush1.xpose.msra.mxu0 0.0
        %2743 = vmatprep.subr.mxu0 0.0
        %2744 = vmatpush1.xpose.msra.mxu0 0.0
        %2745 = vmatprep.subr.mxu0 0.0
        %2746 = vmatpush1.xpose.msra.mxu0 0.0
        %2747 = vmatprep.subr.mxu0 0.0
        %2748 = vmatpush1.xpose.msra.mxu0 0.0
        %2749 = vmatprep.subr.mxu0 0.0
        %2750 = vmatpush1.xpose.msra.mxu0 0.0
        %2751 = vmatprep.subr.mxu0 0.0
        %2752 = vmatpush1.xpose.msra.mxu0 0.0
        %2753 = vmatprep.mubr.f32.mxu0 0.0
        %2754 = vmatmul.mubr.f32.gmra.mrb[0].mxu0 %v2684
        %v2755 = vpop.f32.mrb[0].mxu0
        %v2756 = vadd.f32 %v1084, %v2755
        %v2757 = vpop.f32.mrb[0].mxu0
        %2758 = vdwg.mxu0
        %v2760 = vsel %vm1349, %v2504, 0
        %v2763 = vsel %vm1349, %v2592, 0
        %2765 = vmatprep.subr.mxu0 0.0
        %2766 = vmatpush1.xpose.msra.mxu0 %v2763
        %2767 = vmatprep.subr.mxu0 0.0
        %2768 = vmatpush1.xpose.msra.mxu0 0.0
        %2769 = vmatprep.subr.mxu0 0.0
        %2770 = vmatpush1.xpose.msra.mxu0 0.0
        %2771 = vmatprep.subr.mxu0 0.0
        %2772 = vmatpush1.xpose.msra.mxu0 0.0
        %2773 = vmatprep.subr.mxu0 0.0
        %2774 = vmatpush1.xpose.msra.mxu0 0.0
        %2775 = vmatprep.subr.mxu0 0.0
        %2776 = vmatpush1.xpose.msra.mxu0 0.0
        %2777 = vmatprep.subr.mxu0 0.0
        %2778 = vmatpush1.xpose.msra.mxu0 0.0
        %2779 = vmatprep.subr.mxu0 0.0
        %2780 = vmatpush1.xpose.msra.mxu0 0.0
        %2781 = vmatprep.subr.mxu0 0.0
        %2782 = vmatpush1.xpose.msra.mxu0 0.0
        %2783 = vmatprep.subr.mxu0 0.0
        %2784 = vmatpush1.xpose.msra.mxu0 0.0
        %2785 = vmatprep.subr.mxu0 0.0
        %2786 = vmatpush1.xpose.msra.mxu0 0.0
        %2787 = vmatprep.subr.mxu0 0.0
        %2788 = vmatpush1.xpose.msra.mxu0 0.0
        %2789 = vmatprep.subr.mxu0 0.0
        %2790 = vmatpush1.xpose.msra.mxu0 0.0
        %2791 = vmatprep.subr.mxu0 0.0
        %2792 = vmatpush1.xpose.msra.mxu0 0.0
        %2793 = vmatprep.subr.mxu0 0.0
        %2794 = vmatpush1.xpose.msra.mxu0 0.0
        %2795 = vmatprep.subr.mxu0 0.0
        %2796 = vmatpush1.xpose.msra.mxu0 0.0
        %2797 = vmatprep.subr.mxu0 0.0
        %2798 = vmatpush1.xpose.msra.mxu0 0.0
        %2799 = vmatprep.subr.mxu0 0.0
        %2800 = vmatpush1.xpose.msra.mxu0 0.0
        %2801 = vmatprep.subr.mxu0 0.0
        %2802 = vmatpush1.xpose.msra.mxu0 0.0
        %2803 = vmatprep.subr.mxu0 0.0
        %2804 = vmatpush1.xpose.msra.mxu0 0.0
        %2805 = vmatprep.subr.mxu0 0.0
        %2806 = vmatpush1.xpose.msra.mxu0 0.0
        %2807 = vmatprep.subr.mxu0 0.0
        %2808 = vmatpush1.xpose.msra.mxu0 0.0
        %2809 = vmatprep.subr.mxu0 0.0
        %2810 = vmatpush1.xpose.msra.mxu0 0.0
        %2811 = vmatprep.subr.mxu0 0.0
        %2812 = vmatpush1.xpose.msra.mxu0 0.0
        %2813 = vmatprep.subr.mxu0 0.0
        %2814 = vmatpush1.xpose.msra.mxu0 0.0
        %2815 = vmatprep.subr.mxu0 0.0
        %2816 = vmatpush1.xpose.msra.mxu0 0.0
        %2817 = vmatprep.subr.mxu0 0.0
        %2818 = vmatpush1.xpose.msra.mxu0 0.0
        %2819 = vmatprep.subr.mxu0 0.0
        %2820 = vmatpush1.xpose.msra.mxu0 0.0
        %2821 = vmatprep.subr.mxu0 0.0
        %2822 = vmatpush1.xpose.msra.mxu0 0.0
        %2823 = vmatprep.subr.mxu0 0.0
        %2824 = vmatpush1.xpose.msra.mxu0 0.0
        %2825 = vmatprep.subr.mxu0 0.0
        %2826 = vmatpush1.xpose.msra.mxu0 0.0
        %2827 = vmatprep.subr.mxu0 0.0
        %2828 = vmatpush1.xpose.msra.mxu0 0.0
        %2829 = vmatprep.mubr.f32.mxu0 0.0
        %2830 = vmatmul.mubr.f32.gmra.mrb[0].mxu0 %v2760
        %v2831 = vpop.f32.mrb[0].mxu0
        %v2832 = vadd.f32 %v1084, %v2831
        %v2833 = vpop.f32.mrb[0].mxu0
        %2834 = vdwg.mxu0
        %v2835 = vsel %vm1349, %v2756, -inf
        %2836 = vmax.xlane.f32.xlu0 %v2835
        %v2837 = vpop.xlane.xlu0 %2836
        %v2838 = vsel %vm1349, %v2832, -inf
        %2839 = vmax.xlane.f32.xlu0 %v2838
        %v2840 = vpop.xlane.xlu0 %2839
        %v2841 = vsub.f32 %v2756, %v2837
        %v2842 = vsub.f32 %v2832, %v2840
        %v2843 = vmul.f32 %v2841, 1.442695
        %v2844 = vpow.pop %v2843
        %v2845 = vmul.f32 %v2842, 1.442695
        %v2846 = vpow.pop %v2845
        %v2847 = vsel %vm1349, %v2844, 0.0
        %2848 = vadd.xlane.f32.xlu0 %v2847
        %v2849 = vpop.xlane.xlu0 %2848
        %v2850 = vsel %vm1349, %v2846, 0.0
        %2851 = vadd.xlane.f32.xlu0 %v2850
        %v2852 = vpop.xlane.xlu0 %2851
        %v2853 = vrcp.pop %v2849
        %v2854 = vrcp.pop %v2852
        %v2855 = vmul.f32 %v2844, %v2853
        %v2856 = vmul.f32 %v2846, %v2854
        %v2858 = vsel %vm1349, %v2855, 0
        %2860 = vmatprep.subr.mxu0 0.0
        %2861 = vmatpush1.msra.mxu0 %v2675
        %2862 = vmatprep.subr.mxu0 0.0
        %2863 = vmatpush1.msra.mxu0 0.0
        %2864 = vmatprep.subr.mxu0 0.0
        %2865 = vmatpush1.msra.mxu0 0.0
        %2866 = vmatprep.subr.mxu0 0.0
        %2867 = vmatpush1.msra.mxu0 0.0
        %2868 = vmatprep.subr.mxu0 0.0
        %2869 = vmatpush1.msra.mxu0 0.0
        %2870 = vmatprep.subr.mxu0 0.0
        %2871 = vmatpush1.msra.mxu0 0.0
        %2872 = vmatprep.subr.mxu0 0.0
        %2873 = vmatpush1.msra.mxu0 0.0
        %2874 = vmatprep.subr.mxu0 0.0
        %2875 = vmatpush1.msra.mxu0 0.0
        %2876 = vmatprep.subr.mxu0 0.0
        %2877 = vmatpush1.msra.mxu0 0.0
        %2878 = vmatprep.subr.mxu0 0.0
        %2879 = vmatpush1.msra.mxu0 0.0
        %2880 = vmatprep.subr.mxu0 0.0
        %2881 = vmatpush1.msra.mxu0 0.0
        %2882 = vmatprep.subr.mxu0 0.0
        %2883 = vmatpush1.msra.mxu0 0.0
        %2884 = vmatprep.subr.mxu0 0.0
        %2885 = vmatpush1.msra.mxu0 0.0
        %2886 = vmatprep.subr.mxu0 0.0
        %2887 = vmatpush1.msra.mxu0 0.0
        %2888 = vmatprep.subr.mxu0 0.0
        %2889 = vmatpush1.msra.mxu0 0.0
        %2890 = vmatprep.subr.mxu0 0.0
        %2891 = vmatpush1.msra.mxu0 0.0
        %2892 = vmatprep.subr.mxu0 0.0
        %2893 = vmatpush1.msra.mxu0 0.0
        %2894 = vmatprep.subr.mxu0 0.0
        %2895 = vmatpush1.msra.mxu0 0.0
        %2896 = vmatprep.subr.mxu0 0.0
        %2897 = vmatpush1.msra.mxu0 0.0
        %2898 = vmatprep.subr.mxu0 0.0
        %2899 = vmatpush1.msra.mxu0 0.0
        %2900 = vmatprep.subr.mxu0 0.0
        %2901 = vmatpush1.msra.mxu0 0.0
        %2902 = vmatprep.subr.mxu0 0.0
        %2903 = vmatpush1.msra.mxu0 0.0
        %2904 = vmatprep.subr.mxu0 0.0
        %2905 = vmatpush1.msra.mxu0 0.0
        %2906 = vmatprep.subr.mxu0 0.0
        %2907 = vmatpush1.msra.mxu0 0.0
        %2908 = vmatprep.subr.mxu0 0.0
        %2909 = vmatpush1.msra.mxu0 0.0
        %2910 = vmatprep.subr.mxu0 0.0
        %2911 = vmatpush1.msra.mxu0 0.0
        %2912 = vmatprep.subr.mxu0 0.0
        %2913 = vmatpush1.msra.mxu0 0.0
        %2914 = vmatprep.subr.mxu0 0.0
        %2915 = vmatpush1.msra.mxu0 0.0
        %2916 = vmatprep.subr.mxu0 0.0
        %2917 = vmatpush1.msra.mxu0 0.0
        %2918 = vmatprep.subr.mxu0 0.0
        %2919 = vmatpush1.msra.mxu0 0.0
        %2920 = vmatprep.subr.mxu0 0.0
        %2921 = vmatpush1.msra.mxu0 0.0
        %2922 = vmatprep.subr.mxu0 0.0
        %2923 = vmatpush1.msra.mxu0 0.0
        %2924 = vmatprep.mubr.f32.mxu0 0.0
        %2925 = vmatmul.mubr.f32.gmra.mrb[0].mxu0 %v2858
        %v2926 = vpop.f32.mrb[0].mxu0
        %v2927 = vadd.f32 0.0, %v2926
        %v2928 = vpop.f32.mrb[0].mxu0
        %2929 = vdwg.mxu0
        %v2931 = vsel %vm1349, %v2856, 0
        %2933 = vmatprep.subr.mxu0 0.0
        %2934 = vmatpush1.msra.mxu0 %v2680
        %2935 = vmatprep.subr.mxu0 0.0
        %2936 = vmatpush1.msra.mxu0 0.0
        %2937 = vmatprep.subr.mxu0 0.0
        %2938 = vmatpush1.msra.mxu0 0.0
        %2939 = vmatprep.subr.mxu0 0.0
        %2940 = vmatpush1.msra.mxu0 0.0
        %2941 = vmatprep.subr.mxu0 0.0
        %2942 = vmatpush1.msra.mxu0 0.0
        %2943 = vmatprep.subr.mxu0 0.0
        %2944 = vmatpush1.msra.mxu0 0.0
        %2945 = vmatprep.subr.mxu0 0.0
        %2946 = vmatpush1.msra.mxu0 0.0
        %2947 = vmatprep.subr.mxu0 0.0
        %2948 = vmatpush1.msra.mxu0 0.0
        %2949 = vmatprep.subr.mxu0 0.0
        %2950 = vmatpush1.msra.mxu0 0.0
        %2951 = vmatprep.subr.mxu0 0.0
        %2952 = vmatpush1.msra.mxu0 0.0
        %2953 = vmatprep.subr.mxu0 0.0
        %2954 = vmatpush1.msra.mxu0 0.0
        %2955 = vmatprep.subr.mxu0 0.0
        %2956 = vmatpush1.msra.mxu0 0.0
        %2957 = vmatprep.subr.mxu0 0.0
        %2958 = vmatpush1.msra.mxu0 0.0
        %2959 = vmatprep.subr.mxu0 0.0
        %2960 = vmatpush1.msra.mxu0 0.0
        %2961 = vmatprep.subr.mxu0 0.0
        %2962 = vmatpush1.msra.mxu0 0.0
        %2963 = vmatprep.subr.mxu0 0.0
        %2964 = vmatpush1.msra.mxu0 0.0
        %2965 = vmatprep.subr.mxu0 0.0
        %2966 = vmatpush1.msra.mxu0 0.0
        %2967 = vmatprep.subr.mxu0 0.0
        %2968 = vmatpush1.msra.mxu0 0.0
        %2969 = vmatprep.subr.mxu0 0.0
        %2970 = vmatpush1.msra.mxu0 0.0
        %2971 = vmatprep.subr.mxu0 0.0
        %2972 = vmatpush1.msra.mxu0 0.0
        %2973 = vmatprep.subr.mxu0 0.0
        %2974 = vmatpush1.msra.mxu0 0.0
        %2975 = vmatprep.subr.mxu0 0.0
        %2976 = vmatpush1.msra.mxu0 0.0
        %2977 = vmatprep.subr.mxu0 0.0
        %2978 = vmatpush1.msra.mxu0 0.0
        %2979 = vmatprep.subr.mxu0 0.0
        %2980 = vmatpush1.msra.mxu0 0.0
        %2981 = vmatprep.subr.mxu0 0.0
        %2982 = vmatpush1.msra.mxu0 0.0
        %2983 = vmatprep.subr.mxu0 0.0
        %2984 = vmatpush1.msra.mxu0 0.0
        %2985 = vmatprep.subr.mxu0 0.0
        %2986 = vmatpush1.msra.mxu0 0.0
        %2987 = vmatprep.subr.mxu0 0.0
        %2988 = vmatpush1.msra.mxu0 0.0
        %2989 = vmatprep.subr.mxu0 0.0
        %2990 = vmatpush1.msra.mxu0 0.0
        %2991 = vmatprep.subr.mxu0 0.0
        %2992 = vmatpush1.msra.mxu0 0.0
        %2993 = vmatprep.subr.mxu0 0.0
        %2994 = vmatpush1.msra.mxu0 0.0
        %2995 = vmatprep.subr.mxu0 0.0
        %2996 = vmatpush1.msra.mxu0 0.0
        %2997 = vmatprep.mubr.f32.mxu0 0.0
        %2998 = vmatmul.mubr.f32.gmra.mrb[0].mxu0 %v2931
        %v2999 = vpop.f32.mrb[0].mxu0
        %v3000 = vadd.f32 0.0, %v2999
        %v3001 = vpop.f32.mrb[0].mxu0
        %3002 = vdwg.mxu0
        %s3003 = scalar_lea.vmem %s862, 16 [#allocation8]
        %v3004 = vld [vmem:[%s3003] sm:$0xff]
        %v3006 = vsel %vm1349, %v2927, 0
        %v3009 = vsel %vm1349, %v3000, 0
        %3011 = vmatprep.subr.mxu0 0.0
        %3012 = vmatpush1.msra.mxu0 %v3004
        %3013 = vmatprep.subr.mxu0 0.0
        %3014 = vmatpush1.msra.mxu0 0.0
        %3015 = vmatprep.subr.mxu0 0.0
        %3016 = vmatpush1.msra.mxu0 0.0
        %3017 = vmatprep.subr.mxu0 0.0
        %3018 = vmatpush1.msra.mxu0 0.0
        %3019 = vmatprep.subr.mxu0 0.0
        %3020 = vmatpush1.msra.mxu0 0.0
        %3021 = vmatprep.subr.mxu0 0.0
        %3022 = vmatpush1.msra.mxu0 0.0
        %3023 = vmatprep.subr.mxu0 0.0
        %3024 = vmatpush1.msra.mxu0 0.0
        %3025 = vmatprep.subr.mxu0 0.0
        %3026 = vmatpush1.msra.mxu0 0.0
        %3027 = vmatprep.subr.mxu0 0.0
        %3028 = vmatpush1.msra.mxu0 0.0
        %3029 = vmatprep.subr.mxu0 0.0
        %3030 = vmatpush1.msra.mxu0 0.0
        %3031 = vmatprep.subr.mxu0 0.0
        %3032 = vmatpush1.msra.mxu0 0.0
        %3033 = vmatprep.subr.mxu0 0.0
        %3034 = vmatpush1.msra.mxu0 0.0
        %3035 = vmatprep.subr.mxu0 0.0
        %3036 = vmatpush1.msra.mxu0 0.0
        %3037 = vmatprep.subr.mxu0 0.0
        %3038 = vmatpush1.msra.mxu0 0.0
        %3039 = vmatprep.subr.mxu0 0.0
        %3040 = vmatpush1.msra.mxu0 0.0
        %3041 = vmatprep.subr.mxu0 0.0
        %3042 = vmatpush1.msra.mxu0 0.0
        %3043 = vmatprep.subr.mxu0 0.0
        %3044 = vmatpush1.msra.mxu0 0.0
        %3045 = vmatprep.subr.mxu0 0.0
        %3046 = vmatpush1.msra.mxu0 0.0
        %3047 = vmatprep.subr.mxu0 0.0
        %3048 = vmatpush1.msra.mxu0 0.0
        %3049 = vmatprep.subr.mxu0 0.0
        %3050 = vmatpush1.msra.mxu0 0.0
        %3051 = vmatprep.subr.mxu0 0.0
        %3052 = vmatpush1.msra.mxu0 0.0
        %3053 = vmatprep.subr.mxu0 0.0
        %3054 = vmatpush1.msra.mxu0 0.0
        %3055 = vmatprep.subr.mxu0 0.0
        %3056 = vmatpush1.msra.mxu0 0.0
        %3057 = vmatprep.subr.mxu0 0.0
        %3058 = vmatpush1.msra.mxu0 0.0
        %3059 = vmatprep.subr.mxu0 0.0
        %3060 = vmatpush1.msra.mxu0 0.0
        %3061 = vmatprep.subr.mxu0 0.0
        %3062 = vmatpush1.msra.mxu0 0.0
        %3063 = vmatprep.subr.mxu0 0.0
        %3064 = vmatpush1.msra.mxu0 0.0
        %3065 = vmatprep.subr.mxu0 0.0
        %3066 = vmatpush1.msra.mxu0 0.0
        %3067 = vmatprep.subr.mxu0 0.0
        %3068 = vmatpush1.msra.mxu0 0.0
        %3069 = vmatprep.subr.mxu0 0.0
        %3070 = vmatpush1.msra.mxu0 0.0
        %3071 = vmatprep.subr.mxu0 0.0
        %3072 = vmatpush1.msra.mxu0 0.0
        %3073 = vmatprep.subr.mxu0 0.0
        %3074 = vmatpush1.msra.mxu0 0.0
        %3075 = vmatprep.mubr.f32.mxu0 0.0
        %3076 = vmatmul.mubr.f32.gmra.mrb[0].mxu0 %v3006
        %v3077 = vpop.f32.mrb[0].mxu0
        %v3078 = vadd.f32 0.0, %v3077
        %v3079 = vpop.f32.mrb[0].mxu0
        %3080 = vmatprep.mubr.f32.mxu0 0.0
        %3081 = vmatmul.mubr.f32.gmra.mrb[0].mxu0 %v3009
        %v3082 = vpop.f32.mrb[0].mxu0
        %v3083 = vadd.f32 0.0, %v3082
        %v3084 = vpop.f32.mrb[0].mxu0
        %3085 = vdwg.mxu0
        %v3086 = vadd.f32 %v2411, %v3078
        %v3087 = vadd.f32 %v2416, %v3083
        %s3088 = scalar_lea.vmem %s835, 96 [#allocation3]
        %v3089 = vld [vmem:[%s3088] sm:$0xff]
        %v3090 = vld [vmem:[%s3088 + $0x8] sm:$0xff]
        %v3091 = vld [vmem:[%s3088 + $0x10] sm:$0xff]
        %v3092 = vld [vmem:[%s3088 + $0x18] sm:$0xff]
        %s3093 = scalar_lea.vmem %s998, 3
        %v3094 = vld [vmem:[%s3093] sm:$0x1]
        %v3096 = vlaneseq
        %v3097 = vshrl.u32 %v3096, 7
        %v3098 = vsub.s32 0, %v3097
        %v3099 = vrot.slane %v3094, %v3098
        %3101 = vmatprep.subr.mxu0 0.0
        %3102 = vmatpush1.msra.mxu0 %v3089
        %3103 = vmatprep.subr.mxu0 0.0
        %3104 = vmatpush1.msra.mxu0 %v3090
        %3105 = vmatprep.subr.mxu0 0.0
        %3106 = vmatpush1.msra.mxu0 %v3091
        %3107 = vmatprep.subr.mxu0 0.0
        %3108 = vmatpush1.msra.mxu0 %v3092
        %3109 = vmatprep.subr.mxu0 0.0
        %3110 = vmatpush1.msra.mxu0 0.0
        %3111 = vmatprep.subr.mxu0 0.0
        %3112 = vmatpush1.msra.mxu0 0.0
        %3113 = vmatprep.subr.mxu0 0.0
        %3114 = vmatpush1.msra.mxu0 0.0
        %3115 = vmatprep.subr.mxu0 0.0
        %3116 = vmatpush1.msra.mxu0 0.0
        %3117 = vmatprep.subr.mxu0 0.0
        %3118 = vmatpush1.msra.mxu0 0.0
        %3119 = vmatprep.subr.mxu0 0.0
        %3120 = vmatpush1.msra.mxu0 0.0
        %3121 = vmatprep.subr.mxu0 0.0
        %3122 = vmatpush1.msra.mxu0 0.0
        %3123 = vmatprep.subr.mxu0 0.0
        %3124 = vmatpush1.msra.mxu0 0.0
        %3125 = vmatprep.subr.mxu0 0.0
        %3126 = vmatpush1.msra.mxu0 0.0
        %3127 = vmatprep.subr.mxu0 0.0
        %3128 = vmatpush1.msra.mxu0 0.0
        %3129 = vmatprep.subr.mxu0 0.0
        %3130 = vmatpush1.msra.mxu0 0.0
        %3131 = vmatprep.subr.mxu0 0.0
        %3132 = vmatpush1.msra.mxu0 0.0
        %3133 = vmatprep.subr.mxu0 0.0
        %3134 = vmatpush1.msra.mxu0 0.0
        %3135 = vmatprep.subr.mxu0 0.0
        %3136 = vmatpush1.msra.mxu0 0.0
        %3137 = vmatprep.subr.mxu0 0.0
        %3138 = vmatpush1.msra.mxu0 0.0
        %3139 = vmatprep.subr.mxu0 0.0
        %3140 = vmatpush1.msra.mxu0 0.0
        %3141 = vmatprep.subr.mxu0 0.0
        %3142 = vmatpush1.msra.mxu0 0.0
        %3143 = vmatprep.subr.mxu0 0.0
        %3144 = vmatpush1.msra.mxu0 0.0
        %3145 = vmatprep.subr.mxu0 0.0
        %3146 = vmatpush1.msra.mxu0 0.0
        %3147 = vmatprep.subr.mxu0 0.0
        %3148 = vmatpush1.msra.mxu0 0.0
        %3149 = vmatprep.subr.mxu0 0.0
        %3150 = vmatpush1.msra.mxu0 0.0
        %3151 = vmatprep.subr.mxu0 0.0
        %3152 = vmatpush1.msra.mxu0 0.0
        %3153 = vmatprep.subr.mxu0 0.0
        %3154 = vmatpush1.msra.mxu0 0.0
        %3155 = vmatprep.subr.mxu0 0.0
        %3156 = vmatpush1.msra.mxu0 0.0
        %3157 = vmatprep.subr.mxu0 0.0
        %3158 = vmatpush1.msra.mxu0 0.0
        %3159 = vmatprep.subr.mxu0 0.0
        %3160 = vmatpush1.msra.mxu0 0.0
        %3161 = vmatprep.subr.mxu0 0.0
        %3162 = vmatpush1.msra.mxu0 0.0
        %3163 = vmatprep.subr.mxu0 0.0
        %3164 = vmatpush1.msra.mxu0 0.0
        %3165 = vmatprep.mubr.f32.mxu0 0.0
        %3166 = vmatmul.mubr.f32.gmra.mrb[0].mxu0 %v1097
        %v3167 = vpop.f32.mrb[0].mxu0
        %v3168 = vadd.f32 %v3099, %v3167
        %v3169 = vpop.f32.mrb[0].mxu0
        %3170 = vmatprep.mubr.f32.mxu0 0.0
        %3171 = vmatmul.mubr.f32.gmra.mrb[0].mxu0 %v1100
        %v3172 = vpop.f32.mrb[0].mxu0
        %v3173 = vadd.f32 %v3099, %v3172
        %v3174 = vpop.f32.mrb[0].mxu0
        %3175 = vdwg.mxu0
        %s3176 = scalar_lea.vmem %s844, 96 [#allocation5]
        %v3177 = vld [vmem:[%s3176] sm:$0xff]
        %v3178 = vld [vmem:[%s3176 + $0x8] sm:$0xff]
        %v3179 = vld [vmem:[%s3176 + $0x10] sm:$0xff]
        %v3180 = vld [vmem:[%s3176 + $0x18] sm:$0xff]
        %s3181 = scalar_lea.vmem %s1002, 3
        %v3182 = vld [vmem:[%s3181] sm:$0x1]
        %v3184 = vlaneseq
        %v3185 = vshrl.u32 %v3184, 7
        %v3186 = vsub.s32 0, %v3185
        %v3187 = vrot.slane %v3182, %v3186
        %3189 = vmatprep.subr.mxu0 0.0
        %3190 = vmatpush1.msra.mxu0 %v3177
        %3191 = vmatprep.subr.mxu0 0.0
        %3192 = vmatpush1.msra.mxu0 %v3178
        %3193 = vmatprep.subr.mxu0 0.0
        %3194 = vmatpush1.msra.mxu0 %v3179
        %3195 = vmatprep.subr.mxu0 0.0
        %3196 = vmatpush1.msra.mxu0 %v3180
        %3197 = vmatprep.subr.mxu0 0.0
        %3198 = vmatpush1.msra.mxu0 0.0
        %3199 = vmatprep.subr.mxu0 0.0
        %3200 = vmatpush1.msra.mxu0 0.0
        %3201 = vmatprep.subr.mxu0 0.0
        %3202 = vmatpush1.msra.mxu0 0.0
        %3203 = vmatprep.subr.mxu0 0.0
        %3204 = vmatpush1.msra.mxu0 0.0
        %3205 = vmatprep.subr.mxu0 0.0
        %3206 = vmatpush1.msra.mxu0 0.0
        %3207 = vmatprep.subr.mxu0 0.0
        %3208 = vmatpush1.msra.mxu0 0.0
        %3209 = vmatprep.subr.mxu0 0.0
        %3210 = vmatpush1.msra.mxu0 0.0
        %3211 = vmatprep.subr.mxu0 0.0
        %3212 = vmatpush1.msra.mxu0 0.0
        %3213 = vmatprep.subr.mxu0 0.0
        %3214 = vmatpush1.msra.mxu0 0.0
        %3215 = vmatprep.subr.mxu0 0.0
        %3216 = vmatpush1.msra.mxu0 0.0
        %3217 = vmatprep.subr.mxu0 0.0
        %3218 = vmatpush1.msra.mxu0 0.0
        %3219 = vmatprep.subr.mxu0 0.0
        %3220 = vmatpush1.msra.mxu0 0.0
        %3221 = vmatprep.subr.mxu0 0.0
        %3222 = vmatpush1.msra.mxu0 0.0
        %3223 = vmatprep.subr.mxu0 0.0
        %3224 = vmatpush1.msra.mxu0 0.0
        %3225 = vmatprep.subr.mxu0 0.0
        %3226 = vmatpush1.msra.mxu0 0.0
        %3227 = vmatprep.subr.mxu0 0.0
        %3228 = vmatpush1.msra.mxu0 0.0
        %3229 = vmatprep.subr.mxu0 0.0
        %3230 = vmatpush1.msra.mxu0 0.0
        %3231 = vmatprep.subr.mxu0 0.0
        %3232 = vmatpush1.msra.mxu0 0.0
        %3233 = vmatprep.subr.mxu0 0.0
        %3234 = vmatpush1.msra.mxu0 0.0
        %3235 = vmatprep.subr.mxu0 0.0
        %3236 = vmatpush1.msra.mxu0 0.0
        %3237 = vmatprep.subr.mxu0 0.0
        %3238 = vmatpush1.msra.mxu0 0.0
        %3239 = vmatprep.subr.mxu0 0.0
        %3240 = vmatpush1.msra.mxu0 0.0
        %3241 = vmatprep.subr.mxu0 0.0
        %3242 = vmatpush1.msra.mxu0 0.0
        %3243 = vmatprep.subr.mxu0 0.0
        %3244 = vmatpush1.msra.mxu0 0.0
        %3245 = vmatprep.subr.mxu0 0.0
        %3246 = vmatpush1.msra.mxu0 0.0
        %3247 = vmatprep.subr.mxu0 0.0
        %3248 = vmatpush1.msra.mxu0 0.0
        %3249 = vmatprep.subr.mxu0 0.0
        %3250 = vmatpush1.msra.mxu0 0.0
        %3251 = vmatprep.subr.mxu0 0.0
        %3252 = vmatpush1.msra.mxu0 0.0
        %3253 = vmatprep.mubr.f32.mxu0 0.0
        %3254 = vmatmul.mubr.f32.gmra.mrb[0].mxu0 %v1097
        %v3255 = vpop.f32.mrb[0].mxu0
        %v3256 = vadd.f32 %v3187, %v3255
        %v3257 = vpop.f32.mrb[0].mxu0
        %3258 = vmatprep.mubr.f32.mxu0 0.0
        %3259 = vmatmul.mubr.f32.gmra.mrb[0].mxu0 %v1100
        %v3260 = vpop.f32.mrb[0].mxu0
        %v3261 = vadd.f32 %v3187, %v3260
        %v3262 = vpop.f32.mrb[0].mxu0
        %3263 = vdwg.mxu0
        %s3264 = scalar_lea.vmem %s853, 96 [#allocation7]
        %v3265 = vld [vmem:[%s3264] sm:$0xff]
        %v3266 = vld [vmem:[%s3264 + $0x8] sm:$0xff]
        %v3267 = vld [vmem:[%s3264 + $0x10] sm:$0xff]
        %v3268 = vld [vmem:[%s3264 + $0x18] sm:$0xff]
        %s3269 = scalar_lea.vmem %s1006, 3
        %v3270 = vld [vmem:[%s3269] sm:$0x1]
        %v3272 = vlaneseq
        %v3273 = vshrl.u32 %v3272, 7
        %v3274 = vsub.s32 0, %v3273
        %v3275 = vrot.slane %v3270, %v3274
        %3277 = vmatprep.subr.mxu0 0.0
        %3278 = vmatpush1.msra.mxu0 %v3265
        %3279 = vmatprep.subr.mxu0 0.0
        %3280 = vmatpush1.msra.mxu0 %v3266
        %3281 = vmatprep.subr.mxu0 0.0
        %3282 = vmatpush1.msra.mxu0 %v3267
        %3283 = vmatprep.subr.mxu0 0.0
        %3284 = vmatpush1.msra.mxu0 %v3268
        %3285 = vmatprep.subr.mxu0 0.0
        %3286 = vmatpush1.msra.mxu0 0.0
        %3287 = vmatprep.subr.mxu0 0.0
        %3288 = vmatpush1.msra.mxu0 0.0
        %3289 = vmatprep.subr.mxu0 0.0
        %3290 = vmatpush1.msra.mxu0 0.0
        %3291 = vmatprep.subr.mxu0 0.0
        %3292 = vmatpush1.msra.mxu0 0.0
        %3293 = vmatprep.subr.mxu0 0.0
        %3294 = vmatpush1.msra.mxu0 0.0
        %3295 = vmatprep.subr.mxu0 0.0
        %3296 = vmatpush1.msra.mxu0 0.0
        %3297 = vmatprep.subr.mxu0 0.0
        %3298 = vmatpush1.msra.mxu0 0.0
        %3299 = vmatprep.subr.mxu0 0.0
        %3300 = vmatpush1.msra.mxu0 0.0
        %3301 = vmatprep.subr.mxu0 0.0
        %3302 = vmatpush1.msra.mxu0 0.0
        %3303 = vmatprep.subr.mxu0 0.0
        %3304 = vmatpush1.msra.mxu0 0.0
        %3305 = vmatprep.subr.mxu0 0.0
        %3306 = vmatpush1.msra.mxu0 0.0
        %3307 = vmatprep.subr.mxu0 0.0
        %3308 = vmatpush1.msra.mxu0 0.0
        %3309 = vmatprep.subr.mxu0 0.0
        %3310 = vmatpush1.msra.mxu0 0.0
        %3311 = vmatprep.subr.mxu0 0.0
        %3312 = vmatpush1.msra.mxu0 0.0
        %3313 = vmatprep.subr.mxu0 0.0
        %3314 = vmatpush1.msra.mxu0 0.0
        %3315 = vmatprep.subr.mxu0 0.0
        %3316 = vmatpush1.msra.mxu0 0.0
        %3317 = vmatprep.subr.mxu0 0.0
        %3318 = vmatpush1.msra.mxu0 0.0
        %3319 = vmatprep.subr.mxu0 0.0
        %3320 = vmatpush1.msra.mxu0 0.0
        %3321 = vmatprep.subr.mxu0 0.0
        %3322 = vmatpush1.msra.mxu0 0.0
        %3323 = vmatprep.subr.mxu0 0.0
        %3324 = vmatpush1.msra.mxu0 0.0
        %3325 = vmatprep.subr.mxu0 0.0
        %3326 = vmatpush1.msra.mxu0 0.0
        %3327 = vmatprep.subr.mxu0 0.0
        %3328 = vmatpush1.msra.mxu0 0.0
        %3329 = vmatprep.subr.mxu0 0.0
        %3330 = vmatpush1.msra.mxu0 0.0
        %3331 = vmatprep.subr.mxu0 0.0
        %3332 = vmatpush1.msra.mxu0 0.0
        %3333 = vmatprep.subr.mxu0 0.0
        %3334 = vmatpush1.msra.mxu0 0.0
        %3335 = vmatprep.subr.mxu0 0.0
        %3336 = vmatpush1.msra.mxu0 0.0
        %3337 = vmatprep.subr.mxu0 0.0
        %3338 = vmatpush1.msra.mxu0 0.0
        %3339 = vmatprep.subr.mxu0 0.0
        %3340 = vmatpush1.msra.mxu0 0.0
        %3341 = vmatprep.mubr.f32.mxu0 0.0
        %3342 = vmatmul.mubr.f32.gmra.mrb[0].mxu0 %v1097
        %v3343 = vpop.f32.mrb[0].mxu0
        %v3344 = vadd.f32 %v3275, %v3343
        %v3345 = vpop.f32.mrb[0].mxu0
        %3346 = vmatprep.mubr.f32.mxu0 0.0
        %3347 = vmatmul.mubr.f32.gmra.mrb[0].mxu0 %v1100
        %v3348 = vpop.f32.mrb[0].mxu0
        %v3349 = vadd.f32 %v3275, %v3348
        %v3350 = vpop.f32.mrb[0].mxu0
        %3351 = vdwg.mxu0
        %v3353 = vsel %vm1349, %v3168, 0
        %v3356 = vsel %vm1349, %v3256, 0
        %3358 = vmatprep.subr.mxu0 0.0
        %3359 = vmatpush1.xpose.msra.mxu0 %v3356
        %3360 = vmatprep.subr.mxu0 0.0
        %3361 = vmatpush1.xpose.msra.mxu0 0.0
        %3362 = vmatprep.subr.mxu0 0.0
        %3363 = vmatpush1.xpose.msra.mxu0 0.0
        %3364 = vmatprep.subr.mxu0 0.0
        %3365 = vmatpush1.xpose.msra.mxu0 0.0
        %3366 = vmatprep.subr.mxu0 0.0
        %3367 = vmatpush1.xpose.msra.mxu0 0.0
        %3368 = vmatprep.subr.mxu0 0.0
        %3369 = vmatpush1.xpose.msra.mxu0 0.0
        %3370 = vmatprep.subr.mxu0 0.0
        %3371 = vmatpush1.xpose.msra.mxu0 0.0
        %3372 = vmatprep.subr.mxu0 0.0
        %3373 = vmatpush1.xpose.msra.mxu0 0.0
        %3374 = vmatprep.subr.mxu0 0.0
        %3375 = vmatpush1.xpose.msra.mxu0 0.0
        %3376 = vmatprep.subr.mxu0 0.0
        %3377 = vmatpush1.xpose.msra.mxu0 0.0
        %3378 = vmatprep.subr.mxu0 0.0
        %3379 = vmatpush1.xpose.msra.mxu0 0.0
        %3380 = vmatprep.subr.mxu0 0.0
        %3381 = vmatpush1.xpose.msra.mxu0 0.0
        %3382 = vmatprep.subr.mxu0 0.0
        %3383 = vmatpush1.xpose.msra.mxu0 0.0
        %3384 = vmatprep.subr.mxu0 0.0
        %3385 = vmatpush1.xpose.msra.mxu0 0.0
        %3386 = vmatprep.subr.mxu0 0.0
        %3387 = vmatpush1.xpose.msra.mxu0 0.0
        %3388 = vmatprep.subr.mxu0 0.0
        %3389 = vmatpush1.xpose.msra.mxu0 0.0
        %3390 = vmatprep.subr.mxu0 0.0
        %3391 = vmatpush1.xpose.msra.mxu0 0.0
        %3392 = vmatprep.subr.mxu0 0.0
        %3393 = vmatpush1.xpose.msra.mxu0 0.0
        %3394 = vmatprep.subr.mxu0 0.0
        %3395 = vmatpush1.xpose.msra.mxu0 0.0
        %3396 = vmatprep.subr.mxu0 0.0
        %3397 = vmatpush1.xpose.msra.mxu0 0.0
        %3398 = vmatprep.subr.mxu0 0.0
        %3399 = vmatpush1.xpose.msra.mxu0 0.0
        %3400 = vmatprep.subr.mxu0 0.0
        %3401 = vmatpush1.xpose.msra.mxu0 0.0
        %3402 = vmatprep.subr.mxu0 0.0
        %3403 = vmatpush1.xpose.msra.mxu0 0.0
        %3404 = vmatprep.subr.mxu0 0.0
        %3405 = vmatpush1.xpose.msra.mxu0 0.0
        %3406 = vmatprep.subr.mxu0 0.0
        %3407 = vmatpush1.xpose.msra.mxu0 0.0
        %3408 = vmatprep.subr.mxu0 0.0
        %3409 = vmatpush1.xpose.msra.mxu0 0.0
        %3410 = vmatprep.subr.mxu0 0.0
        %3411 = vmatpush1.xpose.msra.mxu0 0.0
        %3412 = vmatprep.subr.mxu0 0.0
        %3413 = vmatpush1.xpose.msra.mxu0 0.0
        %3414 = vmatprep.subr.mxu0 0.0
        %3415 = vmatpush1.xpose.msra.mxu0 0.0
        %3416 = vmatprep.subr.mxu0 0.0
        %3417 = vmatpush1.xpose.msra.mxu0 0.0
        %3418 = vmatprep.subr.mxu0 0.0
        %3419 = vmatpush1.xpose.msra.mxu0 0.0
        %3420 = vmatprep.subr.mxu0 0.0
        %3421 = vmatpush1.xpose.msra.mxu0 0.0
        %3422 = vmatprep.mubr.f32.mxu0 0.0
        %3423 = vmatmul.mubr.f32.gmra.mrb[0].mxu0 %v3353
        %v3424 = vpop.f32.mrb[0].mxu0
        %v3425 = vadd.f32 %v1084, %v3424
        %v3426 = vpop.f32.mrb[0].mxu0
        %3427 = vdwg.mxu0
        %v3429 = vsel %vm1349, %v3173, 0
        %v3432 = vsel %vm1349, %v3261, 0
        %3434 = vmatprep.subr.mxu0 0.0
        %3435 = vmatpush1.xpose.msra.mxu0 %v3432
        %3436 = vmatprep.subr.mxu0 0.0
        %3437 = vmatpush1.xpose.msra.mxu0 0.0
        %3438 = vmatprep.subr.mxu0 0.0
        %3439 = vmatpush1.xpose.msra.mxu0 0.0
        %3440 = vmatprep.subr.mxu0 0.0
        %3441 = vmatpush1.xpose.msra.mxu0 0.0
        %3442 = vmatprep.subr.mxu0 0.0
        %3443 = vmatpush1.xpose.msra.mxu0 0.0
        %3444 = vmatprep.subr.mxu0 0.0
        %3445 = vmatpush1.xpose.msra.mxu0 0.0
        %3446 = vmatprep.subr.mxu0 0.0
        %3447 = vmatpush1.xpose.msra.mxu0 0.0
        %3448 = vmatprep.subr.mxu0 0.0
        %3449 = vmatpush1.xpose.msra.mxu0 0.0
        %3450 = vmatprep.subr.mxu0 0.0
        %3451 = vmatpush1.xpose.msra.mxu0 0.0
        %3452 = vmatprep.subr.mxu0 0.0
        %3453 = vmatpush1.xpose.msra.mxu0 0.0
        %3454 = vmatprep.subr.mxu0 0.0
        %3455 = vmatpush1.xpose.msra.mxu0 0.0
        %3456 = vmatprep.subr.mxu0 0.0
        %3457 = vmatpush1.xpose.msra.mxu0 0.0
        %3458 = vmatprep.subr.mxu0 0.0
        %3459 = vmatpush1.xpose.msra.mxu0 0.0
        %3460 = vmatprep.subr.mxu0 0.0
        %3461 = vmatpush1.xpose.msra.mxu0 0.0
        %3462 = vmatprep.subr.mxu0 0.0
        %3463 = vmatpush1.xpose.msra.mxu0 0.0
        %3464 = vmatprep.subr.mxu0 0.0
        %3465 = vmatpush1.xpose.msra.mxu0 0.0
        %3466 = vmatprep.subr.mxu0 0.0
        %3467 = vmatpush1.xpose.msra.mxu0 0.0
        %3468 = vmatprep.subr.mxu0 0.0
        %3469 = vmatpush1.xpose.msra.mxu0 0.0
        %3470 = vmatprep.subr.mxu0 0.0
        %3471 = vmatpush1.xpose.msra.mxu0 0.0
        %3472 = vmatprep.subr.mxu0 0.0
        %3473 = vmatpush1.xpose.msra.mxu0 0.0
        %3474 = vmatprep.subr.mxu0 0.0
        %3475 = vmatpush1.xpose.msra.mxu0 0.0
        %3476 = vmatprep.subr.mxu0 0.0
        %3477 = vmatpush1.xpose.msra.mxu0 0.0
        %3478 = vmatprep.subr.mxu0 0.0
        %3479 = vmatpush1.xpose.msra.mxu0 0.0
        %3480 = vmatprep.subr.mxu0 0.0
        %3481 = vmatpush1.xpose.msra.mxu0 0.0
        %3482 = vmatprep.subr.mxu0 0.0
        %3483 = vmatpush1.xpose.msra.mxu0 0.0
        %3484 = vmatprep.subr.mxu0 0.0
        %3485 = vmatpush1.xpose.msra.mxu0 0.0
        %3486 = vmatprep.subr.mxu0 0.0
        %3487 = vmatpush1.xpose.msra.mxu0 0.0
        %3488 = vmatprep.subr.mxu0 0.0
        %3489 = vmatpush1.xpose.msra.mxu0 0.0
        %3490 = vmatprep.subr.mxu0 0.0
        %3491 = vmatpush1.xpose.msra.mxu0 0.0
        %3492 = vmatprep.subr.mxu0 0.0
        %3493 = vmatpush1.xpose.msra.mxu0 0.0
        %3494 = vmatprep.subr.mxu0 0.0
        %3495 = vmatpush1.xpose.msra.mxu0 0.0
        %3496 = vmatprep.subr.mxu0 0.0
        %3497 = vmatpush1.xpose.msra.mxu0 0.0
        %3498 = vmatprep.mubr.f32.mxu0 0.0
        %3499 = vmatmul.mubr.f32.gmra.mrb[0].mxu0 %v3429
        %v3500 = vpop.f32.mrb[0].mxu0
        %v3501 = vadd.f32 %v1084, %v3500
        %v3502 = vpop.f32.mrb[0].mxu0
        %3503 = vdwg.mxu0
        %v3504 = vsel %vm1349, %v3425, -inf
        %3505 = vmax.xlane.f32.xlu0 %v3504
        %v3506 = vpop.xlane.xlu0 %3505
        %v3507 = vsel %vm1349, %v3501, -inf
        %3508 = vmax.xlane.f32.xlu0 %v3507
        %v3509 = vpop.xlane.xlu0 %3508
        %v3510 = vsub.f32 %v3425, %v3506
        %v3511 = vsub.f32 %v3501, %v3509
        %v3512 = vmul.f32 %v3510, 1.442695
        %v3513 = vpow.pop %v3512
        %v3514 = vmul.f32 %v3511, 1.442695
        %v3515 = vpow.pop %v3514
        %v3516 = vsel %vm1349, %v3513, 0.0
        %3517 = vadd.xlane.f32.xlu0 %v3516
        %v3518 = vpop.xlane.xlu0 %3517
        %v3519 = vsel %vm1349, %v3515, 0.0
        %3520 = vadd.xlane.f32.xlu0 %v3519
        %v3521 = vpop.xlane.xlu0 %3520
        %v3522 = vrcp.pop %v3518
        %v3523 = vrcp.pop %v3521
        %v3524 = vmul.f32 %v3513, %v3522
        %v3525 = vmul.f32 %v3515, %v3523
        %v3527 = vsel %vm1349, %v3524, 0
        %3529 = vmatprep.subr.mxu0 0.0
        %3530 = vmatpush1.msra.mxu0 %v3344
        %3531 = vmatprep.subr.mxu0 0.0
        %3532 = vmatpush1.msra.mxu0 0.0
        %3533 = vmatprep.subr.mxu0 0.0
        %3534 = vmatpush1.msra.mxu0 0.0
        %3535 = vmatprep.subr.mxu0 0.0
        %3536 = vmatpush1.msra.mxu0 0.0
        %3537 = vmatprep.subr.mxu0 0.0
        %3538 = vmatpush1.msra.mxu0 0.0
        %3539 = vmatprep.subr.mxu0 0.0
        %3540 = vmatpush1.msra.mxu0 0.0
        %3541 = vmatprep.subr.mxu0 0.0
        %3542 = vmatpush1.msra.mxu0 0.0
        %3543 = vmatprep.subr.mxu0 0.0
        %3544 = vmatpush1.msra.mxu0 0.0
        %3545 = vmatprep.subr.mxu0 0.0
        %3546 = vmatpush1.msra.mxu0 0.0
        %3547 = vmatprep.subr.mxu0 0.0
        %3548 = vmatpush1.msra.mxu0 0.0
        %3549 = vmatprep.subr.mxu0 0.0
        %3550 = vmatpush1.msra.mxu0 0.0
        %3551 = vmatprep.subr.mxu0 0.0
        %3552 = vmatpush1.msra.mxu0 0.0
        %3553 = vmatprep.subr.mxu0 0.0
        %3554 = vmatpush1.msra.mxu0 0.0
        %3555 = vmatprep.subr.mxu0 0.0
        %3556 = vmatpush1.msra.mxu0 0.0
        %3557 = vmatprep.subr.mxu0 0.0
        %3558 = vmatpush1.msra.mxu0 0.0
        %3559 = vmatprep.subr.mxu0 0.0
        %3560 = vmatpush1.msra.mxu0 0.0
        %3561 = vmatprep.subr.mxu0 0.0
        %3562 = vmatpush1.msra.mxu0 0.0
        %3563 = vmatprep.subr.mxu0 0.0
        %3564 = vmatpush1.msra.mxu0 0.0
        %3565 = vmatprep.subr.mxu0 0.0
        %3566 = vmatpush1.msra.mxu0 0.0
        %3567 = vmatprep.subr.mxu0 0.0
        %3568 = vmatpush1.msra.mxu0 0.0
        %3569 = vmatprep.subr.mxu0 0.0
        %3570 = vmatpush1.msra.mxu0 0.0
        %3571 = vmatprep.subr.mxu0 0.0
        %3572 = vmatpush1.msra.mxu0 0.0
        %3573 = vmatprep.subr.mxu0 0.0
        %3574 = vmatpush1.msra.mxu0 0.0
        %3575 = vmatprep.subr.mxu0 0.0
        %3576 = vmatpush1.msra.mxu0 0.0
        %3577 = vmatprep.subr.mxu0 0.0
        %3578 = vmatpush1.msra.mxu0 0.0
        %3579 = vmatprep.subr.mxu0 0.0
        %3580 = vmatpush1.msra.mxu0 0.0
        %3581 = vmatprep.subr.mxu0 0.0
        %3582 = vmatpush1.msra.mxu0 0.0
        %3583 = vmatprep.subr.mxu0 0.0
        %3584 = vmatpush1.msra.mxu0 0.0
        %3585 = vmatprep.subr.mxu0 0.0
        %3586 = vmatpush1.msra.mxu0 0.0
        %3587 = vmatprep.subr.mxu0 0.0
        %3588 = vmatpush1.msra.mxu0 0.0
        %3589 = vmatprep.subr.mxu0 0.0
        %3590 = vmatpush1.msra.mxu0 0.0
        %3591 = vmatprep.subr.mxu0 0.0
        %3592 = vmatpush1.msra.mxu0 0.0
        %3593 = vmatprep.mubr.f32.mxu0 0.0
        %3594 = vmatmul.mubr.f32.gmra.mrb[0].mxu0 %v3527
        %v3595 = vpop.f32.mrb[0].mxu0
        %v3596 = vadd.f32 0.0, %v3595
        %v3597 = vpop.f32.mrb[0].mxu0
        %3598 = vdwg.mxu0
        %v3600 = vsel %vm1349, %v3525, 0
        %3602 = vmatprep.subr.mxu0 0.0
        %3603 = vmatpush1.msra.mxu0 %v3349
        %3604 = vmatprep.subr.mxu0 0.0
        %3605 = vmatpush1.msra.mxu0 0.0
        %3606 = vmatprep.subr.mxu0 0.0
        %3607 = vmatpush1.msra.mxu0 0.0
        %3608 = vmatprep.subr.mxu0 0.0
        %3609 = vmatpush1.msra.mxu0 0.0
        %3610 = vmatprep.subr.mxu0 0.0
        %3611 = vmatpush1.msra.mxu0 0.0
        %3612 = vmatprep.subr.mxu0 0.0
        %3613 = vmatpush1.msra.mxu0 0.0
        %3614 = vmatprep.subr.mxu0 0.0
        %3615 = vmatpush1.msra.mxu0 0.0
        %3616 = vmatprep.subr.mxu0 0.0
        %3617 = vmatpush1.msra.mxu0 0.0
        %3618 = vmatprep.subr.mxu0 0.0
        %3619 = vmatpush1.msra.mxu0 0.0
        %3620 = vmatprep.subr.mxu0 0.0
        %3621 = vmatpush1.msra.mxu0 0.0
        %3622 = vmatprep.subr.mxu0 0.0
        %3623 = vmatpush1.msra.mxu0 0.0
        %3624 = vmatprep.subr.mxu0 0.0
        %3625 = vmatpush1.msra.mxu0 0.0
        %3626 = vmatprep.subr.mxu0 0.0
        %3627 = vmatpush1.msra.mxu0 0.0
        %3628 = vmatprep.subr.mxu0 0.0
        %3629 = vmatpush1.msra.mxu0 0.0
        %3630 = vmatprep.subr.mxu0 0.0
        %3631 = vmatpush1.msra.mxu0 0.0
        %3632 = vmatprep.subr.mxu0 0.0
        %3633 = vmatpush1.msra.mxu0 0.0
        %3634 = vmatprep.subr.mxu0 0.0
        %3635 = vmatpush1.msra.mxu0 0.0
        %3636 = vmatprep.subr.mxu0 0.0
        %3637 = vmatpush1.msra.mxu0 0.0
        %3638 = vmatprep.subr.mxu0 0.0
        %3639 = vmatpush1.msra.mxu0 0.0
        %3640 = vmatprep.subr.mxu0 0.0
        %3641 = vmatpush1.msra.mxu0 0.0
        %3642 = vmatprep.subr.mxu0 0.0
        %3643 = vmatpush1.msra.mxu0 0.0
        %3644 = vmatprep.subr.mxu0 0.0
        %3645 = vmatpush1.msra.mxu0 0.0
        %3646 = vmatprep.subr.mxu0 0.0
        %3647 = vmatpush1.msra.mxu0 0.0
        %3648 = vmatprep.subr.mxu0 0.0
        %3649 = vmatpush1.msra.mxu0 0.0
        %3650 = vmatprep.subr.mxu0 0.0
        %3651 = vmatpush1.msra.mxu0 0.0
        %3652 = vmatprep.subr.mxu0 0.0
        %3653 = vmatpush1.msra.mxu0 0.0
        %3654 = vmatprep.subr.mxu0 0.0
        %3655 = vmatpush1.msra.mxu0 0.0
        %3656 = vmatprep.subr.mxu0 0.0
        %3657 = vmatpush1.msra.mxu0 0.0
        %3658 = vmatprep.subr.mxu0 0.0
        %3659 = vmatpush1.msra.mxu0 0.0
        %3660 = vmatprep.subr.mxu0 0.0
        %3661 = vmatpush1.msra.mxu0 0.0
        %3662 = vmatprep.subr.mxu0 0.0
        %3663 = vmatpush1.msra.mxu0 0.0
        %3664 = vmatprep.subr.mxu0 0.0
        %3665 = vmatpush1.msra.mxu0 0.0
        %3666 = vmatprep.mubr.f32.mxu0 0.0
        %3667 = vmatmul.mubr.f32.gmra.mrb[0].mxu0 %v3600
        %v3668 = vpop.f32.mrb[0].mxu0
        %v3669 = vadd.f32 0.0, %v3668
        %v3670 = vpop.f32.mrb[0].mxu0
        %3671 = vdwg.mxu0
        %s3672 = scalar_lea.vmem %s862, 24 [#allocation8]
        %v3673 = vld [vmem:[%s3672] sm:$0xff]
        %v3675 = vsel %vm1349, %v3596, 0
        %v3678 = vsel %vm1349, %v3669, 0
        %3680 = vmatprep.subr.mxu0 0.0
        %3681 = vmatpush1.msra.mxu0 %v3673
        %3682 = vmatprep.subr.mxu0 0.0
        %3683 = vmatpush1.msra.mxu0 0.0
        %3684 = vmatprep.subr.mxu0 0.0
        %3685 = vmatpush1.msra.mxu0 0.0
        %3686 = vmatprep.subr.mxu0 0.0
        %3687 = vmatpush1.msra.mxu0 0.0
        %3688 = vmatprep.subr.mxu0 0.0
        %3689 = vmatpush1.msra.mxu0 0.0
        %3690 = vmatprep.subr.mxu0 0.0
        %3691 = vmatpush1.msra.mxu0 0.0
        %3692 = vmatprep.subr.mxu0 0.0
        %3693 = vmatpush1.msra.mxu0 0.0
        %3694 = vmatprep.subr.mxu0 0.0
        %3695 = vmatpush1.msra.mxu0 0.0
        %3696 = vmatprep.subr.mxu0 0.0
        %3697 = vmatpush1.msra.mxu0 0.0
        %3698 = vmatprep.subr.mxu0 0.0
        %3699 = vmatpush1.msra.mxu0 0.0
        %3700 = vmatprep.subr.mxu0 0.0
        %3701 = vmatpush1.msra.mxu0 0.0
        %3702 = vmatprep.subr.mxu0 0.0
        %3703 = vmatpush1.msra.mxu0 0.0
        %3704 = vmatprep.subr.mxu0 0.0
        %3705 = vmatpush1.msra.mxu0 0.0
        %3706 = vmatprep.subr.mxu0 0.0
        %3707 = vmatpush1.msra.mxu0 0.0
        %3708 = vmatprep.subr.mxu0 0.0
        %3709 = vmatpush1.msra.mxu0 0.0
        %3710 = vmatprep.subr.mxu0 0.0
        %3711 = vmatpush1.msra.mxu0 0.0
        %3712 = vmatprep.subr.mxu0 0.0
        %3713 = vmatpush1.msra.mxu0 0.0
        %3714 = vmatprep.subr.mxu0 0.0
        %3715 = vmatpush1.msra.mxu0 0.0
        %3716 = vmatprep.subr.mxu0 0.0
        %3717 = vmatpush1.msra.mxu0 0.0
        %3718 = vmatprep.subr.mxu0 0.0
        %3719 = vmatpush1.msra.mxu0 0.0
        %3720 = vmatprep.subr.mxu0 0.0
        %3721 = vmatpush1.msra.mxu0 0.0
        %3722 = vmatprep.subr.mxu0 0.0
        %3723 = vmatpush1.msra.mxu0 0.0
        %3724 = vmatprep.subr.mxu0 0.0
        %3725 = vmatpush1.msra.mxu0 0.0
        %3726 = vmatprep.subr.mxu0 0.0
        %3727 = vmatpush1.msra.mxu0 0.0
        %3728 = vmatprep.subr.mxu0 0.0
        %3729 = vmatpush1.msra.mxu0 0.0
        %3730 = vmatprep.subr.mxu0 0.0
        %3731 = vmatpush1.msra.mxu0 0.0
        %3732 = vmatprep.subr.mxu0 0.0
        %3733 = vmatpush1.msra.mxu0 0.0
        %3734 = vmatprep.subr.mxu0 0.0
        %3735 = vmatpush1.msra.mxu0 0.0
        %3736 = vmatprep.subr.mxu0 0.0
        %3737 = vmatpush1.msra.mxu0 0.0
        %3738 = vmatprep.subr.mxu0 0.0
        %3739 = vmatpush1.msra.mxu0 0.0
        %3740 = vmatprep.subr.mxu0 0.0
        %3741 = vmatpush1.msra.mxu0 0.0
        %3742 = vmatprep.subr.mxu0 0.0
        %3743 = vmatpush1.msra.mxu0 0.0
        %3744 = vmatprep.mubr.f32.mxu0 0.0
        %3745 = vmatmul.mubr.f32.gmra.mrb[0].mxu0 %v3675
        %v3746 = vpop.f32.mrb[0].mxu0
        %v3747 = vadd.f32 0.0, %v3746
        %v3748 = vpop.f32.mrb[0].mxu0
        %3749 = vmatprep.mubr.f32.mxu0 0.0
        %3750 = vmatmul.mubr.f32.gmra.mrb[0].mxu0 %v3678
        %v3751 = vpop.f32.mrb[0].mxu0
        %v3752 = vadd.f32 0.0, %v3751
        %v3753 = vpop.f32.mrb[0].mxu0
        %3754 = vdwg.mxu0
        %v3755 = vadd.f32 %v3086, %v3747
        %v3756 = vadd.f32 %v3087, %v3752
        %v3757 = vadd.f32 %v1036, %v3755
        %v3758 = vadd.f32 %v1037, %v3756
        %v3759 = vld [vmem:[%s1009] sm:$0x1]
        %v3761 = vlaneseq
        %v3762 = vshrl.u32 %v3761, 7
        %v3763 = vsub.s32 0, %v3762
        %v3764 = vrot.slane %v3759, %v3763
        %v3766 = vadd.f32 %v3757, %v3764
        %v3767 = vadd.f32 %v3758, %v3764
        %v3768 = vld [vmem:[%s1012] sm:$0x1]
        %v3769 = vld [vmem:[%s1015] sm:$0x1]
        %v3770 = vsel %vm1040, %v3766, 0.0
        %3771 = vadd.xlane.f32.xlu0 %v3770
        %v3772 = vpop.xlane.xlu0 %3771
        %v3773 = vsel %vm1040, %v3767, 0.0
        %3774 = vadd.xlane.f32.xlu0 %v3773
        %v3775 = vpop.xlane.xlu0 %3774
        %v3776 = vmul.f32 %v3772, %v1047
        %v3777 = vmul.f32 %v3775, %v1047
        %v3778 = vsub.f32 %v3766, %v3776
        %v3779 = vsub.f32 %v3767, %v3777
        %v3780 = vmul.f32 %v3778, %v3778
        %v3781 = vmul.f32 %v3779, %v3779
        %v3782 = vsel %vm1040, %v3780, 0.0
        %3783 = vadd.xlane.f32.xlu0 %v3782
        %v3784 = vpop.xlane.xlu0 %3783
        %v3785 = vsel %vm1040, %v3781, 0.0
        %3786 = vadd.xlane.f32.xlu0 %v3785
        %v3787 = vpop.xlane.xlu0 %3786
        %v3788 = vmul.f32 %v3784, %v1047
        %v3789 = vmul.f32 %v3787, %v1047
        %v3790 = vadd.f32 %v3788, 1e-05
        %v3791 = vadd.f32 %v3789, 1e-05
        %v3792 = vrsqrt.pop %v3790
        %v3793 = vrsqrt.pop %v3791
        %v3794 = vmul.f32 %v3778, %v3792
        %v3795 = vmul.f32 %v3779, %v3793
        %v3797 = vlaneseq
        %v3798 = vshrl.u32 %v3797, 7
        %v3799 = vsub.s32 0, %v3798
        %v3800 = vrot.slane %v3768, %v3799
        %v3802 = vmul.f32 %v3794, %v3800
        %v3803 = vmul.f32 %v3795, %v3800
        %v3805 = vlaneseq
        %v3806 = vshrl.u32 %v3805, 7
        %v3807 = vsub.s32 0, %v3806
        %v3808 = vrot.slane %v3769, %v3807
        %v3810 = vadd.f32 %v3802, %v3808
        %v3811 = vadd.f32 %v3803, %v3808
        %v3812 = vld [vmem:[%s871] sm:$0xff]
        %v3813 = vld [vmem:[%s871 + $0x8] sm:$0xff]
        %v3814 = vld [vmem:[%s871 + $0x10] sm:$0xff]
        %v3815 = vld [vmem:[%s871 + $0x18] sm:$0xff]
        %v3816 = vld [vmem:[%s1018] sm:$0x1]
        %v3818 = vlaneseq
        %v3819 = vshrl.u32 %v3818, 7
        %v3820 = vsub.s32 0, %v3819
        %v3821 = vrot.slane %v3816, %v3820
        %v3824 = vsel %vm1040, %v3810, 0
        %v3827 = vsel %vm1040, %v3811, 0
        %3829 = vmatprep.subr.mxu0 0.0
        %3830 = vmatpush1.msra.mxu0 %v3812
        %3831 = vmatprep.subr.mxu0 0.0
        %3832 = vmatpush1.msra.mxu0 %v3813
        %3833 = vmatprep.subr.mxu0 0.0
        %3834 = vmatpush1.msra.mxu0 %v3814
        %3835 = vmatprep.subr.mxu0 0.0
        %3836 = vmatpush1.msra.mxu0 %v3815
        %3837 = vmatprep.subr.mxu0 0.0
        %3838 = vmatpush1.msra.mxu0 0.0
        %3839 = vmatprep.subr.mxu0 0.0
        %3840 = vmatpush1.msra.mxu0 0.0
        %3841 = vmatprep.subr.mxu0 0.0
        %3842 = vmatpush1.msra.mxu0 0.0
        %3843 = vmatprep.subr.mxu0 0.0
        %3844 = vmatpush1.msra.mxu0 0.0
        %3845 = vmatprep.subr.mxu0 0.0
        %3846 = vmatpush1.msra.mxu0 0.0
        %3847 = vmatprep.subr.mxu0 0.0
        %3848 = vmatpush1.msra.mxu0 0.0
        %3849 = vmatprep.subr.mxu0 0.0
        %3850 = vmatpush1.msra.mxu0 0.0
        %3851 = vmatprep.subr.mxu0 0.0
        %3852 = vmatpush1.msra.mxu0 0.0
        %3853 = vmatprep.subr.mxu0 0.0
        %3854 = vmatpush1.msra.mxu0 0.0
        %3855 = vmatprep.subr.mxu0 0.0
        %3856 = vmatpush1.msra.mxu0 0.0
        %3857 = vmatprep.subr.mxu0 0.0
        %3858 = vmatpush1.msra.mxu0 0.0
        %3859 = vmatprep.subr.mxu0 0.0
        %3860 = vmatpush1.msra.mxu0 0.0
        %3861 = vmatprep.subr.mxu0 0.0
        %3862 = vmatpush1.msra.mxu0 0.0
        %3863 = vmatprep.subr.mxu0 0.0
        %3864 = vmatpush1.msra.mxu0 0.0
        %3865 = vmatprep.subr.mxu0 0.0
        %3866 = vmatpush1.msra.mxu0 0.0
        %3867 = vmatprep.subr.mxu0 0.0
        %3868 = vmatpush1.msra.mxu0 0.0
        %3869 = vmatprep.subr.mxu0 0.0
        %3870 = vmatpush1.msra.mxu0 0.0
        %3871 = vmatprep.subr.mxu0 0.0
        %3872 = vmatpush1.msra.mxu0 0.0
        %3873 = vmatprep.subr.mxu0 0.0
        %3874 = vmatpush1.msra.mxu0 0.0
        %3875 = vmatprep.subr.mxu0 0.0
        %3876 = vmatpush1.msra.mxu0 0.0
        %3877 = vmatprep.subr.mxu0 0.0
        %3878 = vmatpush1.msra.mxu0 0.0
        %3879 = vmatprep.subr.mxu0 0.0
        %3880 = vmatpush1.msra.mxu0 0.0
        %3881 = vmatprep.subr.mxu0 0.0
        %3882 = vmatpush1.msra.mxu0 0.0
        %3883 = vmatprep.subr.mxu0 0.0
        %3884 = vmatpush1.msra.mxu0 0.0
        %3885 = vmatprep.subr.mxu0 0.0
        %3886 = vmatpush1.msra.mxu0 0.0
        %3887 = vmatprep.subr.mxu0 0.0
        %3888 = vmatpush1.msra.mxu0 0.0
        %3889 = vmatprep.subr.mxu0 0.0
        %3890 = vmatpush1.msra.mxu0 0.0
        %3891 = vmatprep.subr.mxu0 0.0
        %3892 = vmatpush1.msra.mxu0 0.0
        %3893 = vmatprep.mubr.f32.mxu0 0.0
        %3894 = vmatmul.mubr.f32.gmra.mrb[0].mxu0 %v3824
        %v3895 = vpop.f32.mrb[0].mxu0
        %v3896 = vadd.f32 %v3821, %v3895
        %v3897 = vpop.f32.mrb[0].mxu0
        %3898 = vmatprep.mubr.f32.mxu0 0.0
        %3899 = vmatmul.mubr.f32.gmra.mrb[0].mxu0 %v3827
        %v3900 = vpop.f32.mrb[0].mxu0
        %v3901 = vadd.f32 %v3821, %v3900
        %v3902 = vpop.f32.mrb[0].mxu0
        %3903 = vdwg.mxu0
        %v3904 = vmul.f32 %v3896, 1.702
        %v3905 = vmul.f32 %v3901, 1.702
        %v3906 = vxor.u32 %v3904, 2147483648
        %v3907 = vxor.u32 %v3905, 2147483648
        %v3908 = vmul.f32 %v3906, 1.442695
        %v3909 = vpow.pop %v3908
        %v3910 = vmul.f32 %v3907, 1.442695
        %v3911 = vpow.pop %v3910
        %v3912 = vadd.f32 %v3909, 1.0
        %v3913 = vadd.f32 %v3911, 1.0
        %v3914 = vrcp.pop %v3912
        %v3915 = vmul.f32 1.0, %v3914
        %v3916 = vrcp.pop %v3913
        %v3917 = vmul.f32 1.0, %v3916
        %v3918 = vmul.f32 %v3896, %v3915
        %v3919 = vmul.f32 %v3901, %v3917
        %v3920 = vld [vmem:[%s1023] sm:$0xff]
        %v3921 = vld [vmem:[%s1023 + $0x8] sm:$0xff]
        %v3922 = vld [vmem:[%s1023 + $0x10] sm:$0xff]
        %v3923 = vld [vmem:[%s1023 + $0x18] sm:$0xff]
        %v3924 = vld [vmem:[%s1023 + $0x20] sm:$0xff]
        %v3925 = vld [vmem:[%s1023 + $0x28] sm:$0xff]
        %v3926 = vld [vmem:[%s1023 + $0x30] sm:$0xff]
        %v3927 = vld [vmem:[%s1023 + $0x38] sm:$0xff]
        %v3928 = vld [vmem:[%s1023 + $0x40] sm:$0xff]
        %v3929 = vld [vmem:[%s1023 + $0x48] sm:$0xff]
        %v3930 = vld [vmem:[%s1023 + $0x50] sm:$0xff]
        %v3931 = vld [vmem:[%s1023 + $0x58] sm:$0xff]
        %v3932 = vld [vmem:[%s1023 + $0x60] sm:$0xff]
        %v3933 = vld [vmem:[%s1023 + $0x68] sm:$0xff]
        %v3934 = vld [vmem:[%s1023 + $0x70] sm:$0xff]
        %v3935 = vld [vmem:[%s1023 + $0x78] sm:$0xff]
        %v3936 = vld [vmem:[%s1026] sm:$0x1]
        %v3938 = vlaneseq
        %v3939 = vshrl.u32 %v3938, 7
        %v3940 = vsub.s32 0, %v3939
        %v3941 = vrot.slane %v3936, %v3940
        %3943 = vmatprep.subr.mxu0 0.0
        %3944 = vmatpush1.msra.mxu0 %v3920
        %3945 = vmatprep.subr.mxu0 0.0
        %3946 = vmatpush1.msra.mxu0 %v3921
        %3947 = vmatprep.subr.mxu0 0.0
        %3948 = vmatpush1.msra.mxu0 %v3922
        %3949 = vmatprep.subr.mxu0 0.0
        %3950 = vmatpush1.msra.mxu0 %v3923
        %3951 = vmatprep.subr.mxu0 0.0
        %3952 = vmatpush1.msra.mxu0 %v3924
        %3953 = vmatprep.subr.mxu0 0.0
        %3954 = vmatpush1.msra.mxu0 %v3925
        %3955 = vmatprep.subr.mxu0 0.0
        %3956 = vmatpush1.msra.mxu0 %v3926
        %3957 = vmatprep.subr.mxu0 0.0
        %3958 = vmatpush1.msra.mxu0 %v3927
        %3959 = vmatprep.subr.mxu0 0.0
        %3960 = vmatpush1.msra.mxu0 %v3928
        %3961 = vmatprep.subr.mxu0 0.0
        %3962 = vmatpush1.msra.mxu0 %v3929
        %3963 = vmatprep.subr.mxu0 0.0
        %3964 = vmatpush1.msra.mxu0 %v3930
        %3965 = vmatprep.subr.mxu0 0.0
        %3966 = vmatpush1.msra.mxu0 %v3931
        %3967 = vmatprep.subr.mxu0 0.0
        %3968 = vmatpush1.msra.mxu0 %v3932
        %3969 = vmatprep.subr.mxu0 0.0
        %3970 = vmatpush1.msra.mxu0 %v3933
        %3971 = vmatprep.subr.mxu0 0.0
        %3972 = vmatpush1.msra.mxu0 %v3934
        %3973 = vmatprep.subr.mxu0 0.0
        %3974 = vmatpush1.msra.mxu0 %v3935
        %3975 = vmatprep.subr.mxu0 0.0
        %3976 = vmatpush1.msra.mxu0 0.0
        %3977 = vmatprep.subr.mxu0 0.0
        %3978 = vmatpush1.msra.mxu0 0.0
        %3979 = vmatprep.subr.mxu0 0.0
        %3980 = vmatpush1.msra.mxu0 0.0
        %3981 = vmatprep.subr.mxu0 0.0
        %3982 = vmatpush1.msra.mxu0 0.0
        %3983 = vmatprep.subr.mxu0 0.0
        %3984 = vmatpush1.msra.mxu0 0.0
        %3985 = vmatprep.subr.mxu0 0.0
        %3986 = vmatpush1.msra.mxu0 0.0
        %3987 = vmatprep.subr.mxu0 0.0
        %3988 = vmatpush1.msra.mxu0 0.0
        %3989 = vmatprep.subr.mxu0 0.0
        %3990 = vmatpush1.msra.mxu0 0.0
        %3991 = vmatprep.subr.mxu0 0.0
        %3992 = vmatpush1.msra.mxu0 0.0
        %3993 = vmatprep.subr.mxu0 0.0
        %3994 = vmatpush1.msra.mxu0 0.0
        %3995 = vmatprep.subr.mxu0 0.0
        %3996 = vmatpush1.msra.mxu0 0.0
        %3997 = vmatprep.subr.mxu0 0.0
        %3998 = vmatpush1.msra.mxu0 0.0
        %3999 = vmatprep.subr.mxu0 0.0
        %4000 = vmatpush1.msra.mxu0 0.0
        %4001 = vmatprep.subr.mxu0 0.0
        %4002 = vmatpush1.msra.mxu0 0.0
        %4003 = vmatprep.subr.mxu0 0.0
        %4004 = vmatpush1.msra.mxu0 0.0
        %4005 = vmatprep.subr.mxu0 0.0
        %4006 = vmatpush1.msra.mxu0 0.0
        %4007 = vmatprep.mubr.f32.mxu0 0.0
        %4008 = vmatmul.mubr.f32.gmra.mrb[0].mxu0 %v3918
        %v4009 = vpop.f32.mrb[0].mxu0
        %v4010 = vadd.f32 %v3941, %v4009
        %v4011 = vpop.f32.mrb[0].mxu0
        %4012 = vmatprep.mubr.f32.mxu0 0.0
        %4013 = vmatmul.mubr.f32.gmra.mrb[0].mxu0 %v3919
        %v4014 = vpop.f32.mrb[0].mxu0
        %v4015 = vadd.f32 %v3941, %v4014
        %v4016 = vpop.f32.mrb[0].mxu0
        %4017 = vdwg.mxu0
        %v4018 = vadd.f32 %v3766, %v4010
        %v4019 = vadd.f32 %v3767, %v4015
        %4020 = vst.msk [vmem:[#allocation2] sm:$0xff] %vm1040, %v4018
        %4021 = vst.msk [vmem:[#allocation2 + $0x8] sm:$0xff] %vm1040, %v4019
        %p4022 = scmp.eq.s32.totalorder %s43, 1
        // Predicated region
        $region137: #{_lambda_.2} parent=107 // pred_check
          %p4023 = pneg %p4022
        $region138: #{_lambda_.2} parent=107 // pred_check_branch
          %4025 = sbr.rel (%p4023) target = $region140
        $region139: #{_lambda_.2} parent=107 // pred_region
          %v4026 = vld [vmem:[%s18] sm:$0x1]
          %v4027 = vld [vmem:[%s19] sm:$0x1]
          %v4028 = vsel %vm1040, %v4018, 0.0
          %4029 = vadd.xlane.f32.xlu0 %v4028
          %v4030 = vpop.xlane.xlu0 %4029
          %v4031 = vsel %vm1040, %v4019, 0.0
          %4032 = vadd.xlane.f32.xlu0 %v4031
          %v4033 = vpop.xlane.xlu0 %4032
          %v4034 = vmul.f32 %v4030, %v1047
          %v4035 = vmul.f32 %v4033, %v1047
          %v4036 = vsub.f32 %v4018, %v4034
          %v4037 = vsub.f32 %v4019, %v4035
          %v4038 = vmul.f32 %v4036, %v4036
          %v4039 = vmul.f32 %v4037, %v4037
          %v4040 = vsel %vm1040, %v4038, 0.0
          %4041 = vadd.xlane.f32.xlu0 %v4040
          %v4042 = vpop.xlane.xlu0 %4041
          %v4043 = vsel %vm1040, %v4039, 0.0
          %4044 = vadd.xlane.f32.xlu0 %v4043
          %v4045 = vpop.xlane.xlu0 %4044
          %v4046 = vmul.f32 %v4042, %v1047
          %v4047 = vmul.f32 %v4045, %v1047
          %v4048 = vadd.f32 %v4046, 1e-05
          %v4049 = vadd.f32 %v4047, 1e-05
          %v4050 = vrsqrt.pop %v4048
          %v4051 = vrsqrt.pop %v4049
          %v4052 = vmul.f32 %v4036, %v4050
          %v4053 = vmul.f32 %v4037, %v4051
          %v4055 = vlaneseq
          %v4056 = vshrl.u32 %v4055, 7
          %v4057 = vsub.s32 0, %v4056
          %v4058 = vrot.slane %v4026, %v4057
          %v4060 = vmul.f32 %v4052, %v4058
          %v4061 = vmul.f32 %v4053, %v4058
          %v4063 = vlaneseq
          %v4064 = vshrl.u32 %v4063, 7
          %v4065 = vsub.s32 0, %v4064
          %v4066 = vrot.slane %v4027, %v4065
          %v4068 = vadd.f32 %v4060, %v4066
          %v4069 = vadd.f32 %v4061, %v4066
          %v4070 = vld [vmem:[%s20] sm:$0x3]
          %vm4071 = vcmask 130048
          %v4073 = vsel %vm4071, %v4070, 0
          %4075 = vmatprep.subr.mxu0 0.0
          %4076 = vmatpush1.msra.mxu0 %v4068
          %4077 = vmatprep.subr.mxu0 0.0
          %4078 = vmatpush1.msra.mxu0 %v4069
          %4079 = vmatprep.subr.mxu0 0.0
          %4080 = vmatpush1.msra.mxu0 0.0
          %4081 = vmatprep.subr.mxu0 0.0
          %4082 = vmatpush1.msra.mxu0 0.0
          %4083 = vmatprep.subr.mxu0 0.0
          %4084 = vmatpush1.msra.mxu0 0.0
          %4085 = vmatprep.subr.mxu0 0.0
          %4086 = vmatpush1.msra.mxu0 0.0
          %4087 = vmatprep.subr.mxu0 0.0
          %4088 = vmatpush1.msra.mxu0 0.0
          %4089 = vmatprep.subr.mxu0 0.0
          %4090 = vmatpush1.msra.mxu0 0.0
          %4091 = vmatprep.subr.mxu0 0.0
          %4092 = vmatpush1.msra.mxu0 0.0
          %4093 = vmatprep.subr.mxu0 0.0
          %4094 = vmatpush1.msra.mxu0 0.0
          %4095 = vmatprep.subr.mxu0 0.0
          %4096 = vmatpush1.msra.mxu0 0.0
          %4097 = vmatprep.subr.mxu0 0.0
          %4098 = vmatpush1.msra.mxu0 0.0
          %4099 = vmatprep.subr.mxu0 0.0
          %4100 = vmatpush1.msra.mxu0 0.0
          %4101 = vmatprep.subr.mxu0 0.0
          %4102 = vmatpush1.msra.mxu0 0.0
          %4103 = vmatprep.subr.mxu0 0.0
          %4104 = vmatpush1.msra.mxu0 0.0
          %4105 = vmatprep.subr.mxu0 0.0
          %4106 = vmatpush1.msra.mxu0 0.0
          %4107 = vmatprep.subr.mxu0 0.0
          %4108 = vmatpush1.msra.mxu0 0.0
          %4109 = vmatprep.subr.mxu0 0.0
          %4110 = vmatpush1.msra.mxu0 0.0
          %4111 = vmatprep.subr.mxu0 0.0
          %4112 = vmatpush1.msra.mxu0 0.0
          %4113 = vmatprep.subr.mxu0 0.0
          %4114 = vmatpush1.msra.mxu0 0.0
          %4115 = vmatprep.subr.mxu0 0.0
          %4116 = vmatpush1.msra.mxu0 0.0
          %4117 = vmatprep.subr.mxu0 0.0
          %4118 = vmatpush1.msra.mxu0 0.0
          %4119 = vmatprep.subr.mxu0 0.0
          %4120 = vmatpush1.msra.mxu0 0.0
          %4121 = vmatprep.subr.mxu0 0.0
          %4122 = vmatpush1.msra.mxu0 0.0
          %4123 = vmatprep.subr.mxu0 0.0
          %4124 = vmatpush1.msra.mxu0 0.0
          %4125 = vmatprep.subr.mxu0 0.0
          %4126 = vmatpush1.msra.mxu0 0.0
          %4127 = vmatprep.subr.mxu0 0.0
          %4128 = vmatpush1.msra.mxu0 0.0
          %4129 = vmatprep.subr.mxu0 0.0
          %4130 = vmatpush1.msra.mxu0 0.0
          %4131 = vmatprep.subr.mxu0 0.0
          %4132 = vmatpush1.msra.mxu0 0.0
          %4133 = vmatprep.subr.mxu0 0.0
          %4134 = vmatpush1.msra.mxu0 0.0
          %4135 = vmatprep.subr.mxu0 0.0
          %4136 = vmatpush1.msra.mxu0 0.0
          %4137 = vmatprep.subr.mxu0 0.0
          %4138 = vmatpush1.msra.mxu0 0.0
          %4139 = vmatprep.mubr.f32.mxu0 0.0
          %4140 = vmatmul.mubr.f32.gmra.mrb[0].mxu0 %v4073
          %v4141 = vpop.f32.mrb[0].mxu0
          %v4142 = vadd.f32 0.0, %v4141
          %v4143 = vpop.f32.mrb[0].mxu0
          %4144 = vdwg.mxu0
          %v4145 = vld [vmem:[#allocation11] sm:$0xff]
          %v4146 = vld [vmem:[#allocation11 + $0x8] sm:$0xff]
          %v4147 = vld [vmem:[#allocation11 + $0x10] sm:$0xff]
          %v4148 = vld [vmem:[#allocation11 + $0x18] sm:$0xff]
          %v4150 = vsel %vm1040, %v4142, 0
          %4152 = vmatprep.subr.mxu0 0.0
          %4153 = vmatpush1.msra.mxu0 %v4145
          %4154 = vmatprep.subr.mxu0 0.0
          %4155 = vmatpush1.msra.mxu0 %v4146
          %4156 = vmatprep.subr.mxu0 0.0
          %4157 = vmatpush1.msra.mxu0 %v4147
          %4158 = vmatprep.subr.mxu0 0.0
          %4159 = vmatpush1.msra.mxu0 %v4148
          %4160 = vmatprep.subr.mxu0 0.0
          %4161 = vmatpush1.msra.mxu0 0.0
          %4162 = vmatprep.subr.mxu0 0.0
          %4163 = vmatpush1.msra.mxu0 0.0
          %4164 = vmatprep.subr.mxu0 0.0
          %4165 = vmatpush1.msra.mxu0 0.0
          %4166 = vmatprep.subr.mxu0 0.0
          %4167 = vmatpush1.msra.mxu0 0.0
          %4168 = vmatprep.subr.mxu0 0.0
          %4169 = vmatpush1.msra.mxu0 0.0
          %4170 = vmatprep.subr.mxu0 0.0
          %4171 = vmatpush1.msra.mxu0 0.0
          %4172 = vmatprep.subr.mxu0 0.0
          %4173 = vmatpush1.msra.mxu0 0.0
          %4174 = vmatprep.subr.mxu0 0.0
          %4175 = vmatpush1.msra.mxu0 0.0
          %4176 = vmatprep.subr.mxu0 0.0
          %4177 = vmatpush1.msra.mxu0 0.0
          %4178 = vmatprep.subr.mxu0 0.0
          %4179 = vmatpush1.msra.mxu0 0.0
          %4180 = vmatprep.subr.mxu0 0.0
          %4181 = vmatpush1.msra.mxu0 0.0
          %4182 = vmatprep.subr.mxu0 0.0
          %4183 = vmatpush1.msra.mxu0 0.0
          %4184 = vmatprep.subr.mxu0 0.0
          %4185 = vmatpush1.msra.mxu0 0.0
          %4186 = vmatprep.subr.mxu0 0.0
          %4187 = vmatpush1.msra.mxu0 0.0
          %4188 = vmatprep.subr.mxu0 0.0
          %4189 = vmatpush1.msra.mxu0 0.0
          %4190 = vmatprep.subr.mxu0 0.0
          %4191 = vmatpush1.msra.mxu0 0.0
          %4192 = vmatprep.subr.mxu0 0.0
          %4193 = vmatpush1.msra.mxu0 0.0
          %4194 = vmatprep.subr.mxu0 0.0
          %4195 = vmatpush1.msra.mxu0 0.0
          %4196 = vmatprep.subr.mxu0 0.0
          %4197 = vmatpush1.msra.mxu0 0.0
          %4198 = vmatprep.subr.mxu0 0.0
          %4199 = vmatpush1.msra.mxu0 0.0
          %4200 = vmatprep.subr.mxu0 0.0
          %4201 = vmatpush1.msra.mxu0 0.0
          %4202 = vmatprep.subr.mxu0 0.0
          %4203 = vmatpush1.msra.mxu0 0.0
          %4204 = vmatprep.subr.mxu0 0.0
          %4205 = vmatpush1.msra.mxu0 0.0
          %4206 = vmatprep.subr.mxu0 0.0
          %4207 = vmatpush1.msra.mxu0 0.0
          %4208 = vmatprep.subr.mxu0 0.0
          %4209 = vmatpush1.msra.mxu0 0.0
          %4210 = vmatprep.subr.mxu0 0.0
          %4211 = vmatpush1.msra.mxu0 0.0
          %4212 = vmatprep.subr.mxu0 0.0
          %4213 = vmatpush1.msra.mxu0 0.0
          %4214 = vmatprep.subr.mxu0 0.0
          %4215 = vmatpush1.msra.mxu0 0.0
          %4216 = vmatprep.mubr.f32.mxu0 0.0
          %4217 = vmatmul.mubr.f32.gmra.mrb[0].mxu0 %v4150
          %v4218 = vpop.f32.mrb[0].mxu0
          %v4219 = vadd.f32 0.0, %v4218
          %v4220 = vpop.f32.mrb[0].mxu0
          %4221 = vdwg.mxu0
          %vm4222 = vcmask 254976
          %4223 = vst.msk [vmem:[%s22] sm:$0x3] %vm4222, %v4219
        $region140: #{_lambda_.2} parent=107 // pred_fallthru
          _
        // Predicated region
        $region141: #{_lambda_.2} parent=107 // pred_check
          %p4224 = pneg %p598
        $region142: #{_lambda_.2} parent=107 // pred_check_branch
          %4226 = sbr.rel (%p4224) target = $region144
        $region143: #{_lambda_.2} parent=107 // pred_region
          _
        $region144: #{_lambda_.2} parent=107 // pred_fallthru
          _
        // Predicated region
        $region145: #{_lambda_.2} parent=107 // pred_check
          %p4227 = pneg %p598
        $region146: #{_lambda_.2} parent=107 // pred_check_branch
          %4229 = sbr.rel (%p4227) target = $region148
        $region147: #{_lambda_.2} parent=107 // pred_region
          _
        $region148: #{_lambda_.2} parent=107 // pred_fallthru
          _
      $region108: #{_lambda_.2} parent=5 // pred_fallthru
        _
      %p4230 = scmp.le.s32.totalorder 2, %s38
      // Predicated region
      $region149: #{_lambda_.2} parent=5 // pred_check
        %p4231 = pneg %p4230
      $region150: #{_lambda_.2} parent=5 // pred_check_branch
        %4233 = sbr.rel (%p4231) target = $region152
      $region151: #{_lambda_.2} parent=5 // pred_region
        %s4234 = ssub.s32 %s38, 2
      $region152: #{_lambda_.2} parent=5 // pred_fallthru
        _
    $region6: #{_lambda_.2} parent=1 // loop_footer
      %s42 = sadd.s32 1, %s38
    $region7: #{_lambda_.2} parent=1 // loop_footer_branch
      %37 = sbr.rel target = $region3
    $region8: #{_lambda_.2} parent=1 // loop_exit
      _
    %4235 = vsyncpa [#allocation4], 1
    %s4236 = scalar_lea.sflag [#allocation4], 1
    %4237 = vsyncpa %s4236, 1
    %4238 = vsyncpa [#allocation6], 1
    %s4239 = scalar_lea.sflag [#allocation6], 1
    %4240 = vsyncpa %s4239, 1
    %4241 = vsyncpa [#allocation9], 1
    %s4242 = scalar_lea.sflag [#allocation9], 1
    %4243 = vsyncpa %s4242, 1
    %4244 = vsyncpa [#allocation12], 1

</llo_original>
